<compile_context>
chip_gen: v7x
topology: tpu7x:2x2x1
jax: 0.10.0
libtpu: 0.0.40
codegen_flags: <defaults>
</compile_context>

<pallas_src>
import functools
import math

import jax
import jax.numpy as jnp
from jax.experimental import pallas as pl
from jax.experimental.pallas import tpu as pltpu

HIDDEN = 128      # lane-aligned stand-in for BERT's 768
FFN = 512         # 4 * HIDDEN, like BERT
SEQ_LEN = 8       # tokens per span
VOCAB = 64
NEG_INF = -10000.0
LN_EPS = 1e-12


def _bert_layer_pool_kernel(ids_ref, mask_ref, wemb_ref, pos_ref, bias_ref,
                            wqkv_ref, bqkv_ref, wo_ref, bo_ref,
                            w1_ref, b1_ref, w2_ref, b2_ref,
                            ln_ref, pool_ref, out_ref):
    """TB sequences per grid step: fused gather + mini-BERT layer + mean-pool."""
    ids = ids_ref[0]                 # (R, 1)  int32 token ids (column layout)
    key_mask = mask_ref[0]           # (1, R)  f32 key mask (1 = keep, 0 = pad)
    R = ids.shape[0]
    H = wemb_ref.shape[1]
    ln = ln_ref[...]                 # (6, H)  [emb_g, emb_b, ln1_g, ln1_b, ln2_g, ln2_b]

    # --- Fused embedding gather: one-hot(ids) @ word_emb  (bf16 MXU, f32 acc) --
    vocab_iota = jax.lax.broadcasted_iota(jnp.int32, (R, wemb_ref.shape[0]), 1)
    onehot = (vocab_iota == ids).astype(jnp.bfloat16)                 # (R, V) bf16
    x = jnp.dot(onehot, wemb_ref[...], preferred_element_type=jnp.float32)
    x = x + pos_ref[...]                                              # (R, H) f32

    def layer_norm(v, g, b):
        # One-pass LN: var = E[x^2] - mean^2 (clamped for safety).
        mu = jnp.mean(v, axis=-1, keepdims=True)
        var = jnp.maximum(jnp.mean(v * v, axis=-1, keepdims=True) - mu * mu, 0.0)
        return (v - mu) * jax.lax.rsqrt(var + LN_EPS) * g + b

    # Embedding LayerNorm (f32).
    h = layer_norm(x, ln[0:1], ln[1:2])
    hb = h.astype(jnp.bfloat16)

    # --- Self-attention (single head stand-in; fused QKV, bf16 MXU, f32 acc) --
    # 1/sqrt(H) is pre-folded into the q columns of wqkv/bqkv.
    qkv = jnp.dot(hb, wqkv_ref[...], preferred_element_type=jnp.float32)
    qkv = (qkv + bqkv_ref[...]).astype(jnp.bfloat16)                  # (R, 3H) bf16
    q = qkv[:, :H]
    k = qkv[:, H:2 * H]
    v = qkv[:, 2 * H:]

    # One full (R, R) scores matmul for all TB sequences; the precomputed
    # block-diagonal additive bias keeps per-sequence attention semantics, and
    # key padding is a single where against the (1, R) key mask.
    scores = jax.lax.dot_general(q, k, (((1,), (1,)), ((), ())),
                                 preferred_element_type=jnp.float32)
    scores = scores + bias_ref[...]
    scores = jnp.where(key_mask > 0.0, scores, NEG_INF)

    # Softmax in f32; normalization via EUP approx reciprocal.
    scores = scores - jnp.max(scores, axis=-1, keepdims=True)
    p = jnp.exp(scores)
    p = p * pl.reciprocal(jnp.sum(p, axis=-1, keepdims=True), approx=True)

    ctx = jnp.dot(p.astype(jnp.bfloat16), v,
                  preferred_element_type=jnp.float32).astype(jnp.bfloat16)
    attn_out = jnp.dot(ctx, wo_ref[...],
                       preferred_element_type=jnp.float32) + bo_ref[...]
    h1 = layer_norm(h + attn_out, ln[2:3], ln[3:4])

    # --- Feed-forward (tanh-approx GELU; real BERT uses erf GELU) -------------
    # GELU kept f32 (v5e has no bf16 VPU/EUP); result cast to bf16 immediately.
    ff = jnp.dot(h1.astype(jnp.bfloat16), w1_ref[...],
                 preferred_element_type=jnp.float32) + b1_ref[...]
    ff = jax.nn.gelu(ff, approximate=True).astype(jnp.bfloat16)       # (R, FFN) bf16
    ff = jnp.dot(ff, w2_ref[...],
                 preferred_element_type=jnp.float32) + b2_ref[...]
    h2 = layer_norm(h1 + ff, ln[4:5], ln[5:6])

    # --- Token-mean pooling with the hoisted (TB, R) 1/L matrix (bf16 MXU) ----
    # Plain mean over all L tokens (including pads), mirroring the reference's
    # .mean(dim=2/3) on the raw last_hidden_state.
    out_ref[...] = jnp.dot(pool_ref[...], h2.astype(jnp.bfloat16),
                           preferred_element_type=jnp.float32)


def _pick_tb(n_total):
    # TB=32 (R=256) amortizes per-step overhead on v6e/v7x; fall back to TB=16
    # when that would collapse the grid to one step (keep >=2 steps for 2-TC v7x).
    return 32 if -(-n_total // 32) >= 2 else 16


def encode_and_pool(params, ids, attn_mask):
    """ids, attn_mask: (N, L).  Returns (N, HIDDEN): mean over tokens of the
    encoder's last_hidden_state (single fused pallas_call over the batch)."""
    N, L = ids.shape
    assert L == SEQ_LEN
    TB = _pick_tb(N)
    n_pad = (-N) % TB
    n_tot = N + n_pad
    nb = n_tot // TB
    R = TB * L

    ids_p = jnp.pad(ids.astype(jnp.int32), ((0, n_pad), (0, 0)))
    mask_p = jnp.pad(attn_mask.astype(jnp.float32), ((0, n_pad), (0, 0)))
    ids_blk = ids_p.reshape(nb, R, 1)           # column layout for one-hot gather
    mask_blk = mask_p.reshape(nb, 1, R)         # key-mask row per block

    # Per-call constants, DMA'd once per block (constant index maps):
    #   position + token-type(0) embeddings tiled for TB flattened sequences,
    #   block-diagonal attention bias, and the mean-pool matrix.
    pos_type = jnp.tile(params["pos_emb"] + params["type_emb"][0:1], (TB, 1))
    seq_id = jnp.repeat(jnp.arange(TB, dtype=jnp.int32), L)           # (R,)
    attn_bias = jnp.where(seq_id[:, None] == seq_id[None, :],
                          0.0, NEG_INF).astype(jnp.float32)           # (R, R)
    pool_mat = jnp.where(jnp.arange(TB, dtype=jnp.int32)[:, None] == seq_id[None, :],
                         1.0 / L, 0.0).astype(jnp.bfloat16)           # (TB, R)

    out = pl.pallas_call(
        _bert_layer_pool_kernel,
        out_shape=jax.ShapeDtypeStruct((n_tot, HIDDEN), jnp.float32),
        grid_spec=pltpu.PrefetchScalarGridSpec(
            num_scalar_prefetch=0,
            grid=(nb,),
            in_specs=[
                pl.BlockSpec((1, R, 1), lambda i: (i, 0, 0)),             # token ids
                pl.BlockSpec((1, 1, R), lambda i: (i, 0, 0)),             # key mask
                pl.BlockSpec((VOCAB, HIDDEN), lambda i: (0, 0)),          # word_emb (bf16)
                pl.BlockSpec((R, HIDDEN), lambda i: (0, 0)),              # pos+type
                pl.BlockSpec((R, R), lambda i: (0, 0)),                   # block-diag bias
                pl.BlockSpec((HIDDEN, 3 * HIDDEN), lambda i: (0, 0)),     # fused W_qkv
                pl.BlockSpec((1, 3 * HIDDEN), lambda i: (0, 0)),          # fused b_qkv
                pl.BlockSpec((HIDDEN, HIDDEN), lambda i: (0, 0)),         # W_o
                pl.BlockSpec((1, HIDDEN), lambda i: (0, 0)),              # b_o
                pl.BlockSpec((HIDDEN, FFN), lambda i: (0, 0)),            # W_ffn1
                pl.BlockSpec((1, FFN), lambda i: (0, 0)),                 # b_ffn1
                pl.BlockSpec((FFN, HIDDEN), lambda i: (0, 0)),            # W_ffn2
                pl.BlockSpec((1, HIDDEN), lambda i: (0, 0)),              # b_ffn2
                pl.BlockSpec((6, HIDDEN), lambda i: (0, 0)),              # LN params
                pl.BlockSpec((TB, R), lambda i: (0, 0)),                  # pool matrix (bf16)
            ],
            out_specs=pl.BlockSpec((TB, HIDDEN), lambda i: (i, 0)),       # dense slab
        ),
        compiler_params=pltpu.CompilerParams(
            dimension_semantics=("parallel",)),
    )(ids_blk, mask_blk, params["word_emb"], pos_type, attn_bias,
      params["w_qkv"], params["b_qkv"], params["w_o"], params["b_o"],
      params["w_ffn1"], params["b_ffn1"],
      params["w_ffn2"], params["b_ffn2"],
      params["ln"], pool_mat)
    return out[:N]


def srl_embeddings_forward(params,
                           sentence_ids, sentence_attention_masks,
                           predicate_ids, predicate_attention_masks,
                           arg0_ids, arg0_attention_masks,
                           arg1_ids, arg1_attention_masks):
    """Semantics of SRLEmbeddings.forward (frozen encoder; plain token-mean).

    All four span groups are concatenated into one batch and run through a
    single pallas_call, then split back into their original views."""
    B, S, L = sentence_ids.shape
    A = predicate_ids.shape[2]
    n_sent = B * S
    n_span = B * S * A

    all_ids = jnp.concatenate([
        sentence_ids.reshape(-1, L),
        predicate_ids.reshape(-1, L),
        arg0_ids.reshape(-1, L),
        arg1_ids.reshape(-1, L)], axis=0)
    all_mask = jnp.concatenate([
        sentence_attention_masks.reshape(-1, L),
        predicate_attention_masks.reshape(-1, L),
        arg0_attention_masks.reshape(-1, L),
        arg1_attention_masks.reshape(-1, L)], axis=0)

    pooled = encode_and_pool(params, all_ids, all_mask)      # (N_total, H)

    sentence_embeddings = pooled[:n_sent].reshape(B, S, HIDDEN)
    predicate_embeddings = pooled[n_sent:n_sent + n_span].reshape(B, S, A, HIDDEN)
    arg0_embeddings = pooled[n_sent + n_span:n_sent + 2 * n_span].reshape(B, S, A, HIDDEN)
    arg1_embeddings = pooled[n_sent + 2 * n_span:n_sent + 3 * n_span].reshape(B, S, A, HIDDEN)
    return (sentence_embeddings, predicate_embeddings,
            arg0_embeddings, arg1_embeddings)


def init_params(key):
    # TODO(synk): real BertModel.from_pretrained weights cannot be loaded here;
    # synthetic 1-layer mini-BERT weights stand in (MXU weights stored in bf16).
    keys = jax.random.split(key, 9)
    s = 0.02
    ones = jnp.ones((1, HIDDEN), jnp.float32)
    zeros = jnp.zeros((1, HIDDEN), jnp.float32)

    w_q = jax.random.normal(keys[3], (HIDDEN, HIDDEN), jnp.float32) * s
    w_k = jax.random.normal(keys[6], (HIDDEN, HIDDEN), jnp.float32) * s
    w_v = jax.random.normal(keys[7], (HIDDEN, HIDDEN), jnp.float32) * s
    w_o = jax.random.normal(keys[8], (HIDDEN, HIDDEN), jnp.float32) * s
    scale = 1.0 / math.sqrt(HIDDEN)
    # Fused QKV weight with the attention score scale folded into the q slice.
    w_qkv = jnp.concatenate([w_q * scale, w_k, w_v], axis=1).astype(jnp.bfloat16)
    b_qkv = jnp.zeros((1, 3 * HIDDEN), jnp.float32)   # q slice would also be scaled

    return dict(
        word_emb=(jax.random.normal(keys[0], (VOCAB, HIDDEN), jnp.float32) * s
                  ).astype(jnp.bfloat16),
        pos_emb=jax.random.normal(keys[1], (SEQ_LEN, HIDDEN), jnp.float32) * s,
        type_emb=jax.random.normal(keys[2], (2, HIDDEN), jnp.float32) * s,
        w_qkv=w_qkv,
        b_qkv=b_qkv,
        w_o=w_o.astype(jnp.bfloat16),
        b_o=jnp.zeros((1, HIDDEN), jnp.float32),
        w_ffn1=(jax.random.normal(keys[4], (HIDDEN, FFN), jnp.float32) * s
                ).astype(jnp.bfloat16),
        b_ffn1=jnp.zeros((1, FFN), jnp.float32),
        w_ffn2=(jax.random.normal(keys[5], (FFN, HIDDEN), jnp.float32) * s
                ).astype(jnp.bfloat16),
        b_ffn2=jnp.zeros((1, HIDDEN), jnp.float32),
        ln=jnp.concatenate([ones, zeros, ones, zeros, ones, zeros], axis=0),
    )


if __name__ == "__main__":
    key = jax.random.PRNGKey(0)
    pkey, dkey = jax.random.split(key)
    params = init_params(pkey)

    B, S, A, L = 2, 2, 2, SEQ_LEN
    ks = jax.random.split(dkey, 8)

    def make_mask(k, shape):
        m = (jax.random.uniform(k, shape) > 0.25).astype(jnp.float32)
        return m.at[..., 0].set(1.0)   # keep at least the first token

    sentence_ids = jax.random.randint(ks[0], (B, S, L), 0, VOCAB, jnp.int32)
    sentence_mask = make_mask(ks[1], (B, S, L))
    predicate_ids = jax.random.randint(ks[2], (B, S, A, L), 0, VOCAB, jnp.int32)
    predicate_mask = make_mask(ks[3], (B, S, A, L))
    arg0_ids = jax.random.randint(ks[4], (B, S, A, L), 0, VOCAB, jnp.int32)
    arg0_mask = make_mask(ks[5], (B, S, A, L))
    arg1_ids = jax.random.randint(ks[6], (B, S, A, L), 0, VOCAB, jnp.int32)
    arg1_mask = make_mask(ks[7], (B, S, A, L))

    fwd = jax.jit(functools.partial(srl_embeddings_forward, params))
    outs = fwd(sentence_ids, sentence_mask,
               predicate_ids, predicate_mask,
               arg0_ids, arg0_mask,
               arg1_ids, arg1_mask)
    outs = jax.block_until_ready(outs)

    sent, pred, a0, a1 = outs
    assert sent.shape == (B, S, HIDDEN) and sent.dtype == jnp.float32
    assert pred.shape == (B, S, A, HIDDEN)
    assert a0.shape == (B, S, A, HIDDEN)
    assert a1.shape == (B, S, A, HIDDEN)
    assert bool(jnp.all(jnp.isfinite(sent)))
    assert bool(jnp.all(jnp.isfinite(pred)))
    assert bool(jnp.all(jnp.isfinite(a0)))
    assert bool(jnp.all(jnp.isfinite(a1)))
    print("KERNEL_OK")
</pallas_src>

<mosaic_0001>
module attributes {stable_mosaic.version = 11 : i64} {
  func.func @_bert_layer_pool_kernel(%arg0: i32, %arg1: memref<1x128x1xi32, #tpu.memory_space<vmem>>, %arg2: memref<1x1x128xf32, #tpu.memory_space<vmem>>, %arg3: memref<64x128xbf16, #tpu.memory_space<vmem>>, %arg4: memref<128x128xf32, #tpu.memory_space<vmem>>, %arg5: memref<128x128xf32, #tpu.memory_space<vmem>>, %arg6: memref<128x384xbf16, #tpu.memory_space<vmem>>, %arg7: memref<1x384xf32, #tpu.memory_space<vmem>>, %arg8: memref<128x128xbf16, #tpu.memory_space<vmem>>, %arg9: memref<1x128xf32, #tpu.memory_space<vmem>>, %arg10: memref<128x512xbf16, #tpu.memory_space<vmem>>, %arg11: memref<1x512xf32, #tpu.memory_space<vmem>>, %arg12: memref<512x128xbf16, #tpu.memory_space<vmem>>, %arg13: memref<1x128xf32, #tpu.memory_space<vmem>>, %arg14: memref<6x128xf32, #tpu.memory_space<vmem>>, %arg15: memref<16x128xbf16, #tpu.memory_space<vmem>>, %arg16: memref<16x128xf32, #tpu.memory_space<vmem>>) attributes {dimension_semantics = [#tpu.dimension_semantics<parallel>], iteration_bounds = array<i64: 2>, scalar_prefetch = 0 : i64, scratch_operands = 0 : i64, tpu.core_type = #tpu.core_type<tc>, window_params = [{transform_indices = @transform_0, window_bounds = array<i64: 1, 128, 1>}, {transform_indices = @transform_1, window_bounds = array<i64: 1, 1, 128>}, {pipeline_mode = #tpu.pipeline_mode<synchronous>, transform_indices = @transform_2, window_bounds = array<i64: 64, 128>}, {pipeline_mode = #tpu.pipeline_mode<synchronous>, transform_indices = @transform_3, window_bounds = array<i64: 128, 128>}, {pipeline_mode = #tpu.pipeline_mode<synchronous>, transform_indices = @transform_4, window_bounds = array<i64: 128, 128>}, {pipeline_mode = #tpu.pipeline_mode<synchronous>, transform_indices = @transform_5, window_bounds = array<i64: 128, 384>}, {pipeline_mode = #tpu.pipeline_mode<synchronous>, transform_indices = @transform_6, window_bounds = array<i64: 1, 384>}, {pipeline_mode = #tpu.pipeline_mode<synchronous>, transform_indices = @transform_7, window_bounds = array<i64: 128, 128>}, {pipeline_mode = #tpu.pipeline_mode<synchronous>, transform_indices = @transform_8, window_bounds = array<i64: 1, 128>}, {pipeline_mode = #tpu.pipeline_mode<synchronous>, transform_indices = @transform_9, window_bounds = array<i64: 128, 512>}, {pipeline_mode = #tpu.pipeline_mode<synchronous>, transform_indices = @transform_10, window_bounds = array<i64: 1, 512>}, {pipeline_mode = #tpu.pipeline_mode<synchronous>, transform_indices = @transform_11, window_bounds = array<i64: 512, 128>}, {pipeline_mode = #tpu.pipeline_mode<synchronous>, transform_indices = @transform_12, window_bounds = array<i64: 1, 128>}, {pipeline_mode = #tpu.pipeline_mode<synchronous>, transform_indices = @transform_13, window_bounds = array<i64: 6, 128>}, {pipeline_mode = #tpu.pipeline_mode<synchronous>, transform_indices = @transform_14, window_bounds = array<i64: 16, 128>}, {transform_indices = @transform_15, window_bounds = array<i64: 16, 128>}]} {
    %c0 = arith.constant 0 : index
    %c0_0 = arith.constant 0 : index
    %c0_1 = arith.constant 0 : index
    %0 = vector.load %arg1[%c0, %c0_0, %c0_1] : memref<1x128x1xi32, #tpu.memory_space<vmem>>, vector<1x128x1xi32>
    %1 = vector.shape_cast %0 : vector<1x128x1xi32> to vector<128x1xi32>
    %c0_2 = arith.constant 0 : index
    %c0_3 = arith.constant 0 : index
    %c0_4 = arith.constant 0 : index
    %2 = vector.load %arg2[%c0_2, %c0_3, %c0_4] : memref<1x1x128xf32, #tpu.memory_space<vmem>>, vector<1x1x128xf32>
    %3 = vector.shape_cast %2 : vector<1x1x128xf32> to vector<1x128xf32>
    %c0_5 = arith.constant 0 : index
    %c0_6 = arith.constant 0 : index
    %4 = vector.load %arg14[%c0_5, %c0_6] : memref<6x128xf32, #tpu.memory_space<vmem>>, vector<6x128xf32>
    %5 = tpu.iota {dimensions = array<i32: 1>} : vector<128x64xi32>
    %6 = vector.broadcast %1 : vector<128x1xi32> to vector<128x64xi32>
    %7 = arith.cmpi eq, %5, %6 : vector<128x64xi32>
    %8 = arith.extui %7 : vector<128x64xi1> to vector<128x64xi32>
    %9 = arith.sitofp %8 : vector<128x64xi32> to vector<128x64xf32>
    %10 = arith.truncf %9 : vector<128x64xf32> to vector<128x64xbf16>
    %c0_7 = arith.constant 0 : index
    %c0_8 = arith.constant 0 : index
    %11 = vector.load %arg3[%c0_7, %c0_8] : memref<64x128xbf16, #tpu.memory_space<vmem>>, vector<64x128xbf16>
    %cst = arith.constant dense<0.000000e+00> : vector<128x128xf32>
    %12 = tpu.matmul %10, %11, %cst {dimension_numbers = #tpu.dot_dimension_numbers<[1], [0], [0], [1], [0, 0, 1, 1], [], []>} : vector<128x64xbf16>, vector<64x128xbf16>, vector<128x128xf32> -> vector<128x128xf32>
    %c0_9 = arith.constant 0 : index
    %c0_10 = arith.constant 0 : index
    %13 = vector.load %arg4[%c0_9, %c0_10] : memref<128x128xf32, #tpu.memory_space<vmem>>, vector<128x128xf32>
    %14 = arith.addf %12, %13 : vector<128x128xf32>
    %15 = vector.extract_strided_slice %4 {offsets = [0, 0], sizes = [1, 128], strides = [1, 1]} : vector<6x128xf32> to vector<1x128xf32>
    %16 = vector.extract_strided_slice %4 {offsets = [1, 0], sizes = [1, 128], strides = [1, 1]} : vector<6x128xf32> to vector<1x128xf32>
    %cst_11 = arith.constant dense<0.000000e+00> : vector<128xf32>
    %17 = vector.multi_reduction <add>, %14, %cst_11 [1] : vector<128x128xf32> to vector<128xf32>
    %18 = vector.shape_cast %17 : vector<128xf32> to vector<128x1xf32>
    %cst_12 = arith.constant 1.280000e+02 : f32
    %19 = vector.broadcast %cst_12 : f32 to vector<128x1xf32>
    %20 = arith.divf %18, %19 : vector<128x1xf32>
    %21 = arith.mulf %14, %14 : vector<128x128xf32>
    %cst_13 = arith.constant dense<0.000000e+00> : vector<128xf32>
    %22 = vector.multi_reduction <add>, %21, %cst_13 [1] : vector<128x128xf32> to vector<128xf32>
    %23 = vector.shape_cast %22 : vector<128xf32> to vector<128x1xf32>
    %cst_14 = arith.constant 1.280000e+02 : f32
    %24 = vector.broadcast %cst_14 : f32 to vector<128x1xf32>
    %25 = arith.divf %23, %24 : vector<128x1xf32>
    %26 = arith.mulf %20, %20 : vector<128x1xf32>
    %27 = arith.subf %25, %26 : vector<128x1xf32>
    %cst_15 = arith.constant 0.000000e+00 : f32
    %28 = vector.broadcast %cst_15 : f32 to vector<128x1xf32>
    %29 = arith.maximumf %27, %28 : vector<128x1xf32>
    %30 = vector.broadcast %20 : vector<128x1xf32> to vector<128x128xf32>
    %31 = arith.subf %14, %30 : vector<128x128xf32>
    %cst_16 = arith.constant 9.99999996E-13 : f32
    %32 = vector.broadcast %cst_16 : f32 to vector<128x1xf32>
    %33 = arith.addf %29, %32 : vector<128x1xf32>
    %34 = math.rsqrt %33 : vector<128x1xf32>
    %35 = vector.broadcast %34 : vector<128x1xf32> to vector<128x128xf32>
    %36 = arith.mulf %31, %35 : vector<128x128xf32>
    %37 = vector.broadcast %15 : vector<1x128xf32> to vector<128x128xf32>
    %38 = arith.mulf %36, %37 : vector<128x128xf32>
    %39 = vector.broadcast %16 : vector<1x128xf32> to vector<128x128xf32>
    %40 = arith.addf %38, %39 : vector<128x128xf32>
    %41 = arith.truncf %40 : vector<128x128xf32> to vector<128x128xbf16>
    %c0_17 = arith.constant 0 : index
    %c0_18 = arith.constant 0 : index
    %42 = vector.load %arg6[%c0_17, %c0_18] : memref<128x384xbf16, #tpu.memory_space<vmem>>, vector<128x384xbf16>
    %cst_19 = arith.constant dense<0.000000e+00> : vector<128x384xf32>
    %43 = tpu.matmul %41, %42, %cst_19 {dimension_numbers = #tpu.dot_dimension_numbers<[1], [0], [0], [1], [0, 0, 1, 1], [], []>} : vector<128x128xbf16>, vector<128x384xbf16>, vector<128x384xf32> -> vector<128x384xf32>
    %c0_20 = arith.constant 0 : index
    %c0_21 = arith.constant 0 : index
    %44 = vector.load %arg7[%c0_20, %c0_21] : memref<1x384xf32, #tpu.memory_space<vmem>>, vector<1x384xf32>
    %45 = vector.broadcast %44 : vector<1x384xf32> to vector<128x384xf32>
    %46 = arith.addf %43, %45 : vector<128x384xf32>
    %47 = arith.truncf %46 : vector<128x384xf32> to vector<128x384xbf16>
    %48 = vector.extract_strided_slice %47 {offsets = [0, 0], sizes = [128, 128], strides = [1, 1]} : vector<128x384xbf16> to vector<128x128xbf16>
    %49 = vector.extract_strided_slice %47 {offsets = [0, 128], sizes = [128, 128], strides = [1, 1]} : vector<128x384xbf16> to vector<128x128xbf16>
    %50 = vector.extract_strided_slice %47 {offsets = [0, 256], sizes = [128, 128], strides = [1, 1]} : vector<128x384xbf16> to vector<128x128xbf16>
    %cst_22 = arith.constant dense<0.000000e+00> : vector<128x128xf32>
    %51 = tpu.matmul %48, %49, %cst_22 {dimension_numbers = #tpu.dot_dimension_numbers<[1], [1], [0], [0], [0, 0, 1, 0], [], []>} : vector<128x128xbf16>, vector<128x128xbf16>, vector<128x128xf32> -> vector<128x128xf32>
    %c0_23 = arith.constant 0 : index
    %c0_24 = arith.constant 0 : index
    %52 = vector.load %arg5[%c0_23, %c0_24] : memref<128x128xf32, #tpu.memory_space<vmem>>, vector<128x128xf32>
    %53 = arith.addf %51, %52 : vector<128x128xf32>
    %cst_25 = arith.constant 0.000000e+00 : f32
    %54 = vector.broadcast %cst_25 : f32 to vector<1x128xf32>
    %55 = arith.cmpf ogt, %3, %54 : vector<1x128xf32>
    %cst_26 = arith.constant -1.000000e+04 : f32
    %56 = vector.shape_cast %55 : vector<1x128xi1> to vector<1x128xi1>
    %57 = vector.broadcast %56 : vector<1x128xi1> to vector<128x128xi1>
    %58 = vector.broadcast %cst_26 : f32 to vector<128x128xf32>
    %59 = arith.select %57, %53, %58 : vector<128x128xi1>, vector<128x128xf32>
    %cst_27 = arith.constant dense<0xFF800000> : vector<128xf32>
    %60 = vector.multi_reduction <maximumf>, %59, %cst_27 [1] : vector<128x128xf32> to vector<128xf32>
    %61 = vector.shape_cast %60 : vector<128xf32> to vector<128x1xf32>
    %62 = vector.broadcast %61 : vector<128x1xf32> to vector<128x128xf32>
    %63 = arith.subf %59, %62 : vector<128x128xf32>
    %64 = math.exp %63 : vector<128x128xf32>
    %cst_28 = arith.constant dense<0.000000e+00> : vector<128xf32>
    %65 = vector.multi_reduction <add>, %64, %cst_28 [1] : vector<128x128xf32> to vector<128xf32>
    %66 = vector.shape_cast %65 : vector<128xf32> to vector<128x1xf32>
    %67 = tpu.reciprocal %66 {approx = true} : vector<128x1xf32> -> vector<128x1xf32>
    %68 = vector.broadcast %67 : vector<128x1xf32> to vector<128x128xf32>
    %69 = arith.mulf %64, %68 : vector<128x128xf32>
    %70 = arith.truncf %69 : vector<128x128xf32> to vector<128x128xbf16>
    %cst_29 = arith.constant dense<0.000000e+00> : vector<128x128xf32>
    %71 = tpu.matmul %70, %50, %cst_29 {dimension_numbers = #tpu.dot_dimension_numbers<[1], [0], [0], [1], [0, 0, 1, 1], [], []>} : vector<128x128xbf16>, vector<128x128xbf16>, vector<128x128xf32> -> vector<128x128xf32>
    %72 = arith.truncf %71 : vector<128x128xf32> to vector<128x128xbf16>
    %c0_30 = arith.constant 0 : index
    %c0_31 = arith.constant 0 : index
    %73 = vector.load %arg8[%c0_30, %c0_31] : memref<128x128xbf16, #tpu.memory_space<vmem>>, vector<128x128xbf16>
    %cst_32 = arith.constant dense<0.000000e+00> : vector<128x128xf32>
    %74 = tpu.matmul %72, %73, %cst_32 {dimension_numbers = #tpu.dot_dimension_numbers<[1], [0], [0], [1], [0, 0, 1, 1], [], []>} : vector<128x128xbf16>, vector<128x128xbf16>, vector<128x128xf32> -> vector<128x128xf32>
    %c0_33 = arith.constant 0 : index
    %c0_34 = arith.constant 0 : index
    %75 = vector.load %arg9[%c0_33, %c0_34] : memref<1x128xf32, #tpu.memory_space<vmem>>, vector<1x128xf32>
    %76 = vector.broadcast %75 : vector<1x128xf32> to vector<128x128xf32>
    %77 = arith.addf %74, %76 : vector<128x128xf32>
    %78 = arith.addf %40, %77 : vector<128x128xf32>
    %79 = vector.extract_strided_slice %4 {offsets = [2, 0], sizes = [1, 128], strides = [1, 1]} : vector<6x128xf32> to vector<1x128xf32>
    %80 = vector.extract_strided_slice %4 {offsets = [3, 0], sizes = [1, 128], strides = [1, 1]} : vector<6x128xf32> to vector<1x128xf32>
    %cst_35 = arith.constant dense<0.000000e+00> : vector<128xf32>
    %81 = vector.multi_reduction <add>, %78, %cst_35 [1] : vector<128x128xf32> to vector<128xf32>
    %82 = vector.shape_cast %81 : vector<128xf32> to vector<128x1xf32>
    %cst_36 = arith.constant 1.280000e+02 : f32
    %83 = vector.broadcast %cst_36 : f32 to vector<128x1xf32>
    %84 = arith.divf %82, %83 : vector<128x1xf32>
    %85 = arith.mulf %78, %78 : vector<128x128xf32>
    %cst_37 = arith.constant dense<0.000000e+00> : vector<128xf32>
    %86 = vector.multi_reduction <add>, %85, %cst_37 [1] : vector<128x128xf32> to vector<128xf32>
    %87 = vector.shape_cast %86 : vector<128xf32> to vector<128x1xf32>
    %cst_38 = arith.constant 1.280000e+02 : f32
    %88 = vector.broadcast %cst_38 : f32 to vector<128x1xf32>
    %89 = arith.divf %87, %88 : vector<128x1xf32>
    %90 = arith.mulf %84, %84 : vector<128x1xf32>
    %91 = arith.subf %89, %90 : vector<128x1xf32>
    %cst_39 = arith.constant 0.000000e+00 : f32
    %92 = vector.broadcast %cst_39 : f32 to vector<128x1xf32>
    %93 = arith.maximumf %91, %92 : vector<128x1xf32>
    %94 = vector.broadcast %84 : vector<128x1xf32> to vector<128x128xf32>
    %95 = arith.subf %78, %94 : vector<128x128xf32>
    %cst_40 = arith.constant 9.99999996E-13 : f32
    %96 = vector.broadcast %cst_40 : f32 to vector<128x1xf32>
    %97 = arith.addf %93, %96 : vector<128x1xf32>
    %98 = math.rsqrt %97 : vector<128x1xf32>
    %99 = vector.broadcast %98 : vector<128x1xf32> to vector<128x128xf32>
    %100 = arith.mulf %95, %99 : vector<128x128xf32>
    %101 = vector.broadcast %79 : vector<1x128xf32> to vector<128x128xf32>
    %102 = arith.mulf %100, %101 : vector<128x128xf32>
    %103 = vector.broadcast %80 : vector<1x128xf32> to vector<128x128xf32>
    %104 = arith.addf %102, %103 : vector<128x128xf32>
    %105 = arith.truncf %104 : vector<128x128xf32> to vector<128x128xbf16>
    %c0_41 = arith.constant 0 : index
    %c0_42 = arith.constant 0 : index
    %106 = vector.load %arg10[%c0_41, %c0_42] : memref<128x512xbf16, #tpu.memory_space<vmem>>, vector<128x512xbf16>
    %cst_43 = arith.constant dense<0.000000e+00> : vector<128x512xf32>
    %107 = tpu.matmul %105, %106, %cst_43 {dimension_numbers = #tpu.dot_dimension_numbers<[1], [0], [0], [1], [0, 0, 1, 1], [], []>} : vector<128x128xbf16>, vector<128x512xbf16>, vector<128x512xf32> -> vector<128x512xf32>
    %c0_44 = arith.constant 0 : index
    %c0_45 = arith.constant 0 : index
    %108 = vector.load %arg11[%c0_44, %c0_45] : memref<1x512xf32, #tpu.memory_space<vmem>>, vector<1x512xf32>
    %109 = vector.broadcast %108 : vector<1x512xf32> to vector<128x512xf32>
    %110 = arith.addf %107, %109 : vector<128x512xf32>
    %111 = arith.mulf %110, %110 : vector<128x512xf32>
    %112 = arith.mulf %110, %111 : vector<128x512xf32>
    %cst_46 = arith.constant 4.471500e-02 : f32
    %113 = vector.broadcast %cst_46 : f32 to vector<128x512xf32>
    %114 = arith.mulf %113, %112 : vector<128x512xf32>
    %115 = arith.addf %110, %114 : vector<128x512xf32>
    %cst_47 = arith.constant 0.797884583 : f32
    %116 = vector.broadcast %cst_47 : f32 to vector<128x512xf32>
    %117 = arith.mulf %116, %115 : vector<128x512xf32>
    %118 = math.tanh %117 : vector<128x512xf32>
    %cst_48 = arith.constant 1.000000e+00 : f32
    %119 = vector.broadcast %cst_48 : f32 to vector<128x512xf32>
    %120 = arith.addf %119, %118 : vector<128x512xf32>
    %cst_49 = arith.constant 5.000000e-01 : f32
    %121 = vector.broadcast %cst_49 : f32 to vector<128x512xf32>
    %122 = arith.mulf %121, %120 : vector<128x512xf32>
    %123 = arith.mulf %110, %122 : vector<128x512xf32>
    %124 = arith.truncf %123 : vector<128x512xf32> to vector<128x512xbf16>
    %c0_50 = arith.constant 0 : index
    %c0_51 = arith.constant 0 : index
    %125 = vector.load %arg12[%c0_50, %c0_51] : memref<512x128xbf16, #tpu.memory_space<vmem>>, vector<512x128xbf16>
    %cst_52 = arith.constant dense<0.000000e+00> : vector<128x128xf32>
    %126 = tpu.matmul %124, %125, %cst_52 {dimension_numbers = #tpu.dot_dimension_numbers<[1], [0], [0], [1], [0, 0, 1, 1], [], []>} : vector<128x512xbf16>, vector<512x128xbf16>, vector<128x128xf32> -> vector<128x128xf32>
    %c0_53 = arith.constant 0 : index
    %c0_54 = arith.constant 0 : index
    %127 = vector.load %arg13[%c0_53, %c0_54] : memref<1x128xf32, #tpu.memory_space<vmem>>, vector<1x128xf32>
    %128 = vector.broadcast %127 : vector<1x128xf32> to vector<128x128xf32>
    %129 = arith.addf %126, %128 : vector<128x128xf32>
    %130 = arith.addf %104, %129 : vector<128x128xf32>
    %131 = vector.extract_strided_slice %4 {offsets = [4, 0], sizes = [1, 128], strides = [1, 1]} : vector<6x128xf32> to vector<1x128xf32>
    %132 = vector.extract_strided_slice %4 {offsets = [5, 0], sizes = [1, 128], strides = [1, 1]} : vector<6x128xf32> to vector<1x128xf32>
    %cst_55 = arith.constant dense<0.000000e+00> : vector<128xf32>
    %133 = vector.multi_reduction <add>, %130, %cst_55 [1] : vector<128x128xf32> to vector<128xf32>
    %134 = vector.shape_cast %133 : vector<128xf32> to vector<128x1xf32>
    %cst_56 = arith.constant 1.280000e+02 : f32
    %135 = vector.broadcast %cst_56 : f32 to vector<128x1xf32>
    %136 = arith.divf %134, %135 : vector<128x1xf32>
    %137 = arith.mulf %130, %130 : vector<128x128xf32>
    %cst_57 = arith.constant dense<0.000000e+00> : vector<128xf32>
    %138 = vector.multi_reduction <add>, %137, %cst_57 [1] : vector<128x128xf32> to vector<128xf32>
    %139 = vector.shape_cast %138 : vector<128xf32> to vector<128x1xf32>
    %cst_58 = arith.constant 1.280000e+02 : f32
    %140 = vector.broadcast %cst_58 : f32 to vector<128x1xf32>
    %141 = arith.divf %139, %140 : vector<128x1xf32>
    %142 = arith.mulf %136, %136 : vector<128x1xf32>
    %143 = arith.subf %141, %142 : vector<128x1xf32>
    %cst_59 = arith.constant 0.000000e+00 : f32
    %144 = vector.broadcast %cst_59 : f32 to vector<128x1xf32>
    %145 = arith.maximumf %143, %144 : vector<128x1xf32>
    %146 = vector.broadcast %136 : vector<128x1xf32> to vector<128x128xf32>
    %147 = arith.subf %130, %146 : vector<128x128xf32>
    %cst_60 = arith.constant 9.99999996E-13 : f32
    %148 = vector.broadcast %cst_60 : f32 to vector<128x1xf32>
    %149 = arith.addf %145, %148 : vector<128x1xf32>
    %150 = math.rsqrt %149 : vector<128x1xf32>
    %151 = vector.broadcast %150 : vector<128x1xf32> to vector<128x128xf32>
    %152 = arith.mulf %147, %151 : vector<128x128xf32>
    %153 = vector.broadcast %131 : vector<1x128xf32> to vector<128x128xf32>
    %154 = arith.mulf %152, %153 : vector<128x128xf32>
    %155 = vector.broadcast %132 : vector<1x128xf32> to vector<128x128xf32>
    %156 = arith.addf %154, %155 : vector<128x128xf32>
    %c0_61 = arith.constant 0 : index
    %c0_62 = arith.constant 0 : index
    %157 = vector.load %arg15[%c0_61, %c0_62] : memref<16x128xbf16, #tpu.memory_space<vmem>>, vector<16x128xbf16>
    %158 = arith.truncf %156 : vector<128x128xf32> to vector<128x128xbf16>
    %cst_63 = arith.constant dense<0.000000e+00> : vector<16x128xf32>
    %159 = tpu.matmul %157, %158, %cst_63 {dimension_numbers = #tpu.dot_dimension_numbers<[1], [0], [0], [1], [0, 0, 1, 1], [], []>} : vector<16x128xbf16>, vector<128x128xbf16>, vector<16x128xf32> -> vector<16x128xf32>
    %c0_64 = arith.constant 0 : index
    %c0_65 = arith.constant 0 : index
    %160 = vector.load %arg16[%c0_64, %c0_65] : memref<16x128xf32, #tpu.memory_space<vmem>>, vector<16x128xf32>
    tpu.vector_store %arg16[%c0_64, %c0_65], %159 {strides = array<i32>} : memref<16x128xf32, #tpu.memory_space<vmem>>, vector<16x128xf32>,
    return
  }
  func.func @transform_0(%arg0: i32) -> (i32, i32, i32) {
    %c0_i32 = arith.constant 0 : i32
    %c0_i32_0 = arith.constant 0 : i32
    %c0_i32_1 = arith.constant 0 : i32
    return %arg0, %c0_i32, %c0_i32_0 : i32, i32, i32
  }
  func.func @transform_1(%arg0: i32) -> (i32, i32, i32) {
    %c0_i32 = arith.constant 0 : i32
    %c0_i32_0 = arith.constant 0 : i32
    %c0_i32_1 = arith.constant 0 : i32
    return %arg0, %c0_i32, %c0_i32_0 : i32, i32, i32
  }
  func.func @transform_2(%arg0: i32) -> (i32, i32) {
    %c0_i32 = arith.constant 0 : i32
    %c0_i32_0 = arith.constant 0 : i32
    %c0_i32_1 = arith.constant 0 : i32
    return %c0_i32, %c0_i32_0 : i32, i32
  }
  func.func @transform_3(%arg0: i32) -> (i32, i32) {
    %c0_i32 = arith.constant 0 : i32
    %c0_i32_0 = arith.constant 0 : i32
    %c0_i32_1 = arith.constant 0 : i32
    return %c0_i32, %c0_i32_0 : i32, i32
  }
  func.func @transform_4(%arg0: i32) -> (i32, i32) {
    %c0_i32 = arith.constant 0 : i32
    %c0_i32_0 = arith.constant 0 : i32
    %c0_i32_1 = arith.constant 0 : i32
    return %c0_i32, %c0_i32_0 : i32, i32
  }
  func.func @transform_5(%arg0: i32) -> (i32, i32) {
    %c0_i32 = arith.constant 0 : i32
    %c0_i32_0 = arith.constant 0 : i32
    %c0_i32_1 = arith.constant 0 : i32
    return %c0_i32, %c0_i32_0 : i32, i32
  }
  func.func @transform_6(%arg0: i32) -> (i32, i32) {
    %c0_i32 = arith.constant 0 : i32
    %c0_i32_0 = arith.constant 0 : i32
    %c0_i32_1 = arith.constant 0 : i32
    return %c0_i32, %c0_i32_0 : i32, i32
  }
  func.func @transform_7(%arg0: i32) -> (i32, i32) {
    %c0_i32 = arith.constant 0 : i32
    %c0_i32_0 = arith.constant 0 : i32
    %c0_i32_1 = arith.constant 0 : i32
    return %c0_i32, %c0_i32_0 : i32, i32
  }
  func.func @transform_8(%arg0: i32) -> (i32, i32) {
    %c0_i32 = arith.constant 0 : i32
    %c0_i32_0 = arith.constant 0 : i32
    %c0_i32_1 = arith.constant 0 : i32
    return %c0_i32, %c0_i32_0 : i32, i32
  }
  func.func @transform_9(%arg0: i32) -> (i32, i32) {
    %c0_i32 = arith.constant 0 : i32
    %c0_i32_0 = arith.constant 0 : i32
    %c0_i32_1 = arith.constant 0 : i32
    return %c0_i32, %c0_i32_0 : i32, i32
  }
  func.func @transform_10(%arg0: i32) -> (i32, i32) {
    %c0_i32 = arith.constant 0 : i32
    %c0_i32_0 = arith.constant 0 : i32
    %c0_i32_1 = arith.constant 0 : i32
    return %c0_i32, %c0_i32_0 : i32, i32
  }
  func.func @transform_11(%arg0: i32) -> (i32, i32) {
    %c0_i32 = arith.constant 0 : i32
    %c0_i32_0 = arith.constant 0 : i32
    %c0_i32_1 = arith.constant 0 : i32
    return %c0_i32, %c0_i32_0 : i32, i32
  }
  func.func @transform_12(%arg0: i32) -> (i32, i32) {
    %c0_i32 = arith.constant 0 : i32
    %c0_i32_0 = arith.constant 0 : i32
    %c0_i32_1 = arith.constant 0 : i32
    return %c0_i32, %c0_i32_0 : i32, i32
  }
  func.func @transform_13(%arg0: i32) -> (i32, i32) {
    %c0_i32 = arith.constant 0 : i32
    %c0_i32_0 = arith.constant 0 : i32
    %c0_i32_1 = arith.constant 0 : i32
    return %c0_i32, %c0_i32_0 : i32, i32
  }
  func.func @transform_14(%arg0: i32) -> (i32, i32) {
    %c0_i32 = arith.constant 0 : i32
    %c0_i32_0 = arith.constant 0 : i32
    %c0_i32_1 = arith.constant 0 : i32
    return %c0_i32, %c0_i32_0 : i32, i32
  }
  func.func @transform_15(%arg0: i32) -> (i32, i32) {
    %c0_i32 = arith.constant 0 : i32
    %c0_i32_0 = arith.constant 0 : i32
    return %arg0, %c0_i32 : i32, i32
  }
}

</mosaic_0001>

<llo_original>
// kernel: eq.15
$region0: #{eq.15}
  %s0 = inlined_call_operand.vmem [shape: s32[16,8], index: 0, kind: input, shape index: {}]
  %s1 = inlined_call_operand.vmem [shape: s32[128], index: 1, kind: output, shape index: {}]
  $region1: #{eq.15} parent=0
    #allocation0 [shape = 'u8[4096]{0}', space=vmem, size = 0x1000, scoped, tag = 'scoped mem for output reshape']
    %v2 = vld [vmem:[%s0] sm:$0x1]
    %vm3 = vcmask 64512
    %4 = vst.msk [vmem:[#allocation0] sm:$0x1] %vm3, %v2
    %s5 = scalar_lea.vmem %s0, 15
    %v6 = vld [vmem:[%s5] sm:$0x1]
    %7 = vrot.lane.b32.xlu0 %v6, 120
    %v8 = vpop.permute.xlu0 %7
    %vm9 = vcmask 1048512
    %10 = vst.msk [vmem:[#allocation0] sm:$0x1] %vm9, %v8
    %s11 = scalar_lea.vmem %s0, 14
    %v12 = vld [vmem:[%s11] sm:$0x1]
    %13 = vrot.lane.b32.xlu0 %v12, 112
    %v14 = vpop.permute.xlu0 %13
    %vm15 = vcmask 982912
    %16 = vst.msk [vmem:[#allocation0] sm:$0x1] %vm15, %v14
    %s17 = scalar_lea.vmem %s0, 13
    %v18 = vld [vmem:[%s17] sm:$0x1]
    %19 = vrot.lane.b32.xlu0 %v18, 104
    %v20 = vpop.permute.xlu0 %19
    %vm21 = vcmask 917312
    %22 = vst.msk [vmem:[#allocation0] sm:$0x1] %vm21, %v20
    %s23 = scalar_lea.vmem %s0, 12
    %v24 = vld [vmem:[%s23] sm:$0x1]
    %25 = vrot.lane.b32.xlu0 %v24, 96
    %v26 = vpop.permute.xlu0 %25
    %vm27 = vcmask 851712
    %28 = vst.msk [vmem:[#allocation0] sm:$0x1] %vm27, %v26
    %s29 = scalar_lea.vmem %s0, 11
    %v30 = vld [vmem:[%s29] sm:$0x1]
    %31 = vrot.lane.b32.xlu0 %v30, 88
    %v32 = vpop.permute.xlu0 %31
    %vm33 = vcmask 786112
    %34 = vst.msk [vmem:[#allocation0] sm:$0x1] %vm33, %v32
    %s35 = scalar_lea.vmem %s0, 10
    %v36 = vld [vmem:[%s35] sm:$0x1]
    %37 = vrot.lane.b32.xlu0 %v36, 80
    %v38 = vpop.permute.xlu0 %37
    %vm39 = vcmask 720512
    %40 = vst.msk [vmem:[#allocation0] sm:$0x1] %vm39, %v38
    %s41 = scalar_lea.vmem %s0, 9
    %v42 = vld [vmem:[%s41] sm:$0x1]
    %43 = vrot.lane.b32.xlu0 %v42, 72
    %v44 = vpop.permute.xlu0 %43
    %vm45 = vcmask 654912
    %46 = vst.msk [vmem:[#allocation0] sm:$0x1] %vm45, %v44
    %s47 = scalar_lea.vmem %s0, 8
    %v48 = vld [vmem:[%s47] sm:$0x1]
    %49 = vrot.lane.b32.xlu0 %v48, 64
    %v50 = vpop.permute.xlu0 %49
    %vm51 = vcmask 589312
    %52 = vst.msk [vmem:[#allocation0] sm:$0x1] %vm51, %v50
    %s53 = scalar_lea.vmem %s0, 7
    %v54 = vld [vmem:[%s53] sm:$0x1]
    %55 = vrot.lane.b32.xlu0 %v54, 56
    %v56 = vpop.permute.xlu0 %55
    %vm57 = vcmask 523712
    %58 = vst.msk [vmem:[#allocation0] sm:$0x1] %vm57, %v56
    %s59 = scalar_lea.vmem %s0, 6
    %v60 = vld [vmem:[%s59] sm:$0x1]
    %61 = vrot.lane.b32.xlu0 %v60, 48
    %v62 = vpop.permute.xlu0 %61
    %vm63 = vcmask 458112
    %64 = vst.msk [vmem:[#allocation0] sm:$0x1] %vm63, %v62
    %s65 = scalar_lea.vmem %s0, 5
    %v66 = vld [vmem:[%s65] sm:$0x1]
    %67 = vrot.lane.b32.xlu0 %v66, 40
    %v68 = vpop.permute.xlu0 %67
    %vm69 = vcmask 392512
    %70 = vst.msk [vmem:[#allocation0] sm:$0x1] %vm69, %v68
    %s71 = scalar_lea.vmem %s0, 4
    %v72 = vld [vmem:[%s71] sm:$0x1]
    %73 = vrot.lane.b32.xlu0 %v72, 32
    %v74 = vpop.permute.xlu0 %73
    %vm75 = vcmask 326912
    %76 = vst.msk [vmem:[#allocation0] sm:$0x1] %vm75, %v74
    %s77 = scalar_lea.vmem %s0, 3
    %v78 = vld [vmem:[%s77] sm:$0x1]
    %79 = vrot.lane.b32.xlu0 %v78, 24
    %v80 = vpop.permute.xlu0 %79
    %vm81 = vcmask 261312
    %82 = vst.msk [vmem:[#allocation0] sm:$0x1] %vm81, %v80
    %s83 = scalar_lea.vmem %s0, 2
    %v84 = vld [vmem:[%s83] sm:$0x1]
    %85 = vrot.lane.b32.xlu0 %v84, 16
    %v86 = vpop.permute.xlu0 %85
    %vm87 = vcmask 195712
    %88 = vst.msk [vmem:[#allocation0] sm:$0x1] %vm87, %v86
    %s89 = scalar_lea.vmem %s0, 1
    %v90 = vld [vmem:[%s89] sm:$0x1]
    %91 = vrot.lane.b32.xlu0 %v90, 8
    %v92 = vpop.permute.xlu0 %91
    %vm93 = vcmask 130112
    %94 = vst.msk [vmem:[#allocation0] sm:$0x1] %vm93, %v92
    %s96 = sshllo.u32 0, 1
    %v98 = vld [vmem:[#allocation0] sm:%s96]
    %s99 = sshllo.u32 0, 1
    %100 = vst [vmem:[%s1] sm:%s99] %v98

// kernel: srl_embeddings_forward.1
$region0: #{srl_embeddings_forward.1}
  #allocation0 [shape = 'u32[]', space=smem, size = 0x4, offset = 0x4, fixed_abs, tag = 'smem constant byte address 0x4 - core index']
  #allocation1 [shape = 'u32[144,128]{1,0:T(1,128)}', space=vmem, size = 0x12000, scoped, tag = 'internal scratch']
  %s0 = inlined_call_operand.vmem [shape: s32[2,128,1], index: 0, kind: input, shape index: {}]
  %s1 = inlined_call_operand.vmem [shape: f32[2,1,128], index: 1, kind: input, shape index: {}]
  %s2 = inlined_call_operand.vmem [shape: bf16[64,128], index: 2, kind: input, shape index: {}]
  %s3 = inlined_call_operand.vmem [shape: f32[128,128], index: 3, kind: input, shape index: {}]
  %s4 = inlined_call_operand.vmem [shape: f32[128,128], index: 4, kind: input, shape index: {}]
  %s5 = inlined_call_operand.vmem [shape: bf16[128,384], index: 5, kind: input, shape index: {}]
  %s6 = inlined_call_operand.vmem [shape: f32[1,384], index: 6, kind: input, shape index: {}]
  %s7 = inlined_call_operand.vmem [shape: bf16[128,128], index: 7, kind: input, shape index: {}]
  %s8 = inlined_call_operand.vmem [shape: f32[1,128], index: 8, kind: input, shape index: {}, may-alias: {8,12}]
  %s9 = inlined_call_operand.vmem [shape: bf16[128,512], index: 9, kind: input, shape index: {}]
  %s10 = inlined_call_operand.vmem [shape: f32[1,512], index: 10, kind: input, shape index: {}]
  %s11 = inlined_call_operand.vmem [shape: bf16[512,128], index: 11, kind: input, shape index: {}]
  %s12 = inlined_call_operand.vmem [shape: f32[1,128], index: 12, kind: input, shape index: {}, may-alias: {8,12}]
  %s13 = inlined_call_operand.vmem [shape: f32[6,128], index: 13, kind: input, shape index: {}]
  %s14 = inlined_call_operand.vmem [shape: bf16[16,128], index: 14, kind: input, shape index: {}]
  %s15 = inlined_call_operand.vmem [shape: f32[32,128], index: 15, kind: output, shape index: {}]
  %s16 = sld [smem:[#allocation0]]
  $region93: #{srl_embeddings_forward.1} parent=0
    _
  %s18 = ssub.s32 1, %s16
  %s19 = scalar_select 0, %s18, %s16
  loop: start=0, step=1, limit=4
  $region2: #{srl_embeddings_forward.1} parent=0 // loop_pre_header
    _
  $region3: #{srl_embeddings_forward.1} parent=0 // loop_header
    %s21 = sphi 0, %s25
    %p22 = scmp.ge.s32.totalorder %s21, 4
    %s31 = sphi 0, %s33
    %s34 = sphi 0, %s31
    %s35 = sphi 0, %s34
    %s51 = sphi 0, %s35
    %s57 = sphi 0, %s59
    %s60 = sphi 0, %s57
    %s61 = sphi 0, %s60
    %s77 = sphi 0, %s61
    %s81 = sphi 0, %s81
    %s83 = sphi 0, %s81
    %s84 = sphi 0, %s83
    %s98 = sphi 0, %s84
    %s102 = sphi 0, %s102
    %s104 = sphi 0, %s102
    %s105 = sphi 0, %s104
    %s119 = sphi 0, %s105
    %s123 = sphi 0, %s123
    %s125 = sphi 0, %s123
    %s126 = sphi 0, %s125
    %s140 = sphi 0, %s126
    %s144 = sphi 0, %s144
    %s146 = sphi 0, %s144
    %s147 = sphi 0, %s146
    %s161 = sphi 0, %s147
    %s165 = sphi 0, %s165
    %s167 = sphi 0, %s165
    %s168 = sphi 0, %s167
    %s182 = sphi 0, %s168
    %s186 = sphi 0, %s186
    %s188 = sphi 0, %s186
    %s189 = sphi 0, %s188
    %s203 = sphi 0, %s189
    %s207 = sphi 0, %s207
    %s209 = sphi 0, %s207
    %s210 = sphi 0, %s209
    %s224 = sphi 0, %s210
    %s228 = sphi 0, %s228
    %s230 = sphi 0, %s228
    %s231 = sphi 0, %s230
    %s245 = sphi 0, %s231
    %s249 = sphi 0, %s249
    %s251 = sphi 0, %s249
    %s252 = sphi 0, %s251
    %s266 = sphi 0, %s252
    %s270 = sphi 0, %s270
    %s272 = sphi 0, %s270
    %s273 = sphi 0, %s272
    %s287 = sphi 0, %s273
    %s291 = sphi 0, %s291
    %s293 = sphi 0, %s291
    %s294 = sphi 0, %s293
    %s308 = sphi 0, %s294
    %s312 = sphi 0, %s312
    %s314 = sphi 0, %s312
    %s315 = sphi 0, %s314
    %s329 = sphi 0, %s315
    %s333 = sphi 0, %s333
    %s335 = sphi 0, %s333
    %s336 = sphi 0, %s335
    %s350 = sphi 0, %s336
    %s356 = sphi 0, %s358
    %s359 = sphi 0, %s356
    %s360 = sphi 0, %s359
    %s376 = sphi 0, %s360
  $region4: #{srl_embeddings_forward.1} parent=0 // loop_header_branch
    %24 = sbr.rel (%p22) target = $region8
  $region5: #{srl_embeddings_forward.1} parent=0 // loop_body
    %s26 = ssub.s32 %s21, 1
    %s27 = ssub.s32 %s21, 2
    %s28 = sadd.s32 %s21, 1
    %s29 = ssub.s32 %s21, %s28
    %p30 = scmp.eq.s32.totalorder %s29, 0
    %s32 = sadd.s32 %s31, 1
    %s33 = scalar_select %p30, %s31, %s32
    %p36 = pneg %p30
    %p37 = scmp.eq.s32.totalorder %s21, 1
    %p38 = por %p36, %p37
    %p39 = scmp.ne.s32.totalorder %s31, %s34
    %p40 = scmp.eq.s32.totalorder %s21, 0
    %p41 = por %p39, %p40
    %p42 = scmp.ne.s32.totalorder %s31, %s34
    %p43 = scmp.eq.s32.totalorder %s26, 1
    %p44 = por %p42, %p43
    %p45 = scmp.ne.s32.totalorder %s34, %s35
    %p46 = scmp.eq.s32.totalorder %s26, 0
    %p47 = por %p45, %p46
    %p48 = scmp.ne.s32.totalorder %s34, %s35
    %p49 = scmp.eq.s32.totalorder %s27, 1
    %p50 = por %p48, %p49
    %p52 = scmp.ne.s32.totalorder %s35, %s51
    %p53 = scmp.eq.s32.totalorder %s27, 0
    %p54 = por %p52, %p53
    %s55 = ssub.s32 %s21, %s28
    %p56 = scmp.eq.s32.totalorder %s55, 0
    %s58 = sadd.s32 %s57, 1
    %s59 = scalar_select %p56, %s57, %s58
    %p62 = pneg %p56
    %p63 = scmp.eq.s32.totalorder %s21, 1
    %p64 = por %p62, %p63
    %p65 = scmp.ne.s32.totalorder %s57, %s60
    %p66 = scmp.eq.s32.totalorder %s21, 0
    %p67 = por %p65, %p66
    %p68 = scmp.ne.s32.totalorder %s57, %s60
    %p69 = scmp.eq.s32.totalorder %s26, 1
    %p70 = por %p68, %p69
    %p71 = scmp.ne.s32.totalorder %s60, %s61
    %p72 = scmp.eq.s32.totalorder %s26, 0
    %p73 = por %p71, %p72
    %p74 = scmp.ne.s32.totalorder %s60, %s61
    %p75 = scmp.eq.s32.totalorder %s27, 1
    %p76 = por %p74, %p75
    %p78 = scmp.ne.s32.totalorder %s61, %s77
    %p79 = scmp.eq.s32.totalorder %s27, 0
    %p80 = por %p78, %p79
    %s82 = sadd.s32 %s81, 1
    %p85 = scmp.eq.s32.totalorder %s21, 1
    %p86 = scmp.ne.s32.totalorder %s81, %s83
    %p87 = scmp.eq.s32.totalorder %s21, 0
    %p88 = por %p86, %p87
    %p89 = scmp.ne.s32.totalorder %s81, %s83
    %p90 = scmp.eq.s32.totalorder %s26, 1
    %p91 = por %p89, %p90
    %p92 = scmp.ne.s32.totalorder %s83, %s84
    %p93 = scmp.eq.s32.totalorder %s26, 0
    %p94 = por %p92, %p93
    %p95 = scmp.ne.s32.totalorder %s83, %s84
    %p96 = scmp.eq.s32.totalorder %s27, 1
    %p97 = por %p95, %p96
    %p99 = scmp.ne.s32.totalorder %s84, %s98
    %p100 = scmp.eq.s32.totalorder %s27, 0
    %p101 = por %p99, %p100
    %s103 = sadd.s32 %s102, 1
    %p106 = scmp.eq.s32.totalorder %s21, 1
    %p107 = scmp.ne.s32.totalorder %s102, %s104
    %p108 = scmp.eq.s32.totalorder %s21, 0
    %p109 = por %p107, %p108
    %p110 = scmp.ne.s32.totalorder %s102, %s104
    %p111 = scmp.eq.s32.totalorder %s26, 1
    %p112 = por %p110, %p111
    %p113 = scmp.ne.s32.totalorder %s104, %s105
    %p114 = scmp.eq.s32.totalorder %s26, 0
    %p115 = por %p113, %p114
    %p116 = scmp.ne.s32.totalorder %s104, %s105
    %p117 = scmp.eq.s32.totalorder %s27, 1
    %p118 = por %p116, %p117
    %p120 = scmp.ne.s32.totalorder %s105, %s119
    %p121 = scmp.eq.s32.totalorder %s27, 0
    %p122 = por %p120, %p121
    %s124 = sadd.s32 %s123, 1
    %p127 = scmp.eq.s32.totalorder %s21, 1
    %p128 = scmp.ne.s32.totalorder %s123, %s125
    %p129 = scmp.eq.s32.totalorder %s21, 0
    %p130 = por %p128, %p129
    %p131 = scmp.ne.s32.totalorder %s123, %s125
    %p132 = scmp.eq.s32.totalorder %s26, 1
    %p133 = por %p131, %p132
    %p134 = scmp.ne.s32.totalorder %s125, %s126
    %p135 = scmp.eq.s32.totalorder %s26, 0
    %p136 = por %p134, %p135
    %p137 = scmp.ne.s32.totalorder %s125, %s126
    %p138 = scmp.eq.s32.totalorder %s27, 1
    %p139 = por %p137, %p138
    %p141 = scmp.ne.s32.totalorder %s126, %s140
    %p142 = scmp.eq.s32.totalorder %s27, 0
    %p143 = por %p141, %p142
    %s145 = sadd.s32 %s144, 1
    %p148 = scmp.eq.s32.totalorder %s21, 1
    %p149 = scmp.ne.s32.totalorder %s144, %s146
    %p150 = scmp.eq.s32.totalorder %s21, 0
    %p151 = por %p149, %p150
    %p152 = scmp.ne.s32.totalorder %s144, %s146
    %p153 = scmp.eq.s32.totalorder %s26, 1
    %p154 = por %p152, %p153
    %p155 = scmp.ne.s32.totalorder %s146, %s147
    %p156 = scmp.eq.s32.totalorder %s26, 0
    %p157 = por %p155, %p156
    %p158 = scmp.ne.s32.totalorder %s146, %s147
    %p159 = scmp.eq.s32.totalorder %s27, 1
    %p160 = por %p158, %p159
    %p162 = scmp.ne.s32.totalorder %s147, %s161
    %p163 = scmp.eq.s32.totalorder %s27, 0
    %p164 = por %p162, %p163
    %s166 = sadd.s32 %s165, 1
    %p169 = scmp.eq.s32.totalorder %s21, 1
    %p170 = scmp.ne.s32.totalorder %s165, %s167
    %p171 = scmp.eq.s32.totalorder %s21, 0
    %p172 = por %p170, %p171
    %p173 = scmp.ne.s32.totalorder %s165, %s167
    %p174 = scmp.eq.s32.totalorder %s26, 1
    %p175 = por %p173, %p174
    %p176 = scmp.ne.s32.totalorder %s167, %s168
    %p177 = scmp.eq.s32.totalorder %s26, 0
    %p178 = por %p176, %p177
    %p179 = scmp.ne.s32.totalorder %s167, %s168
    %p180 = scmp.eq.s32.totalorder %s27, 1
    %p181 = por %p179, %p180
    %p183 = scmp.ne.s32.totalorder %s168, %s182
    %p184 = scmp.eq.s32.totalorder %s27, 0
    %p185 = por %p183, %p184
    %s187 = sadd.s32 %s186, 1
    %p190 = scmp.eq.s32.totalorder %s21, 1
    %p191 = scmp.ne.s32.totalorder %s186, %s188
    %p192 = scmp.eq.s32.totalorder %s21, 0
    %p193 = por %p191, %p192
    %p194 = scmp.ne.s32.totalorder %s186, %s188
    %p195 = scmp.eq.s32.totalorder %s26, 1
    %p196 = por %p194, %p195
    %p197 = scmp.ne.s32.totalorder %s188, %s189
    %p198 = scmp.eq.s32.totalorder %s26, 0
    %p199 = por %p197, %p198
    %p200 = scmp.ne.s32.totalorder %s188, %s189
    %p201 = scmp.eq.s32.totalorder %s27, 1
    %p202 = por %p200, %p201
    %p204 = scmp.ne.s32.totalorder %s189, %s203
    %p205 = scmp.eq.s32.totalorder %s27, 0
    %p206 = por %p204, %p205
    %s208 = sadd.s32 %s207, 1
    %p211 = scmp.eq.s32.totalorder %s21, 1
    %p212 = scmp.ne.s32.totalorder %s207, %s209
    %p213 = scmp.eq.s32.totalorder %s21, 0
    %p214 = por %p212, %p213
    %p215 = scmp.ne.s32.totalorder %s207, %s209
    %p216 = scmp.eq.s32.totalorder %s26, 1
    %p217 = por %p215, %p216
    %p218 = scmp.ne.s32.totalorder %s209, %s210
    %p219 = scmp.eq.s32.totalorder %s26, 0
    %p220 = por %p218, %p219
    %p221 = scmp.ne.s32.totalorder %s209, %s210
    %p222 = scmp.eq.s32.totalorder %s27, 1
    %p223 = por %p221, %p222
    %p225 = scmp.ne.s32.totalorder %s210, %s224
    %p226 = scmp.eq.s32.totalorder %s27, 0
    %p227 = por %p225, %p226
    %s229 = sadd.s32 %s228, 1
    %p232 = scmp.eq.s32.totalorder %s21, 1
    %p233 = scmp.ne.s32.totalorder %s228, %s230
    %p234 = scmp.eq.s32.totalorder %s21, 0
    %p235 = por %p233, %p234
    %p236 = scmp.ne.s32.totalorder %s228, %s230
    %p237 = scmp.eq.s32.totalorder %s26, 1
    %p238 = por %p236, %p237
    %p239 = scmp.ne.s32.totalorder %s230, %s231
    %p240 = scmp.eq.s32.totalorder %s26, 0
    %p241 = por %p239, %p240
    %p242 = scmp.ne.s32.totalorder %s230, %s231
    %p243 = scmp.eq.s32.totalorder %s27, 1
    %p244 = por %p242, %p243
    %p246 = scmp.ne.s32.totalorder %s231, %s245
    %p247 = scmp.eq.s32.totalorder %s27, 0
    %p248 = por %p246, %p247
    %s250 = sadd.s32 %s249, 1
    %p253 = scmp.eq.s32.totalorder %s21, 1
    %p254 = scmp.ne.s32.totalorder %s249, %s251
    %p255 = scmp.eq.s32.totalorder %s21, 0
    %p256 = por %p254, %p255
    %p257 = scmp.ne.s32.totalorder %s249, %s251
    %p258 = scmp.eq.s32.totalorder %s26, 1
    %p259 = por %p257, %p258
    %p260 = scmp.ne.s32.totalorder %s251, %s252
    %p261 = scmp.eq.s32.totalorder %s26, 0
    %p262 = por %p260, %p261
    %p263 = scmp.ne.s32.totalorder %s251, %s252
    %p264 = scmp.eq.s32.totalorder %s27, 1
    %p265 = por %p263, %p264
    %p267 = scmp.ne.s32.totalorder %s252, %s266
    %p268 = scmp.eq.s32.totalorder %s27, 0
    %p269 = por %p267, %p268
    %s271 = sadd.s32 %s270, 1
    %p274 = scmp.eq.s32.totalorder %s21, 1
    %p275 = scmp.ne.s32.totalorder %s270, %s272
    %p276 = scmp.eq.s32.totalorder %s21, 0
    %p277 = por %p275, %p276
    %p278 = scmp.ne.s32.totalorder %s270, %s272
    %p279 = scmp.eq.s32.totalorder %s26, 1
    %p280 = por %p278, %p279
    %p281 = scmp.ne.s32.totalorder %s272, %s273
    %p282 = scmp.eq.s32.totalorder %s26, 0
    %p283 = por %p281, %p282
    %p284 = scmp.ne.s32.totalorder %s272, %s273
    %p285 = scmp.eq.s32.totalorder %s27, 1
    %p286 = por %p284, %p285
    %p288 = scmp.ne.s32.totalorder %s273, %s287
    %p289 = scmp.eq.s32.totalorder %s27, 0
    %p290 = por %p288, %p289
    %s292 = sadd.s32 %s291, 1
    %p295 = scmp.eq.s32.totalorder %s21, 1
    %p296 = scmp.ne.s32.totalorder %s291, %s293
    %p297 = scmp.eq.s32.totalorder %s21, 0
    %p298 = por %p296, %p297
    %p299 = scmp.ne.s32.totalorder %s291, %s293
    %p300 = scmp.eq.s32.totalorder %s26, 1
    %p301 = por %p299, %p300
    %p302 = scmp.ne.s32.totalorder %s293, %s294
    %p303 = scmp.eq.s32.totalorder %s26, 0
    %p304 = por %p302, %p303
    %p305 = scmp.ne.s32.totalorder %s293, %s294
    %p306 = scmp.eq.s32.totalorder %s27, 1
    %p307 = por %p305, %p306
    %p309 = scmp.ne.s32.totalorder %s294, %s308
    %p310 = scmp.eq.s32.totalorder %s27, 0
    %p311 = por %p309, %p310
    %s313 = sadd.s32 %s312, 1
    %p316 = scmp.eq.s32.totalorder %s21, 1
    %p317 = scmp.ne.s32.totalorder %s312, %s314
    %p318 = scmp.eq.s32.totalorder %s21, 0
    %p319 = por %p317, %p318
    %p320 = scmp.ne.s32.totalorder %s312, %s314
    %p321 = scmp.eq.s32.totalorder %s26, 1
    %p322 = por %p320, %p321
    %p323 = scmp.ne.s32.totalorder %s314, %s315
    %p324 = scmp.eq.s32.totalorder %s26, 0
    %p325 = por %p323, %p324
    %p326 = scmp.ne.s32.totalorder %s314, %s315
    %p327 = scmp.eq.s32.totalorder %s27, 1
    %p328 = por %p326, %p327
    %p330 = scmp.ne.s32.totalorder %s315, %s329
    %p331 = scmp.eq.s32.totalorder %s27, 0
    %p332 = por %p330, %p331
    %s334 = sadd.s32 %s333, 1
    %p337 = scmp.eq.s32.totalorder %s21, 1
    %p338 = scmp.ne.s32.totalorder %s333, %s335
    %p339 = scmp.eq.s32.totalorder %s21, 0
    %p340 = por %p338, %p339
    %p341 = scmp.ne.s32.totalorder %s333, %s335
    %p342 = scmp.eq.s32.totalorder %s26, 1
    %p343 = por %p341, %p342
    %p344 = scmp.ne.s32.totalorder %s335, %s336
    %p345 = scmp.eq.s32.totalorder %s26, 0
    %p346 = por %p344, %p345
    %p347 = scmp.ne.s32.totalorder %s335, %s336
    %p348 = scmp.eq.s32.totalorder %s27, 1
    %p349 = por %p347, %p348
    %p351 = scmp.ne.s32.totalorder %s336, %s350
    %p352 = scmp.eq.s32.totalorder %s27, 0
    %p353 = por %p351, %p352
    %s354 = ssub.s32 %s21, %s28
    %p355 = scmp.eq.s32.totalorder %s354, 0
    %s357 = sadd.s32 %s356, 1
    %s358 = scalar_select %p355, %s356, %s357
    %p361 = pneg %p355
    %p362 = scmp.eq.s32.totalorder %s21, 1
    %p363 = por %p361, %p362
    %p364 = scmp.ne.s32.totalorder %s356, %s359
    %p365 = scmp.eq.s32.totalorder %s21, 0
    %p366 = por %p364, %p365
    %p367 = scmp.ne.s32.totalorder %s356, %s359
    %p368 = scmp.eq.s32.totalorder %s26, 1
    %p369 = por %p367, %p368
    %p370 = scmp.ne.s32.totalorder %s359, %s360
    %p371 = scmp.eq.s32.totalorder %s26, 0
    %p372 = por %p370, %p371
    %p373 = scmp.ne.s32.totalorder %s359, %s360
    %p374 = scmp.eq.s32.totalorder %s27, 1
    %p375 = por %p373, %p374
    %p377 = scmp.ne.s32.totalorder %s360, %s376
    %p378 = scmp.eq.s32.totalorder %s27, 0
    %p379 = por %p377, %p378
    %p380 = scmp.le.s32.totalorder 1, %s21
    %p381 = scmp.lt.s32.totalorder %s21, 3
    %p382 = pnand %p380, %p381
    %p383 = pneg %p382
    // Predicated region
    $region9: #{srl_embeddings_forward.1} parent=5 // pred_check
      _
    $region10: #{srl_embeddings_forward.1} parent=5 // pred_check_branch
      %385 = sbr.rel (%p382) target = $region12
    $region11: #{srl_embeddings_forward.1} parent=5 // pred_region
      %s386 = ssub.s32 %s21, 1
      // Predicated region
      $region13: #{srl_embeddings_forward.1} parent=11 // pred_check
        %p387 = pneg %p94
      $region14: #{srl_embeddings_forward.1} parent=11 // pred_check_branch
        %389 = sbr.rel (%p387) target = $region16
      $region15: #{srl_embeddings_forward.1} parent=11 // pred_region
        _
      $region16: #{srl_embeddings_forward.1} parent=11 // pred_fallthru
        _
      // Predicated region
      $region17: #{srl_embeddings_forward.1} parent=11 // pred_check
        %p390 = pneg %p115
      $region18: #{srl_embeddings_forward.1} parent=11 // pred_check_branch
        %392 = sbr.rel (%p390) target = $region20
      $region19: #{srl_embeddings_forward.1} parent=11 // pred_region
        _
      $region20: #{srl_embeddings_forward.1} parent=11 // pred_fallthru
        _
      // Predicated region
      $region21: #{srl_embeddings_forward.1} parent=11 // pred_check
        %p393 = pneg %p136
      $region22: #{srl_embeddings_forward.1} parent=11 // pred_check_branch
        %395 = sbr.rel (%p393) target = $region24
      $region23: #{srl_embeddings_forward.1} parent=11 // pred_region
        _
      $region24: #{srl_embeddings_forward.1} parent=11 // pred_fallthru
        _
      // Predicated region
      $region25: #{srl_embeddings_forward.1} parent=11 // pred_check
        %p396 = pneg %p157
      $region26: #{srl_embeddings_forward.1} parent=11 // pred_check_branch
        %398 = sbr.rel (%p396) target = $region28
      $region27: #{srl_embeddings_forward.1} parent=11 // pred_region
        _
      $region28: #{srl_embeddings_forward.1} parent=11 // pred_fallthru
        _
      // Predicated region
      $region29: #{srl_embeddings_forward.1} parent=11 // pred_check
        %p399 = pneg %p178
      $region30: #{srl_embeddings_forward.1} parent=11 // pred_check_branch
        %401 = sbr.rel (%p399) target = $region32
      $region31: #{srl_embeddings_forward.1} parent=11 // pred_region
        _
      $region32: #{srl_embeddings_forward.1} parent=11 // pred_fallthru
        _
      // Predicated region
      $region33: #{srl_embeddings_forward.1} parent=11 // pred_check
        %p402 = pneg %p199
      $region34: #{srl_embeddings_forward.1} parent=11 // pred_check_branch
        %404 = sbr.rel (%p402) target = $region36
      $region35: #{srl_embeddings_forward.1} parent=11 // pred_region
        _
      $region36: #{srl_embeddings_forward.1} parent=11 // pred_fallthru
        _
      // Predicated region
      $region37: #{srl_embeddings_forward.1} parent=11 // pred_check
        %p405 = pneg %p220
      $region38: #{srl_embeddings_forward.1} parent=11 // pred_check_branch
        %407 = sbr.rel (%p405) target = $region40
      $region39: #{srl_embeddings_forward.1} parent=11 // pred_region
        _
      $region40: #{srl_embeddings_forward.1} parent=11 // pred_fallthru
        _
      // Predicated region
      $region41: #{srl_embeddings_forward.1} parent=11 // pred_check
        %p408 = pneg %p241
      $region42: #{srl_embeddings_forward.1} parent=11 // pred_check_branch
        %410 = sbr.rel (%p408) target = $region44
      $region43: #{srl_embeddings_forward.1} parent=11 // pred_region
        _
      $region44: #{srl_embeddings_forward.1} parent=11 // pred_fallthru
        _
      // Predicated region
      $region45: #{srl_embeddings_forward.1} parent=11 // pred_check
        %p411 = pneg %p262
      $region46: #{srl_embeddings_forward.1} parent=11 // pred_check_branch
        %413 = sbr.rel (%p411) target = $region48
      $region47: #{srl_embeddings_forward.1} parent=11 // pred_region
        _
      $region48: #{srl_embeddings_forward.1} parent=11 // pred_fallthru
        _
      // Predicated region
      $region49: #{srl_embeddings_forward.1} parent=11 // pred_check
        %p414 = pneg %p283
      $region50: #{srl_embeddings_forward.1} parent=11 // pred_check_branch
        %416 = sbr.rel (%p414) target = $region52
      $region51: #{srl_embeddings_forward.1} parent=11 // pred_region
        _
      $region52: #{srl_embeddings_forward.1} parent=11 // pred_fallthru
        _
      // Predicated region
      $region53: #{srl_embeddings_forward.1} parent=11 // pred_check
        %p417 = pneg %p304
      $region54: #{srl_embeddings_forward.1} parent=11 // pred_check_branch
        %419 = sbr.rel (%p417) target = $region56
      $region55: #{srl_embeddings_forward.1} parent=11 // pred_region
        _
      $region56: #{srl_embeddings_forward.1} parent=11 // pred_fallthru
        _
      // Predicated region
      $region57: #{srl_embeddings_forward.1} parent=11 // pred_check
        %p420 = pneg %p325
      $region58: #{srl_embeddings_forward.1} parent=11 // pred_check_branch
        %422 = sbr.rel (%p420) target = $region60
      $region59: #{srl_embeddings_forward.1} parent=11 // pred_region
        _
      $region60: #{srl_embeddings_forward.1} parent=11 // pred_fallthru
        _
      // Predicated region
      $region61: #{srl_embeddings_forward.1} parent=11 // pred_check
        %p423 = pneg %p346
      $region62: #{srl_embeddings_forward.1} parent=11 // pred_check_branch
        %425 = sbr.rel (%p423) target = $region64
      $region63: #{srl_embeddings_forward.1} parent=11 // pred_region
        _
      $region64: #{srl_embeddings_forward.1} parent=11 // pred_fallthru
        _
    $region12: #{srl_embeddings_forward.1} parent=5 // pred_fallthru
      _
    %p426 = scmp.lt.s32.totalorder %s21, 2
    // Predicated region
    $region65: #{srl_embeddings_forward.1} parent=5 // pred_check
      %p427 = pneg %p426
    $region66: #{srl_embeddings_forward.1} parent=5 // pred_check_branch
      %429 = sbr.rel (%p427) target = $region68
    $region67: #{srl_embeddings_forward.1} parent=5 // pred_region
      // Predicated region
      $region69: #{srl_embeddings_forward.1} parent=67 // pred_check
        %p430 = pneg %p41
      $region70: #{srl_embeddings_forward.1} parent=67 // pred_check_branch
        %432 = sbr.rel (%p430) target = $region72
      $region71: #{srl_embeddings_forward.1} parent=67 // pred_region
        %p433 = scmp.lt.s32.totalorder %s21, 1
        %s434 = scalar_select %p433, %s21, 1
        %s435 = smul.addr %s434, 16
        %s436 = smul.addr %s435, 8
        %s437 = scalar_lea.vmem %s0, %s436
      $region72: #{srl_embeddings_forward.1} parent=67 // pred_fallthru
        _
      // Predicated region
      $region73: #{srl_embeddings_forward.1} parent=67 // pred_check
        %p438 = pneg %p67
      $region74: #{srl_embeddings_forward.1} parent=67 // pred_check_branch
        %440 = sbr.rel (%p438) target = $region76
      $region75: #{srl_embeddings_forward.1} parent=67 // pred_region
        %p441 = scmp.lt.s32.totalorder %s21, 1
        %s442 = scalar_select %p441, %s21, 1
        %s443 = scalar_lea.vmem %s1, %s442
      $region76: #{srl_embeddings_forward.1} parent=67 // pred_fallthru
        _
    $region68: #{srl_embeddings_forward.1} parent=5 // pred_fallthru
      _
    %p444 = scmp.le.s32.totalorder 1, %s21
    %p445 = scmp.lt.s32.totalorder %s21, 3
    %p446 = pnand %p444, %p445
    %p447 = pneg %p446
    // Predicated region
    $region77: #{srl_embeddings_forward.1} parent=5 // pred_check
      _
    $region78: #{srl_embeddings_forward.1} parent=5 // pred_check_branch
      %449 = sbr.rel (%p446) target = $region80
    $region79: #{srl_embeddings_forward.1} parent=5 // pred_region
      %s450 = ssub.s32 %s21, 1
      %p451 = scmp.lt.s32.totalorder %s26, 1
      %s452 = scalar_select %p451, %s26, 1
      %s453 = smul.addr %s452, 16
      %s454 = smul.addr %s453, 8
      %s455 = scalar_lea.vmem %s0, %s454
      %p456 = pneg %p47
      %p457 = pneg %p44
      %p458 = scmp.lt.s32.totalorder %s26, 1
      %s459 = scalar_select %p458, %s26, 1
      %s460 = scalar_lea.vmem %s1, %s459
      %p461 = pneg %p73
      %p462 = pneg %p70
      %p463 = pneg %p94
      %p464 = pneg %p91
      %p465 = pneg %p115
      %p466 = pneg %p112
      %p467 = pneg %p136
      %p468 = pneg %p133
      %p469 = pneg %p157
      %p470 = pneg %p154
      %p471 = pneg %p178
      %p472 = pneg %p175
      %p473 = pneg %p199
      %p474 = pneg %p196
      %p475 = pneg %p220
      %p476 = pneg %p217
      %p477 = pneg %p241
      %p478 = pneg %p238
      %p479 = pneg %p262
      %p480 = pneg %p259
      %p481 = pneg %p283
      %p482 = pneg %p280
      %p483 = pneg %p304
      %p484 = pneg %p301
      %p485 = pneg %p325
      %p486 = pneg %p322
      %p487 = pneg %p346
      %p488 = pneg %p343
      %p489 = pneg %p372
      %p490 = pneg %p369
      %s491 = smul.u32 2, %s26
      %p492 = scmp.lt.s32.totalorder %s491, 3
      %s493 = scalar_select %p492, %s491, 3
      %s494 = smul.addr %s493, 8
      %s495 = scalar_lea.vmem %s15, %s494
      %p496 = scmp.lt.s32.totalorder %s26, 1
      %s497 = scalar_select %p496, %s26, 1
      %s498 = smul.addr %s497, 16
      %s499 = smul.addr %s498, 8
      %s500 = scalar_lea.vmem %s0, %s499
      %p501 = scmp.lt.s32.totalorder %s26, 1
      %s502 = scalar_select %p501, %s26, 1
      %s503 = scalar_lea.vmem %s1, %s502
      %s504 = smul.u32 2, %s26
      %p505 = scmp.lt.s32.totalorder %s504, 3
      %s506 = scalar_select %p505, %s504, 3
      %s507 = smul.addr %s506, 8
      %s508 = scalar_lea.vmem %s15, %s507
      %s509 = smul.u32 2, %s26
      %v511 = vld [vmem:[%s500] sm:$0xff]
      %v512 = vld [vmem:[%s500 + $0x8] sm:$0xff]
      %v513 = vld [vmem:[%s500 + $0x10] sm:$0xff]
      %v514 = vld [vmem:[%s500 + $0x18] sm:$0xff]
      %v515 = vld [vmem:[%s500 + $0x20] sm:$0xff]
      %v516 = vld [vmem:[%s500 + $0x28] sm:$0xff]
      %v517 = vld [vmem:[%s500 + $0x30] sm:$0xff]
      %v518 = vld [vmem:[%s500 + $0x38] sm:$0xff]
      %v519 = vld [vmem:[%s500 + $0x40] sm:$0xff]
      %v520 = vld [vmem:[%s500 + $0x48] sm:$0xff]
      %v521 = vld [vmem:[%s500 + $0x50] sm:$0xff]
      %v522 = vld [vmem:[%s500 + $0x58] sm:$0xff]
      %v523 = vld [vmem:[%s500 + $0x60] sm:$0xff]
      %v524 = vld [vmem:[%s500 + $0x68] sm:$0xff]
      %v525 = vld [vmem:[%s500 + $0x70] sm:$0xff]
      %v526 = vld [vmem:[%s500 + $0x78] sm:$0xff]
      %v527 = vld [vmem:[%s503] sm:$0x1]
      %v528 = vld [vmem:[%s13] sm:$0x3f]
      %v529 = vlaneseq
      %v530 = vand.u32 %v529, 127
      %531 = vset.pattern.permute.xlu0 0
      %532 = vperm.xlu0 %531, %v511
      %v533 = vpop.permute.xlu0 %532
      %534 = vset.pattern.permute.xlu0 0
      %535 = vperm.xlu0 %534, %v512
      %v536 = vpop.permute.xlu0 %535
      %537 = vset.pattern.permute.xlu0 0
      %538 = vperm.xlu0 %537, %v513
      %v539 = vpop.permute.xlu0 %538
      %540 = vset.pattern.permute.xlu0 0
      %541 = vperm.xlu0 %540, %v514
      %v542 = vpop.permute.xlu0 %541
      %543 = vset.pattern.permute.xlu0 0
      %544 = vperm.xlu0 %543, %v515
      %v545 = vpop.permute.xlu0 %544
      %546 = vset.pattern.permute.xlu0 0
      %547 = vperm.xlu0 %546, %v516
      %v548 = vpop.permute.xlu0 %547
      %549 = vset.pattern.permute.xlu0 0
      %550 = vperm.xlu0 %549, %v517
      %v551 = vpop.permute.xlu0 %550
      %552 = vset.pattern.permute.xlu0 0
      %553 = vperm.xlu0 %552, %v518
      %v554 = vpop.permute.xlu0 %553
      %555 = vset.pattern.permute.xlu0 0
      %556 = vperm.xlu0 %555, %v519
      %v557 = vpop.permute.xlu0 %556
      %558 = vset.pattern.permute.xlu0 0
      %559 = vperm.xlu0 %558, %v520
      %v560 = vpop.permute.xlu0 %559
      %561 = vset.pattern.permute.xlu0 0
      %562 = vperm.xlu0 %561, %v521
      %v563 = vpop.permute.xlu0 %562
      %564 = vset.pattern.permute.xlu0 0
      %565 = vperm.xlu0 %564, %v522
      %v566 = vpop.permute.xlu0 %565
      %567 = vset.pattern.permute.xlu0 0
      %568 = vperm.xlu0 %567, %v523
      %v569 = vpop.permute.xlu0 %568
      %570 = vset.pattern.permute.xlu0 0
      %571 = vperm.xlu0 %570, %v524
      %v572 = vpop.permute.xlu0 %571
      %573 = vset.pattern.permute.xlu0 0
      %574 = vperm.xlu0 %573, %v525
      %v575 = vpop.permute.xlu0 %574
      %576 = vset.pattern.permute.xlu0 0
      %577 = vperm.xlu0 %576, %v526
      %v578 = vpop.permute.xlu0 %577
      %vm579 = vcmp.eq.s32.totalorder %v530, %v533
      %vm580 = vcmp.eq.s32.totalorder %v530, %v536
      %vm581 = vcmp.eq.s32.totalorder %v530, %v539
      %vm582 = vcmp.eq.s32.totalorder %v530, %v542
      %vm583 = vcmp.eq.s32.totalorder %v530, %v545
      %vm584 = vcmp.eq.s32.totalorder %v530, %v548
      %vm585 = vcmp.eq.s32.totalorder %v530, %v551
      %vm586 = vcmp.eq.s32.totalorder %v530, %v554
      %vm587 = vcmp.eq.s32.totalorder %v530, %v557
      %vm588 = vcmp.eq.s32.totalorder %v530, %v560
      %vm589 = vcmp.eq.s32.totalorder %v530, %v563
      %vm590 = vcmp.eq.s32.totalorder %v530, %v566
      %vm591 = vcmp.eq.s32.totalorder %v530, %v569
      %vm592 = vcmp.eq.s32.totalorder %v530, %v572
      %vm593 = vcmp.eq.s32.totalorder %v530, %v575
      %vm594 = vcmp.eq.s32.totalorder %v530, %v578
      %v595 = vsel %vm579, 1, 0
      %v596 = vsel %vm580, 1, 0
      %v597 = vsel %vm581, 1, 0
      %v598 = vsel %vm582, 1, 0
      %v599 = vsel %vm583, 1, 0
      %v600 = vsel %vm584, 1, 0
      %v601 = vsel %vm585, 1, 0
      %v602 = vsel %vm586, 1, 0
      %v603 = vsel %vm587, 1, 0
      %v604 = vsel %vm588, 1, 0
      %v605 = vsel %vm589, 1, 0
      %v606 = vsel %vm590, 1, 0
      %v607 = vsel %vm591, 1, 0
      %v608 = vsel %vm592, 1, 0
      %v609 = vsel %vm593, 1, 0
      %v610 = vsel %vm594, 1, 0
      %v611 = vcvt.s32.f32 %v595
      %v612 = vcvt.s32.f32 %v596
      %v613 = vcvt.s32.f32 %v597
      %v614 = vcvt.s32.f32 %v598
      %v615 = vcvt.s32.f32 %v599
      %v616 = vcvt.s32.f32 %v600
      %v617 = vcvt.s32.f32 %v601
      %v618 = vcvt.s32.f32 %v602
      %v619 = vcvt.s32.f32 %v603
      %v620 = vcvt.s32.f32 %v604
      %v621 = vcvt.s32.f32 %v605
      %v622 = vcvt.s32.f32 %v606
      %v623 = vcvt.s32.f32 %v607
      %v624 = vcvt.s32.f32 %v608
      %v625 = vcvt.s32.f32 %v609
      %v626 = vcvt.s32.f32 %v610
      %v627 = vpack.c.bf16 %v612, %v611
      %v628 = vpack.c.bf16 %v614, %v613
      %v629 = vpack.c.bf16 %v616, %v615
      %v630 = vpack.c.bf16 %v618, %v617
      %v631 = vpack.c.bf16 %v620, %v619
      %v632 = vpack.c.bf16 %v622, %v621
      %v633 = vpack.c.bf16 %v624, %v623
      %v634 = vpack.c.bf16 %v626, %v625
      %v635 = vld [vmem:[%s2] sm:$0xf]
      %v636 = vld [vmem:[%s2 + $0x4] sm:$0xf]
      %v637 = vld [vmem:[%s2 + $0x8] sm:$0xf]
      %v638 = vld [vmem:[%s2 + $0xc] sm:$0xf]
      %v639 = vld [vmem:[%s2 + $0x10] sm:$0xf]
      %v640 = vld [vmem:[%s2 + $0x14] sm:$0xf]
      %v641 = vld [vmem:[%s2 + $0x18] sm:$0xf]
      %v642 = vld [vmem:[%s2 + $0x1c] sm:$0xf]
      %v643 = vld [vmem:[%s3] sm:$0xff]
      %v644 = vld [vmem:[%s3 + $0x8] sm:$0xff]
      %v645 = vld [vmem:[%s3 + $0x10] sm:$0xff]
      %v646 = vld [vmem:[%s3 + $0x18] sm:$0xff]
      %v647 = vld [vmem:[%s3 + $0x20] sm:$0xff]
      %v648 = vld [vmem:[%s3 + $0x28] sm:$0xff]
      %v649 = vld [vmem:[%s3 + $0x30] sm:$0xff]
      %v650 = vld [vmem:[%s3 + $0x38] sm:$0xff]
      %v651 = vld [vmem:[%s3 + $0x40] sm:$0xff]
      %v652 = vld [vmem:[%s3 + $0x48] sm:$0xff]
      %v653 = vld [vmem:[%s3 + $0x50] sm:$0xff]
      %v654 = vld [vmem:[%s3 + $0x58] sm:$0xff]
      %v655 = vld [vmem:[%s3 + $0x60] sm:$0xff]
      %v656 = vld [vmem:[%s3 + $0x68] sm:$0xff]
      %v657 = vld [vmem:[%s3 + $0x70] sm:$0xff]
      %v658 = vld [vmem:[%s3 + $0x78] sm:$0xff]
      %v667 = vunpack.c.l.b16 %v635
      %v668 = vunpack.c.l.b16 %v636
      %v669 = vunpack.c.l.b16 %v637
      %v670 = vunpack.c.l.b16 %v638
      %v671 = vunpack.c.l.b16 %v639
      %v672 = vunpack.c.l.b16 %v640
      %v673 = vunpack.c.l.b16 %v641
      %v674 = vunpack.c.l.b16 %v642
      %v675 = vpack.c.b16 %v668, %v667
      %v676 = vpack.c.b16 %v670, %v669
      %v677 = vpack.c.b16 %v672, %v671
      %v678 = vpack.c.b16 %v674, %v673
      %vm683 = vcmask 523264
      %v685 = vsel %vm683, %v627, 0
      %v688 = vsel %vm683, %v628, 0
      %v691 = vsel %vm683, %v629, 0
      %v694 = vsel %vm683, %v630, 0
      %v697 = vsel %vm683, %v631, 0
      %v700 = vsel %vm683, %v632, 0
      %v703 = vsel %vm683, %v633, 0
      %v706 = vsel %vm683, %v634, 0
      %708 = vmatprep.subr.bf16.mxu0 0
      %709 = vmatpush1.bf16.msra.mxu0 %v675
      %710 = vmatprep.subr.bf16.mxu0 0
      %711 = vmatpush1.bf16.msra.mxu0 %v676
      %712 = vmatprep.subr.bf16.mxu0 0
      %713 = vmatpush1.bf16.msra.mxu0 %v677
      %714 = vmatprep.subr.bf16.mxu0 0
      %715 = vmatpush1.bf16.msra.mxu0 %v678
      %716 = vmatprep.subr.bf16.mxu0 0
      %717 = vmatpush1.bf16.msra.mxu0 0
      %718 = vmatprep.subr.bf16.mxu0 0
      %719 = vmatpush1.bf16.msra.mxu0 0
      %720 = vmatprep.subr.bf16.mxu0 0
      %721 = vmatpush1.bf16.msra.mxu0 0
      %722 = vmatprep.subr.bf16.mxu0 0
      %723 = vmatpush1.bf16.msra.mxu0 0
      %724 = vmatprep.subr.bf16.mxu0 0
      %725 = vmatpush1.bf16.msra.mxu0 0
      %726 = vmatprep.subr.bf16.mxu0 0
      %727 = vmatpush1.bf16.msra.mxu0 0
      %728 = vmatprep.subr.bf16.mxu0 0
      %729 = vmatpush1.bf16.msra.mxu0 0
      %730 = vmatprep.subr.bf16.mxu0 0
      %731 = vmatpush1.bf16.msra.mxu0 0
      %732 = vmatprep.subr.bf16.mxu0 0
      %733 = vmatpush1.bf16.msra.mxu0 0
      %734 = vmatprep.subr.bf16.mxu0 0
      %735 = vmatpush1.bf16.msra.mxu0 0
      %736 = vmatprep.subr.bf16.mxu0 0
      %737 = vmatpush1.bf16.msra.mxu0 0
      %738 = vmatprep.subr.bf16.mxu0 0
      %739 = vmatpush1.bf16.msra.mxu0 0
      %740 = vmatprep.mubr.bf16.mxu0 0
      %741 = vmatmul.mubr.bf16.gmra.mrb[0].mxu0 %v685
      %v742 = vpop.f32.mrb[0].mxu0
      %v743 = vadd.f32 %v643, %v742
      %v744 = vpop.f32.mrb[0].mxu0
      %v745 = vpop.f32.mrb[0].mxu0
      %v746 = vadd.f32 %v644, %v745
      %v747 = vpop.f32.mrb[0].mxu0
      %748 = vmatprep.mubr.bf16.mxu0 0
      %749 = vmatmul.mubr.bf16.gmra.mrb[0].mxu0 %v688
      %v750 = vpop.f32.mrb[0].mxu0
      %v751 = vadd.f32 %v645, %v750
      %v752 = vpop.f32.mrb[0].mxu0
      %v753 = vpop.f32.mrb[0].mxu0
      %v754 = vadd.f32 %v646, %v753
      %v755 = vpop.f32.mrb[0].mxu0
      %756 = vmatprep.mubr.bf16.mxu0 0
      %757 = vmatmul.mubr.bf16.gmra.mrb[0].mxu0 %v691
      %v758 = vpop.f32.mrb[0].mxu0
      %v759 = vadd.f32 %v647, %v758
      %v760 = vpop.f32.mrb[0].mxu0
      %v761 = vpop.f32.mrb[0].mxu0
      %v762 = vadd.f32 %v648, %v761
      %v763 = vpop.f32.mrb[0].mxu0
      %764 = vmatprep.mubr.bf16.mxu0 0
      %765 = vmatmul.mubr.bf16.gmra.mrb[0].mxu0 %v694
      %v766 = vpop.f32.mrb[0].mxu0
      %v767 = vadd.f32 %v649, %v766
      %v768 = vpop.f32.mrb[0].mxu0
      %v769 = vpop.f32.mrb[0].mxu0
      %v770 = vadd.f32 %v650, %v769
      %v771 = vpop.f32.mrb[0].mxu0
      %772 = vmatprep.mubr.bf16.mxu0 0
      %773 = vmatmul.mubr.bf16.gmra.mrb[0].mxu0 %v697
      %v774 = vpop.f32.mrb[0].mxu0
      %v775 = vadd.f32 %v651, %v774
      %v776 = vpop.f32.mrb[0].mxu0
      %v777 = vpop.f32.mrb[0].mxu0
      %v778 = vadd.f32 %v652, %v777
      %v779 = vpop.f32.mrb[0].mxu0
      %780 = vmatprep.mubr.bf16.mxu0 0
      %781 = vmatmul.mubr.bf16.gmra.mrb[0].mxu0 %v700
      %v782 = vpop.f32.mrb[0].mxu0
      %v783 = vadd.f32 %v653, %v782
      %v784 = vpop.f32.mrb[0].mxu0
      %v785 = vpop.f32.mrb[0].mxu0
      %v786 = vadd.f32 %v654, %v785
      %v787 = vpop.f32.mrb[0].mxu0
      %788 = vmatprep.mubr.bf16.mxu0 0
      %789 = vmatmul.mubr.bf16.gmra.mrb[0].mxu0 %v703
      %v790 = vpop.f32.mrb[0].mxu0
      %v791 = vadd.f32 %v655, %v790
      %v792 = vpop.f32.mrb[0].mxu0
      %v793 = vpop.f32.mrb[0].mxu0
      %v794 = vadd.f32 %v656, %v793
      %v795 = vpop.f32.mrb[0].mxu0
      %796 = vmatprep.mubr.bf16.mxu0 0
      %797 = vmatmul.mubr.bf16.gmra.mrb[0].mxu0 %v706
      %v798 = vpop.f32.mrb[0].mxu0
      %v799 = vadd.f32 %v657, %v798
      %v800 = vpop.f32.mrb[0].mxu0
      %v801 = vpop.f32.mrb[0].mxu0
      %v802 = vadd.f32 %v658, %v801
      %v803 = vpop.f32.mrb[0].mxu0
      %804 = vdwg.mxu0
      %805 = vadd.xlane.f32.xlu0 %v743
      %v806 = vpop.xlane.xlu0 %805
      %807 = vadd.xlane.f32.xlu0 %v746
      %v808 = vpop.xlane.xlu0 %807
      %809 = vadd.xlane.f32.xlu0 %v751
      %v810 = vpop.xlane.xlu0 %809
      %811 = vadd.xlane.f32.xlu0 %v754
      %v812 = vpop.xlane.xlu0 %811
      %813 = vadd.xlane.f32.xlu0 %v759
      %v814 = vpop.xlane.xlu0 %813
      %815 = vadd.xlane.f32.xlu0 %v762
      %v816 = vpop.xlane.xlu0 %815
      %817 = vadd.xlane.f32.xlu0 %v767
      %v818 = vpop.xlane.xlu0 %817
      %819 = vadd.xlane.f32.xlu0 %v770
      %v820 = vpop.xlane.xlu0 %819
      %821 = vadd.xlane.f32.xlu0 %v775
      %v822 = vpop.xlane.xlu0 %821
      %823 = vadd.xlane.f32.xlu0 %v778
      %v824 = vpop.xlane.xlu0 %823
      %825 = vadd.xlane.f32.xlu0 %v783
      %v826 = vpop.xlane.xlu0 %825
      %827 = vadd.xlane.f32.xlu0 %v786
      %v828 = vpop.xlane.xlu0 %827
      %829 = vadd.xlane.f32.xlu0 %v791
      %v830 = vpop.xlane.xlu0 %829
      %831 = vadd.xlane.f32.xlu0 %v794
      %v832 = vpop.xlane.xlu0 %831
      %833 = vadd.xlane.f32.xlu0 %v799
      %v834 = vpop.xlane.xlu0 %833
      %835 = vadd.xlane.f32.xlu0 %v802
      %v836 = vpop.xlane.xlu0 %835
      %v837 = vrcp.pop 128.0
      %v838 = vmul.f32 %v806, %v837
      %v839 = vmul.f32 %v808, %v837
      %v840 = vmul.f32 %v810, %v837
      %v841 = vmul.f32 %v812, %v837
      %v842 = vmul.f32 %v814, %v837
      %v843 = vmul.f32 %v816, %v837
      %v844 = vmul.f32 %v818, %v837
      %v845 = vmul.f32 %v820, %v837
      %v846 = vmul.f32 %v822, %v837
      %v847 = vmul.f32 %v824, %v837
      %v848 = vmul.f32 %v826, %v837
      %v849 = vmul.f32 %v828, %v837
      %v850 = vmul.f32 %v830, %v837
      %v851 = vmul.f32 %v832, %v837
      %v852 = vmul.f32 %v834, %v837
      %v853 = vmul.f32 %v836, %v837
      %v854 = vmul.f32 %v743, %v743
      %v855 = vmul.f32 %v746, %v746
      %v856 = vmul.f32 %v751, %v751
      %v857 = vmul.f32 %v754, %v754
      %v858 = vmul.f32 %v759, %v759
      %v859 = vmul.f32 %v762, %v762
      %v860 = vmul.f32 %v767, %v767
      %v861 = vmul.f32 %v770, %v770
      %v862 = vmul.f32 %v775, %v775
      %v863 = vmul.f32 %v778, %v778
      %v864 = vmul.f32 %v783, %v783
      %v865 = vmul.f32 %v786, %v786
      %v866 = vmul.f32 %v791, %v791
      %v867 = vmul.f32 %v794, %v794
      %v868 = vmul.f32 %v799, %v799
      %v869 = vmul.f32 %v802, %v802
      %870 = vadd.xlane.f32.xlu0 %v854
      %v871 = vpop.xlane.xlu0 %870
      %872 = vadd.xlane.f32.xlu0 %v855
      %v873 = vpop.xlane.xlu0 %872
      %874 = vadd.xlane.f32.xlu0 %v856
      %v875 = vpop.xlane.xlu0 %874
      %876 = vadd.xlane.f32.xlu0 %v857
      %v877 = vpop.xlane.xlu0 %876
      %878 = vadd.xlane.f32.xlu0 %v858
      %v879 = vpop.xlane.xlu0 %878
      %880 = vadd.xlane.f32.xlu0 %v859
      %v881 = vpop.xlane.xlu0 %880
      %882 = vadd.xlane.f32.xlu0 %v860
      %v883 = vpop.xlane.xlu0 %882
      %884 = vadd.xlane.f32.xlu0 %v861
      %v885 = vpop.xlane.xlu0 %884
      %886 = vadd.xlane.f32.xlu0 %v862
      %v887 = vpop.xlane.xlu0 %886
      %888 = vadd.xlane.f32.xlu0 %v863
      %v889 = vpop.xlane.xlu0 %888
      %890 = vadd.xlane.f32.xlu0 %v864
      %v891 = vpop.xlane.xlu0 %890
      %892 = vadd.xlane.f32.xlu0 %v865
      %v893 = vpop.xlane.xlu0 %892
      %894 = vadd.xlane.f32.xlu0 %v866
      %v895 = vpop.xlane.xlu0 %894
      %896 = vadd.xlane.f32.xlu0 %v867
      %v897 = vpop.xlane.xlu0 %896
      %898 = vadd.xlane.f32.xlu0 %v868
      %v899 = vpop.xlane.xlu0 %898
      %900 = vadd.xlane.f32.xlu0 %v869
      %v901 = vpop.xlane.xlu0 %900
      %v902 = vmul.f32 %v871, %v837
      %v903 = vmul.f32 %v873, %v837
      %v904 = vmul.f32 %v875, %v837
      %v905 = vmul.f32 %v877, %v837
      %v906 = vmul.f32 %v879, %v837
      %v907 = vmul.f32 %v881, %v837
      %v908 = vmul.f32 %v883, %v837
      %v909 = vmul.f32 %v885, %v837
      %v910 = vmul.f32 %v887, %v837
      %v911 = vmul.f32 %v889, %v837
      %v912 = vmul.f32 %v891, %v837
      %v913 = vmul.f32 %v893, %v837
      %v914 = vmul.f32 %v895, %v837
      %v915 = vmul.f32 %v897, %v837
      %v916 = vmul.f32 %v899, %v837
      %v917 = vmul.f32 %v901, %v837
      %v918 = vmul.f32 %v838, %v838
      %v919 = vmul.f32 %v839, %v839
      %v920 = vmul.f32 %v840, %v840
      %v921 = vmul.f32 %v841, %v841
      %v922 = vmul.f32 %v842, %v842
      %v923 = vmul.f32 %v843, %v843
      %v924 = vmul.f32 %v844, %v844
      %v925 = vmul.f32 %v845, %v845
      %v926 = vmul.f32 %v846, %v846
      %v927 = vmul.f32 %v847, %v847
      %v928 = vmul.f32 %v848, %v848
      %v929 = vmul.f32 %v849, %v849
      %v930 = vmul.f32 %v850, %v850
      %v931 = vmul.f32 %v851, %v851
      %v932 = vmul.f32 %v852, %v852
      %v933 = vmul.f32 %v853, %v853
      %v934 = vsub.f32 %v902, %v918
      %v935 = vsub.f32 %v903, %v919
      %v936 = vsub.f32 %v904, %v920
      %v937 = vsub.f32 %v905, %v921
      %v938 = vsub.f32 %v906, %v922
      %v939 = vsub.f32 %v907, %v923
      %v940 = vsub.f32 %v908, %v924
      %v941 = vsub.f32 %v909, %v925
      %v942 = vsub.f32 %v910, %v926
      %v943 = vsub.f32 %v911, %v927
      %v944 = vsub.f32 %v912, %v928
      %v945 = vsub.f32 %v913, %v929
      %v946 = vsub.f32 %v914, %v930
      %v947 = vsub.f32 %v915, %v931
      %v948 = vsub.f32 %v916, %v932
      %v949 = vsub.f32 %v917, %v933
      %v950 = vmax.f32 %v934, 0.0
      %v951 = vmax.f32 %v935, 0.0
      %v952 = vmax.f32 %v936, 0.0
      %v953 = vmax.f32 %v937, 0.0
      %v954 = vmax.f32 %v938, 0.0
      %v955 = vmax.f32 %v939, 0.0
      %v956 = vmax.f32 %v940, 0.0
      %v957 = vmax.f32 %v941, 0.0
      %v958 = vmax.f32 %v942, 0.0
      %v959 = vmax.f32 %v943, 0.0
      %v960 = vmax.f32 %v944, 0.0
      %v961 = vmax.f32 %v945, 0.0
      %v962 = vmax.f32 %v946, 0.0
      %v963 = vmax.f32 %v947, 0.0
      %v964 = vmax.f32 %v948, 0.0
      %v965 = vmax.f32 %v949, 0.0
      %v966 = vsub.f32 %v743, %v838
      %v967 = vsub.f32 %v746, %v839
      %v968 = vsub.f32 %v751, %v840
      %v969 = vsub.f32 %v754, %v841
      %v970 = vsub.f32 %v759, %v842
      %v971 = vsub.f32 %v762, %v843
      %v972 = vsub.f32 %v767, %v844
      %v973 = vsub.f32 %v770, %v845
      %v974 = vsub.f32 %v775, %v846
      %v975 = vsub.f32 %v778, %v847
      %v976 = vsub.f32 %v783, %v848
      %v977 = vsub.f32 %v786, %v849
      %v978 = vsub.f32 %v791, %v850
      %v979 = vsub.f32 %v794, %v851
      %v980 = vsub.f32 %v799, %v852
      %v981 = vsub.f32 %v802, %v853
      %v982 = vadd.f32 %v950, 1e-12
      %v983 = vadd.f32 %v951, 1e-12
      %v984 = vadd.f32 %v952, 1e-12
      %v985 = vadd.f32 %v953, 1e-12
      %v986 = vadd.f32 %v954, 1e-12
      %v987 = vadd.f32 %v955, 1e-12
      %v988 = vadd.f32 %v956, 1e-12
      %v989 = vadd.f32 %v957, 1e-12
      %v990 = vadd.f32 %v958, 1e-12
      %v991 = vadd.f32 %v959, 1e-12
      %v992 = vadd.f32 %v960, 1e-12
      %v993 = vadd.f32 %v961, 1e-12
      %v994 = vadd.f32 %v962, 1e-12
      %v995 = vadd.f32 %v963, 1e-12
      %v996 = vadd.f32 %v964, 1e-12
      %v997 = vadd.f32 %v965, 1e-12
      %v998 = vrsqrt.pop %v982
      %v999 = vrsqrt.pop %v983
      %v1000 = vrsqrt.pop %v984
      %v1001 = vrsqrt.pop %v985
      %v1002 = vrsqrt.pop %v986
      %v1003 = vrsqrt.pop %v987
      %v1004 = vrsqrt.pop %v988
      %v1005 = vrsqrt.pop %v989
      %v1006 = vrsqrt.pop %v990
      %v1007 = vrsqrt.pop %v991
      %v1008 = vrsqrt.pop %v992
      %v1009 = vrsqrt.pop %v993
      %v1010 = vrsqrt.pop %v994
      %v1011 = vrsqrt.pop %v995
      %v1012 = vrsqrt.pop %v996
      %v1013 = vrsqrt.pop %v997
      %v1014 = vmul.f32 %v966, %v998
      %v1015 = vmul.f32 %v967, %v999
      %v1016 = vmul.f32 %v968, %v1000
      %v1017 = vmul.f32 %v969, %v1001
      %v1018 = vmul.f32 %v970, %v1002
      %v1019 = vmul.f32 %v971, %v1003
      %v1020 = vmul.f32 %v972, %v1004
      %v1021 = vmul.f32 %v973, %v1005
      %v1022 = vmul.f32 %v974, %v1006
      %v1023 = vmul.f32 %v975, %v1007
      %v1024 = vmul.f32 %v976, %v1008
      %v1025 = vmul.f32 %v977, %v1009
      %v1026 = vmul.f32 %v978, %v1010
      %v1027 = vmul.f32 %v979, %v1011
      %v1028 = vmul.f32 %v980, %v1012
      %v1029 = vmul.f32 %v981, %v1013
      %v1030 = vlaneseq
      %v1031 = vshrl.u32 %v1030, 7
      %v1032 = vsub.s32 0, %v1031
      %v1033 = vrot.slane %v528, %v1032
      %v1034 = vmul.f32 %v1014, %v1033
      %v1035 = vmul.f32 %v1015, %v1033
      %v1036 = vmul.f32 %v1016, %v1033
      %v1037 = vmul.f32 %v1017, %v1033
      %v1038 = vmul.f32 %v1018, %v1033
      %v1039 = vmul.f32 %v1019, %v1033
      %v1040 = vmul.f32 %v1020, %v1033
      %v1041 = vmul.f32 %v1021, %v1033
      %v1042 = vmul.f32 %v1022, %v1033
      %v1043 = vmul.f32 %v1023, %v1033
      %v1044 = vmul.f32 %v1024, %v1033
      %v1045 = vmul.f32 %v1025, %v1033
      %v1046 = vmul.f32 %v1026, %v1033
      %v1047 = vmul.f32 %v1027, %v1033
      %v1048 = vmul.f32 %v1028, %v1033
      %v1049 = vmul.f32 %v1029, %v1033
      %v1050 = vlaneseq
      %v1051 = vshrl.u32 %v1050, 7
      %v1052 = vsub.s32 1, %v1051
      %v1053 = vrot.slane %v528, %v1052
      %v1054 = vadd.f32 %v1034, %v1053
      %v1055 = vadd.f32 %v1035, %v1053
      %v1056 = vadd.f32 %v1036, %v1053
      %v1057 = vadd.f32 %v1037, %v1053
      %v1058 = vadd.f32 %v1038, %v1053
      %v1059 = vadd.f32 %v1039, %v1053
      %v1060 = vadd.f32 %v1040, %v1053
      %v1061 = vadd.f32 %v1041, %v1053
      %v1062 = vadd.f32 %v1042, %v1053
      %v1063 = vadd.f32 %v1043, %v1053
      %v1064 = vadd.f32 %v1044, %v1053
      %v1065 = vadd.f32 %v1045, %v1053
      %v1066 = vadd.f32 %v1046, %v1053
      %v1067 = vadd.f32 %v1047, %v1053
      %v1068 = vadd.f32 %v1048, %v1053
      %v1069 = vadd.f32 %v1049, %v1053
      %v1070 = vpack.c.bf16 %v1055, %v1054
      %v1071 = vpack.c.bf16 %v1057, %v1056
      %v1072 = vpack.c.bf16 %v1059, %v1058
      %v1073 = vpack.c.bf16 %v1061, %v1060
      %v1074 = vpack.c.bf16 %v1063, %v1062
      %v1075 = vpack.c.bf16 %v1065, %v1064
      %v1076 = vpack.c.bf16 %v1067, %v1066
      %v1077 = vpack.c.bf16 %v1069, %v1068
      %v1078 = vld [vmem:[%s5] sm:$0xff]
      %v1079 = vld [vmem:[%s5 + $0x8] sm:$0xf]
      %v1080 = vld [vmem:[%s5 + $0xc] sm:$0xff]
      %v1081 = vld [vmem:[%s5 + $0x14] sm:$0xf]
      %v1082 = vld [vmem:[%s5 + $0x18] sm:$0xff]
      %v1083 = vld [vmem:[%s5 + $0x20] sm:$0xf]
      %v1084 = vld [vmem:[%s5 + $0x24] sm:$0xff]
      %v1085 = vld [vmem:[%s5 + $0x2c] sm:$0xf]
      %v1086 = vld [vmem:[%s5 + $0x30] sm:$0xff]
      %v1087 = vld [vmem:[%s5 + $0x38] sm:$0xf]
      %v1088 = vld [vmem:[%s5 + $0x3c] sm:$0xff]
      %v1089 = vld [vmem:[%s5 + $0x44] sm:$0xf]
      %v1090 = vld [vmem:[%s5 + $0x48] sm:$0xff]
      %v1091 = vld [vmem:[%s5 + $0x50] sm:$0xf]
      %v1092 = vld [vmem:[%s5 + $0x54] sm:$0xff]
      %v1093 = vld [vmem:[%s5 + $0x5c] sm:$0xf]
      %v1094 = vld [vmem:[%s5 + $0x60] sm:$0xff]
      %v1095 = vld [vmem:[%s5 + $0x68] sm:$0xf]
      %v1096 = vld [vmem:[%s5 + $0x6c] sm:$0xff]
      %v1097 = vld [vmem:[%s5 + $0x74] sm:$0xf]
      %v1098 = vld [vmem:[%s5 + $0x78] sm:$0xff]
      %v1099 = vld [vmem:[%s5 + $0x80] sm:$0xf]
      %v1100 = vld [vmem:[%s5 + $0x84] sm:$0xff]
      %v1101 = vld [vmem:[%s5 + $0x8c] sm:$0xf]
      %v1102 = vld [vmem:[%s5 + $0x90] sm:$0xff]
      %v1103 = vld [vmem:[%s5 + $0x98] sm:$0xf]
      %v1104 = vld [vmem:[%s5 + $0x9c] sm:$0xff]
      %v1105 = vld [vmem:[%s5 + $0xa4] sm:$0xf]
      %v1106 = vld [vmem:[%s5 + $0xa8] sm:$0xff]
      %v1107 = vld [vmem:[%s5 + $0xb0] sm:$0xf]
      %v1108 = vld [vmem:[%s5 + $0xb4] sm:$0xff]
      %v1109 = vld [vmem:[%s5 + $0xbc] sm:$0xf]
      %v1110 = vld [vmem:[%s6] sm:$0x7]
      %v1112 = vlaneseq
      %v1113 = vshrl.u32 %v1112, 7
      %v1114 = vsub.s32 0, %v1113
      %v1115 = vrot.slane %v1110, %v1114
      %v1116 = vlaneseq
      %v1117 = vshrl.u32 %v1116, 7
      %v1118 = vsub.s32 1, %v1117
      %v1119 = vrot.slane %v1110, %v1118
      %v1120 = vlaneseq
      %v1121 = vshrl.u32 %v1120, 7
      %v1122 = vsub.s32 2, %v1121
      %v1123 = vrot.slane %v1110, %v1122
      %v1159 = vunpack.c.l.b16 %v1078
      %v1160 = vunpack.c.h.b16 %v1078
      %v1161 = vunpack.c.l.b16 %v1079
      %v1162 = vunpack.c.l.b16 %v1080
      %v1163 = vunpack.c.h.b16 %v1080
      %v1164 = vunpack.c.l.b16 %v1081
      %v1165 = vunpack.c.l.b16 %v1082
      %v1166 = vunpack.c.h.b16 %v1082
      %v1167 = vunpack.c.l.b16 %v1083
      %v1168 = vunpack.c.l.b16 %v1084
      %v1169 = vunpack.c.h.b16 %v1084
      %v1170 = vunpack.c.l.b16 %v1085
      %v1171 = vunpack.c.l.b16 %v1086
      %v1172 = vunpack.c.h.b16 %v1086
      %v1173 = vunpack.c.l.b16 %v1087
      %v1174 = vunpack.c.l.b16 %v1088
      %v1175 = vunpack.c.h.b16 %v1088
      %v1176 = vunpack.c.l.b16 %v1089
      %v1177 = vunpack.c.l.b16 %v1090
      %v1178 = vunpack.c.h.b16 %v1090
      %v1179 = vunpack.c.l.b16 %v1091
      %v1180 = vunpack.c.l.b16 %v1092
      %v1181 = vunpack.c.h.b16 %v1092
      %v1182 = vunpack.c.l.b16 %v1093
      %v1183 = vunpack.c.l.b16 %v1094
      %v1184 = vunpack.c.h.b16 %v1094
      %v1185 = vunpack.c.l.b16 %v1095
      %v1186 = vunpack.c.l.b16 %v1096
      %v1187 = vunpack.c.h.b16 %v1096
      %v1188 = vunpack.c.l.b16 %v1097
      %v1189 = vunpack.c.l.b16 %v1098
      %v1190 = vunpack.c.h.b16 %v1098
      %v1191 = vunpack.c.l.b16 %v1099
      %v1192 = vunpack.c.l.b16 %v1100
      %v1193 = vunpack.c.h.b16 %v1100
      %v1194 = vunpack.c.l.b16 %v1101
      %v1195 = vunpack.c.l.b16 %v1102
      %v1196 = vunpack.c.h.b16 %v1102
      %v1197 = vunpack.c.l.b16 %v1103
      %v1198 = vunpack.c.l.b16 %v1104
      %v1199 = vunpack.c.h.b16 %v1104
      %v1200 = vunpack.c.l.b16 %v1105
      %v1201 = vunpack.c.l.b16 %v1106
      %v1202 = vunpack.c.h.b16 %v1106
      %v1203 = vunpack.c.l.b16 %v1107
      %v1204 = vunpack.c.l.b16 %v1108
      %v1205 = vunpack.c.h.b16 %v1108
      %v1206 = vunpack.c.l.b16 %v1109
      %v1207 = vpack.c.b16 %v1162, %v1159
      %v1208 = vpack.c.b16 %v1163, %v1160
      %v1209 = vpack.c.b16 %v1164, %v1161
      %v1210 = vpack.c.b16 %v1168, %v1165
      %v1211 = vpack.c.b16 %v1169, %v1166
      %v1212 = vpack.c.b16 %v1170, %v1167
      %v1213 = vpack.c.b16 %v1174, %v1171
      %v1214 = vpack.c.b16 %v1175, %v1172
      %v1215 = vpack.c.b16 %v1176, %v1173
      %v1216 = vpack.c.b16 %v1180, %v1177
      %v1217 = vpack.c.b16 %v1181, %v1178
      %v1218 = vpack.c.b16 %v1182, %v1179
      %v1219 = vpack.c.b16 %v1186, %v1183
      %v1220 = vpack.c.b16 %v1187, %v1184
      %v1221 = vpack.c.b16 %v1188, %v1185
      %v1222 = vpack.c.b16 %v1192, %v1189
      %v1223 = vpack.c.b16 %v1193, %v1190
      %v1224 = vpack.c.b16 %v1194, %v1191
      %v1225 = vpack.c.b16 %v1198, %v1195
      %v1226 = vpack.c.b16 %v1199, %v1196
      %v1227 = vpack.c.b16 %v1200, %v1197
      %v1228 = vpack.c.b16 %v1204, %v1201
      %v1229 = vpack.c.b16 %v1205, %v1202
      %v1230 = vpack.c.b16 %v1206, %v1203
      %1255 = vmatprep.subr.bf16.mxu0 %v1208
      %1256 = vmatpush1.bf16.msra.mxu0 %v1207
      %1257 = vmatprep.subr.bf16.mxu0 %v1211
      %1258 = vmatpush1.bf16.msra.mxu0 %v1210
      %1259 = vmatprep.subr.bf16.mxu0 %v1214
      %1260 = vmatpush1.bf16.msra.mxu0 %v1213
      %1261 = vmatprep.subr.bf16.mxu0 %v1217
      %1262 = vmatpush1.bf16.msra.mxu0 %v1216
      %1263 = vmatprep.subr.bf16.mxu0 %v1220
      %1264 = vmatpush1.bf16.msra.mxu0 %v1219
      %1265 = vmatprep.subr.bf16.mxu0 %v1223
      %1266 = vmatpush1.bf16.msra.mxu0 %v1222
      %1267 = vmatprep.subr.bf16.mxu0 %v1226
      %1268 = vmatpush1.bf16.msra.mxu0 %v1225
      %1269 = vmatprep.subr.bf16.mxu0 %v1229
      %1270 = vmatpush1.bf16.msra.mxu0 %v1228
      %1271 = vmatprep.subr.bf16.mxu0 0
      %1272 = vmatpush1.bf16.msra.mxu0 0
      %1273 = vmatprep.subr.bf16.mxu0 0
      %1274 = vmatpush1.bf16.msra.mxu0 0
      %1275 = vmatprep.subr.bf16.mxu0 0
      %1276 = vmatpush1.bf16.msra.mxu0 0
      %1277 = vmatprep.subr.bf16.mxu0 0
      %1278 = vmatpush1.bf16.msra.mxu0 0
      %1279 = vmatprep.subr.bf16.mxu0 0
      %1280 = vmatpush1.bf16.msra.mxu0 0
      %1281 = vmatprep.subr.bf16.mxu0 0
      %1282 = vmatpush1.bf16.msra.mxu0 0
      %1283 = vmatprep.subr.bf16.mxu0 0
      %1284 = vmatpush1.bf16.msra.mxu0 0
      %1285 = vmatprep.subr.bf16.mxu0 0
      %1286 = vmatpush1.bf16.msra.mxu0 0
      %1287 = vmatprep.mubr.bf16.mxu0 0
      %1288 = vmatmul.mubr.bf16.gmra.mrb[0].mxu0 %v1070
      %v1289 = vpop.f32.mrb[0].mxu0
      %v1290 = vadd.f32 %v1115, %v1289
      %v1291 = vpop.f32.mrb[0].mxu0
      %v1292 = vadd.f32 %v1119, %v1291
      %v1293 = vpop.f32.mrb[0].mxu0
      %v1294 = vadd.f32 %v1115, %v1293
      %v1295 = vpop.f32.mrb[0].mxu0
      %v1296 = vadd.f32 %v1119, %v1295
      %1297 = vmatprep.mubr.bf16.mxu0 0
      %1298 = vmatmul.mubr.bf16.gmra.mrb[0].mxu0 %v1071
      %v1299 = vpop.f32.mrb[0].mxu0
      %v1300 = vadd.f32 %v1115, %v1299
      %v1301 = vpop.f32.mrb[0].mxu0
      %v1302 = vadd.f32 %v1119, %v1301
      %v1303 = vpop.f32.mrb[0].mxu0
      %v1304 = vadd.f32 %v1115, %v1303
      %v1305 = vpop.f32.mrb[0].mxu0
      %v1306 = vadd.f32 %v1119, %v1305
      %1307 = vmatprep.mubr.bf16.mxu0 0
      %1308 = vmatmul.mubr.bf16.gmra.mrb[0].mxu0 %v1072
      %v1309 = vpop.f32.mrb[0].mxu0
      %v1310 = vadd.f32 %v1115, %v1309
      %v1311 = vpop.f32.mrb[0].mxu0
      %v1312 = vadd.f32 %v1119, %v1311
      %v1313 = vpop.f32.mrb[0].mxu0
      %v1314 = vadd.f32 %v1115, %v1313
      %v1315 = vpop.f32.mrb[0].mxu0
      %v1316 = vadd.f32 %v1119, %v1315
      %1317 = vmatprep.mubr.bf16.mxu0 0
      %1318 = vmatmul.mubr.bf16.gmra.mrb[0].mxu0 %v1073
      %v1319 = vpop.f32.mrb[0].mxu0
      %v1320 = vadd.f32 %v1115, %v1319
      %v1321 = vpop.f32.mrb[0].mxu0
      %v1322 = vadd.f32 %v1119, %v1321
      %v1323 = vpop.f32.mrb[0].mxu0
      %v1324 = vadd.f32 %v1115, %v1323
      %v1325 = vpop.f32.mrb[0].mxu0
      %v1326 = vadd.f32 %v1119, %v1325
      %1327 = vmatprep.mubr.bf16.mxu0 0
      %1328 = vmatmul.mubr.bf16.gmra.mrb[0].mxu0 %v1074
      %v1329 = vpop.f32.mrb[0].mxu0
      %v1330 = vadd.f32 %v1115, %v1329
      %v1331 = vpop.f32.mrb[0].mxu0
      %v1332 = vadd.f32 %v1119, %v1331
      %v1333 = vpop.f32.mrb[0].mxu0
      %v1334 = vadd.f32 %v1115, %v1333
      %v1335 = vpop.f32.mrb[0].mxu0
      %v1336 = vadd.f32 %v1119, %v1335
      %1337 = vmatprep.mubr.bf16.mxu0 0
      %1338 = vmatmul.mubr.bf16.gmra.mrb[0].mxu0 %v1075
      %v1339 = vpop.f32.mrb[0].mxu0
      %v1340 = vadd.f32 %v1115, %v1339
      %v1341 = vpop.f32.mrb[0].mxu0
      %v1342 = vadd.f32 %v1119, %v1341
      %v1343 = vpop.f32.mrb[0].mxu0
      %v1344 = vadd.f32 %v1115, %v1343
      %v1345 = vpop.f32.mrb[0].mxu0
      %v1346 = vadd.f32 %v1119, %v1345
      %1347 = vmatprep.mubr.bf16.mxu0 0
      %1348 = vmatmul.mubr.bf16.gmra.mrb[0].mxu0 %v1076
      %v1349 = vpop.f32.mrb[0].mxu0
      %v1350 = vadd.f32 %v1115, %v1349
      %v1351 = vpop.f32.mrb[0].mxu0
      %v1352 = vadd.f32 %v1119, %v1351
      %v1353 = vpop.f32.mrb[0].mxu0
      %v1354 = vadd.f32 %v1115, %v1353
      %v1355 = vpop.f32.mrb[0].mxu0
      %v1356 = vadd.f32 %v1119, %v1355
      %1357 = vmatprep.mubr.bf16.mxu0 0
      %1358 = vmatmul.mubr.bf16.gmra.mrb[0].mxu0 %v1077
      %v1359 = vpop.f32.mrb[0].mxu0
      %v1360 = vadd.f32 %v1115, %v1359
      %v1361 = vpop.f32.mrb[0].mxu0
      %v1362 = vadd.f32 %v1119, %v1361
      %v1363 = vpop.f32.mrb[0].mxu0
      %v1364 = vadd.f32 %v1115, %v1363
      %v1365 = vpop.f32.mrb[0].mxu0
      %v1366 = vadd.f32 %v1119, %v1365
      %1367 = vdwg.mxu0
      %1368 = vmatprep.subr.bf16.mxu0 0
      %1369 = vmatpush1.bf16.msra.mxu0 %v1209
      %1370 = vmatprep.subr.bf16.mxu0 0
      %1371 = vmatpush1.bf16.msra.mxu0 %v1212
      %1372 = vmatprep.subr.bf16.mxu0 0
      %1373 = vmatpush1.bf16.msra.mxu0 %v1215
      %1374 = vmatprep.subr.bf16.mxu0 0
      %1375 = vmatpush1.bf16.msra.mxu0 %v1218
      %1376 = vmatprep.subr.bf16.mxu0 0
      %1377 = vmatpush1.bf16.msra.mxu0 %v1221
      %1378 = vmatprep.subr.bf16.mxu0 0
      %1379 = vmatpush1.bf16.msra.mxu0 %v1224
      %1380 = vmatprep.subr.bf16.mxu0 0
      %1381 = vmatpush1.bf16.msra.mxu0 %v1227
      %1382 = vmatprep.subr.bf16.mxu0 0
      %1383 = vmatpush1.bf16.msra.mxu0 %v1230
      %1384 = vmatprep.subr.bf16.mxu0 0
      %1385 = vmatpush1.bf16.msra.mxu0 0
      %1386 = vmatprep.subr.bf16.mxu0 0
      %1387 = vmatpush1.bf16.msra.mxu0 0
      %1388 = vmatprep.subr.bf16.mxu0 0
      %1389 = vmatpush1.bf16.msra.mxu0 0
      %1390 = vmatprep.subr.bf16.mxu0 0
      %1391 = vmatpush1.bf16.msra.mxu0 0
      %1392 = vmatprep.subr.bf16.mxu0 0
      %1393 = vmatpush1.bf16.msra.mxu0 0
      %1394 = vmatprep.subr.bf16.mxu0 0
      %1395 = vmatpush1.bf16.msra.mxu0 0
      %1396 = vmatprep.subr.bf16.mxu0 0
      %1397 = vmatpush1.bf16.msra.mxu0 0
      %1398 = vmatprep.subr.bf16.mxu0 0
      %1399 = vmatpush1.bf16.msra.mxu0 0
      %1400 = vmatprep.mubr.bf16.mxu0 0
      %1401 = vmatmul.mubr.bf16.gmra.mrb[0].mxu0 %v1070
      %v1402 = vpop.f32.mrb[0].mxu0
      %v1403 = vadd.f32 %v1123, %v1402
      %v1404 = vpop.f32.mrb[0].mxu0
      %v1405 = vpop.f32.mrb[0].mxu0
      %v1406 = vadd.f32 %v1123, %v1405
      %v1407 = vpop.f32.mrb[0].mxu0
      %1408 = vmatprep.mubr.bf16.mxu0 0
      %1409 = vmatmul.mubr.bf16.gmra.mrb[0].mxu0 %v1071
      %v1410 = vpop.f32.mrb[0].mxu0
      %v1411 = vadd.f32 %v1123, %v1410
      %v1412 = vpop.f32.mrb[0].mxu0
      %v1413 = vpop.f32.mrb[0].mxu0
      %v1414 = vadd.f32 %v1123, %v1413
      %v1415 = vpop.f32.mrb[0].mxu0
      %1416 = vmatprep.mubr.bf16.mxu0 0
      %1417 = vmatmul.mubr.bf16.gmra.mrb[0].mxu0 %v1072
      %v1418 = vpop.f32.mrb[0].mxu0
      %v1419 = vadd.f32 %v1123, %v1418
      %v1420 = vpop.f32.mrb[0].mxu0
      %v1421 = vpop.f32.mrb[0].mxu0
      %v1422 = vadd.f32 %v1123, %v1421
      %v1423 = vpop.f32.mrb[0].mxu0
      %1424 = vmatprep.mubr.bf16.mxu0 0
      %1425 = vmatmul.mubr.bf16.gmra.mrb[0].mxu0 %v1073
      %v1426 = vpop.f32.mrb[0].mxu0
      %v1427 = vadd.f32 %v1123, %v1426
      %v1428 = vpop.f32.mrb[0].mxu0
      %v1429 = vpop.f32.mrb[0].mxu0
      %v1430 = vadd.f32 %v1123, %v1429
      %v1431 = vpop.f32.mrb[0].mxu0
      %1432 = vmatprep.mubr.bf16.mxu0 0
      %1433 = vmatmul.mubr.bf16.gmra.mrb[0].mxu0 %v1074
      %v1434 = vpop.f32.mrb[0].mxu0
      %v1435 = vadd.f32 %v1123, %v1434
      %v1436 = vpop.f32.mrb[0].mxu0
      %v1437 = vpop.f32.mrb[0].mxu0
      %v1438 = vadd.f32 %v1123, %v1437
      %v1439 = vpop.f32.mrb[0].mxu0
      %1440 = vmatprep.mubr.bf16.mxu0 0
      %1441 = vmatmul.mubr.bf16.gmra.mrb[0].mxu0 %v1075
      %v1442 = vpop.f32.mrb[0].mxu0
      %v1443 = vadd.f32 %v1123, %v1442
      %v1444 = vpop.f32.mrb[0].mxu0
      %v1445 = vpop.f32.mrb[0].mxu0
      %v1446 = vadd.f32 %v1123, %v1445
      %v1447 = vpop.f32.mrb[0].mxu0
      %1448 = vmatprep.mubr.bf16.mxu0 0
      %1449 = vmatmul.mubr.bf16.gmra.mrb[0].mxu0 %v1076
      %v1450 = vpop.f32.mrb[0].mxu0
      %v1451 = vadd.f32 %v1123, %v1450
      %v1452 = vpop.f32.mrb[0].mxu0
      %v1453 = vpop.f32.mrb[0].mxu0
      %v1454 = vadd.f32 %v1123, %v1453
      %v1455 = vpop.f32.mrb[0].mxu0
      %1456 = vmatprep.mubr.bf16.mxu0 0
      %1457 = vmatmul.mubr.bf16.gmra.mrb[0].mxu0 %v1077
      %v1458 = vpop.f32.mrb[0].mxu0
      %v1459 = vadd.f32 %v1123, %v1458
      %v1460 = vpop.f32.mrb[0].mxu0
      %v1461 = vpop.f32.mrb[0].mxu0
      %v1462 = vadd.f32 %v1123, %v1461
      %v1463 = vpop.f32.mrb[0].mxu0
      %1464 = vdwg.mxu0
      %v1465 = vpack.c.bf16 %v1294, %v1290
      %v1466 = vpack.c.bf16 %v1296, %v1292
      %v1467 = vpack.c.bf16 %v1406, %v1403
      %v1468 = vpack.c.bf16 %v1304, %v1300
      %v1469 = vpack.c.bf16 %v1306, %v1302
      %v1470 = vpack.c.bf16 %v1414, %v1411
      %v1471 = vpack.c.bf16 %v1314, %v1310
      %v1472 = vpack.c.bf16 %v1316, %v1312
      %v1473 = vpack.c.bf16 %v1422, %v1419
      %v1474 = vpack.c.bf16 %v1324, %v1320
      %v1475 = vpack.c.bf16 %v1326, %v1322
      %v1476 = vpack.c.bf16 %v1430, %v1427
      %v1477 = vpack.c.bf16 %v1334, %v1330
      %v1478 = vpack.c.bf16 %v1336, %v1332
      %v1479 = vpack.c.bf16 %v1438, %v1435
      %v1480 = vpack.c.bf16 %v1344, %v1340
      %v1481 = vpack.c.bf16 %v1346, %v1342
      %v1482 = vpack.c.bf16 %v1446, %v1443
      %v1483 = vpack.c.bf16 %v1354, %v1350
      %v1484 = vpack.c.bf16 %v1356, %v1352
      %v1485 = vpack.c.bf16 %v1454, %v1451
      %v1486 = vpack.c.bf16 %v1364, %v1360
      %v1487 = vpack.c.bf16 %v1366, %v1362
      %v1488 = vpack.c.bf16 %v1462, %v1459
      %v1489 = vld [vmem:[%s4] sm:$0xff]
      %v1490 = vld [vmem:[%s4 + $0x8] sm:$0xff]
      %v1491 = vld [vmem:[%s4 + $0x10] sm:$0xff]
      %v1492 = vld [vmem:[%s4 + $0x18] sm:$0xff]
      %v1493 = vld [vmem:[%s4 + $0x20] sm:$0xff]
      %v1494 = vld [vmem:[%s4 + $0x28] sm:$0xff]
      %v1495 = vld [vmem:[%s4 + $0x30] sm:$0xff]
      %v1496 = vld [vmem:[%s4 + $0x38] sm:$0xff]
      %v1497 = vld [vmem:[%s4 + $0x40] sm:$0xff]
      %v1498 = vld [vmem:[%s4 + $0x48] sm:$0xff]
      %v1499 = vld [vmem:[%s4 + $0x50] sm:$0xff]
      %v1500 = vld [vmem:[%s4 + $0x58] sm:$0xff]
      %v1501 = vld [vmem:[%s4 + $0x60] sm:$0xff]
      %v1502 = vld [vmem:[%s4 + $0x68] sm:$0xff]
      %v1503 = vld [vmem:[%s4 + $0x70] sm:$0xff]
      %v1504 = vld [vmem:[%s4 + $0x78] sm:$0xff]
      %1505 = vmatprep.subr.bf16.mxu0 0
      %1506 = vmatpush1.bf16.xpose.msra.mxu0 %v1466
      %1507 = vmatprep.subr.bf16.mxu0 0
      %1508 = vmatpush1.bf16.xpose.msra.mxu0 %v1469
      %1509 = vmatprep.subr.bf16.mxu0 0
      %1510 = vmatpush1.bf16.xpose.msra.mxu0 %v1472
      %1511 = vmatprep.subr.bf16.mxu0 0
      %1512 = vmatpush1.bf16.xpose.msra.mxu0 %v1475
      %1513 = vmatprep.subr.bf16.mxu0 0
      %1514 = vmatpush1.bf16.xpose.msra.mxu0 %v1478
      %1515 = vmatprep.subr.bf16.mxu0 0
      %1516 = vmatpush1.bf16.xpose.msra.mxu0 %v1481
      %1517 = vmatprep.subr.bf16.mxu0 0
      %1518 = vmatpush1.bf16.xpose.msra.mxu0 %v1484
      %1519 = vmatprep.subr.bf16.mxu0 0
      %1520 = vmatpush1.bf16.xpose.msra.mxu0 %v1487
      %1521 = vmatprep.subr.bf16.mxu0 0
      %1522 = vmatpush1.bf16.xpose.msra.mxu0 0
      %1523 = vmatprep.subr.bf16.mxu0 0
      %1524 = vmatpush1.bf16.xpose.msra.mxu0 0
      %1525 = vmatprep.subr.bf16.mxu0 0
      %1526 = vmatpush1.bf16.xpose.msra.mxu0 0
      %1527 = vmatprep.subr.bf16.mxu0 0
      %1528 = vmatpush1.bf16.xpose.msra.mxu0 0
      %1529 = vmatprep.subr.bf16.mxu0 0
      %1530 = vmatpush1.bf16.xpose.msra.mxu0 0
      %1531 = vmatprep.subr.bf16.mxu0 0
      %1532 = vmatpush1.bf16.xpose.msra.mxu0 0
      %1533 = vmatprep.subr.bf16.mxu0 0
      %1534 = vmatpush1.bf16.xpose.msra.mxu0 0
      %1535 = vmatprep.subr.bf16.mxu0 0
      %1536 = vmatpush1.bf16.xpose.msra.mxu0 0
      %1537 = vmatprep.mubr.bf16.mxu0 0
      %1538 = vmatmul.mubr.bf16.gmra.mrb[0].mxu0 %v1465
      %v1539 = vpop.f32.mrb[0].mxu0
      %v1540 = vadd.f32 %v1489, %v1539
      %v1541 = vpop.f32.mrb[0].mxu0
      %v1542 = vpop.f32.mrb[0].mxu0
      %v1543 = vadd.f32 %v1490, %v1542
      %v1544 = vpop.f32.mrb[0].mxu0
      %1545 = vmatprep.mubr.bf16.mxu0 0
      %1546 = vmatmul.mubr.bf16.gmra.mrb[0].mxu0 %v1468
      %v1547 = vpop.f32.mrb[0].mxu0
      %v1548 = vadd.f32 %v1491, %v1547
      %v1549 = vpop.f32.mrb[0].mxu0
      %v1550 = vpop.f32.mrb[0].mxu0
      %v1551 = vadd.f32 %v1492, %v1550
      %v1552 = vpop.f32.mrb[0].mxu0
      %1553 = vmatprep.mubr.bf16.mxu0 0
      %1554 = vmatmul.mubr.bf16.gmra.mrb[0].mxu0 %v1471
      %v1555 = vpop.f32.mrb[0].mxu0
      %v1556 = vadd.f32 %v1493, %v1555
      %v1557 = vpop.f32.mrb[0].mxu0
      %v1558 = vpop.f32.mrb[0].mxu0
      %v1559 = vadd.f32 %v1494, %v1558
      %v1560 = vpop.f32.mrb[0].mxu0
      %1561 = vmatprep.mubr.bf16.mxu0 0
      %1562 = vmatmul.mubr.bf16.gmra.mrb[0].mxu0 %v1474
      %v1563 = vpop.f32.mrb[0].mxu0
      %v1564 = vadd.f32 %v1495, %v1563
      %v1565 = vpop.f32.mrb[0].mxu0
      %v1566 = vpop.f32.mrb[0].mxu0
      %v1567 = vadd.f32 %v1496, %v1566
      %v1568 = vpop.f32.mrb[0].mxu0
      %1569 = vmatprep.mubr.bf16.mxu0 0
      %1570 = vmatmul.mubr.bf16.gmra.mrb[0].mxu0 %v1477
      %v1571 = vpop.f32.mrb[0].mxu0
      %v1572 = vadd.f32 %v1497, %v1571
      %v1573 = vpop.f32.mrb[0].mxu0
      %v1574 = vpop.f32.mrb[0].mxu0
      %v1575 = vadd.f32 %v1498, %v1574
      %v1576 = vpop.f32.mrb[0].mxu0
      %1577 = vmatprep.mubr.bf16.mxu0 0
      %1578 = vmatmul.mubr.bf16.gmra.mrb[0].mxu0 %v1480
      %v1579 = vpop.f32.mrb[0].mxu0
      %v1580 = vadd.f32 %v1499, %v1579
      %v1581 = vpop.f32.mrb[0].mxu0
      %v1582 = vpop.f32.mrb[0].mxu0
      %v1583 = vadd.f32 %v1500, %v1582
      %v1584 = vpop.f32.mrb[0].mxu0
      %1585 = vmatprep.mubr.bf16.mxu0 0
      %1586 = vmatmul.mubr.bf16.gmra.mrb[0].mxu0 %v1483
      %v1587 = vpop.f32.mrb[0].mxu0
      %v1588 = vadd.f32 %v1501, %v1587
      %v1589 = vpop.f32.mrb[0].mxu0
      %v1590 = vpop.f32.mrb[0].mxu0
      %v1591 = vadd.f32 %v1502, %v1590
      %v1592 = vpop.f32.mrb[0].mxu0
      %1593 = vmatprep.mubr.bf16.mxu0 0
      %1594 = vmatmul.mubr.bf16.gmra.mrb[0].mxu0 %v1486
      %v1595 = vpop.f32.mrb[0].mxu0
      %v1596 = vadd.f32 %v1503, %v1595
      %v1597 = vpop.f32.mrb[0].mxu0
      %v1598 = vpop.f32.mrb[0].mxu0
      %v1599 = vadd.f32 %v1504, %v1598
      %v1600 = vpop.f32.mrb[0].mxu0
      %1601 = vdwg.mxu0
      %vm1602 = vcmp.gt.f32.partialorder %v527, 0.0
      %v1603 = vsel %vm1602, 1, 0
      %v1604 = vlaneseq
      %v1605 = vshrl.u32 %v1604, 7
      %v1606 = vsub.s32 0, %v1605
      %v1607 = vrot.slane %v1603, %v1606
      %vm1608 = vcmp.eq.s32.totalorder %v1607, 1
      %v1609 = vsel %vm1608, %v1540, -10000.0
      %v1610 = vsel %vm1608, %v1543, -10000.0
      %v1611 = vsel %vm1608, %v1548, -10000.0
      %v1612 = vsel %vm1608, %v1551, -10000.0
      %v1613 = vsel %vm1608, %v1556, -10000.0
      %v1614 = vsel %vm1608, %v1559, -10000.0
      %v1615 = vsel %vm1608, %v1564, -10000.0
      %v1616 = vsel %vm1608, %v1567, -10000.0
      %v1617 = vsel %vm1608, %v1572, -10000.0
      %v1618 = vsel %vm1608, %v1575, -10000.0
      %v1619 = vsel %vm1608, %v1580, -10000.0
      %v1620 = vsel %vm1608, %v1583, -10000.0
      %v1621 = vsel %vm1608, %v1588, -10000.0
      %v1622 = vsel %vm1608, %v1591, -10000.0
      %v1623 = vsel %vm1608, %v1596, -10000.0
      %v1624 = vsel %vm1608, %v1599, -10000.0
      %1625 = vmax.xlane.f32.xlu0 %v1609
      %v1626 = vpop.xlane.xlu0 %1625
      %1627 = vmax.xlane.f32.xlu0 %v1610
      %v1628 = vpop.xlane.xlu0 %1627
      %1629 = vmax.xlane.f32.xlu0 %v1611
      %v1630 = vpop.xlane.xlu0 %1629
      %1631 = vmax.xlane.f32.xlu0 %v1612
      %v1632 = vpop.xlane.xlu0 %1631
      %1633 = vmax.xlane.f32.xlu0 %v1613
      %v1634 = vpop.xlane.xlu0 %1633
      %1635 = vmax.xlane.f32.xlu0 %v1614
      %v1636 = vpop.xlane.xlu0 %1635
      %1637 = vmax.xlane.f32.xlu0 %v1615
      %v1638 = vpop.xlane.xlu0 %1637
      %1639 = vmax.xlane.f32.xlu0 %v1616
      %v1640 = vpop.xlane.xlu0 %1639
      %1641 = vmax.xlane.f32.xlu0 %v1617
      %v1642 = vpop.xlane.xlu0 %1641
      %1643 = vmax.xlane.f32.xlu0 %v1618
      %v1644 = vpop.xlane.xlu0 %1643
      %1645 = vmax.xlane.f32.xlu0 %v1619
      %v1646 = vpop.xlane.xlu0 %1645
      %1647 = vmax.xlane.f32.xlu0 %v1620
      %v1648 = vpop.xlane.xlu0 %1647
      %1649 = vmax.xlane.f32.xlu0 %v1621
      %v1650 = vpop.xlane.xlu0 %1649
      %1651 = vmax.xlane.f32.xlu0 %v1622
      %v1652 = vpop.xlane.xlu0 %1651
      %1653 = vmax.xlane.f32.xlu0 %v1623
      %v1654 = vpop.xlane.xlu0 %1653
      %1655 = vmax.xlane.f32.xlu0 %v1624
      %v1656 = vpop.xlane.xlu0 %1655
      %v1657 = vsub.f32 %v1609, %v1626
      %v1658 = vsub.f32 %v1610, %v1628
      %v1659 = vsub.f32 %v1611, %v1630
      %v1660 = vsub.f32 %v1612, %v1632
      %v1661 = vsub.f32 %v1613, %v1634
      %v1662 = vsub.f32 %v1614, %v1636
      %v1663 = vsub.f32 %v1615, %v1638
      %v1664 = vsub.f32 %v1616, %v1640
      %v1665 = vsub.f32 %v1617, %v1642
      %v1666 = vsub.f32 %v1618, %v1644
      %v1667 = vsub.f32 %v1619, %v1646
      %v1668 = vsub.f32 %v1620, %v1648
      %v1669 = vsub.f32 %v1621, %v1650
      %v1670 = vsub.f32 %v1622, %v1652
      %v1671 = vsub.f32 %v1623, %v1654
      %v1672 = vsub.f32 %v1624, %v1656
      %v1673 = vmul.f32 %v1657, 1.442695
      %v1674 = vpow.pop %v1673
      %v1675 = vmul.f32 %v1658, 1.442695
      %v1676 = vpow.pop %v1675
      %v1677 = vmul.f32 %v1659, 1.442695
      %v1678 = vpow.pop %v1677
      %v1679 = vmul.f32 %v1660, 1.442695
      %v1680 = vpow.pop %v1679
      %v1681 = vmul.f32 %v1661, 1.442695
      %v1682 = vpow.pop %v1681
      %v1683 = vmul.f32 %v1662, 1.442695
      %v1684 = vpow.pop %v1683
      %v1685 = vmul.f32 %v1663, 1.442695
      %v1686 = vpow.pop %v1685
      %v1687 = vmul.f32 %v1664, 1.442695
      %v1688 = vpow.pop %v1687
      %v1689 = vmul.f32 %v1665, 1.442695
      %v1690 = vpow.pop %v1689
      %v1691 = vmul.f32 %v1666, 1.442695
      %v1692 = vpow.pop %v1691
      %v1693 = vmul.f32 %v1667, 1.442695
      %v1694 = vpow.pop %v1693
      %v1695 = vmul.f32 %v1668, 1.442695
      %v1696 = vpow.pop %v1695
      %v1697 = vmul.f32 %v1669, 1.442695
      %v1698 = vpow.pop %v1697
      %v1699 = vmul.f32 %v1670, 1.442695
      %v1700 = vpow.pop %v1699
      %v1701 = vmul.f32 %v1671, 1.442695
      %v1702 = vpow.pop %v1701
      %v1703 = vmul.f32 %v1672, 1.442695
      %v1704 = vpow.pop %v1703
      %1705 = vadd.xlane.f32.xlu0 %v1674
      %v1706 = vpop.xlane.xlu0 %1705
      %1707 = vadd.xlane.f32.xlu0 %v1676
      %v1708 = vpop.xlane.xlu0 %1707
      %1709 = vadd.xlane.f32.xlu0 %v1678
      %v1710 = vpop.xlane.xlu0 %1709
      %1711 = vadd.xlane.f32.xlu0 %v1680
      %v1712 = vpop.xlane.xlu0 %1711
      %1713 = vadd.xlane.f32.xlu0 %v1682
      %v1714 = vpop.xlane.xlu0 %1713
      %1715 = vadd.xlane.f32.xlu0 %v1684
      %v1716 = vpop.xlane.xlu0 %1715
      %1717 = vadd.xlane.f32.xlu0 %v1686
      %v1718 = vpop.xlane.xlu0 %1717
      %1719 = vadd.xlane.f32.xlu0 %v1688
      %v1720 = vpop.xlane.xlu0 %1719
      %1721 = vadd.xlane.f32.xlu0 %v1690
      %v1722 = vpop.xlane.xlu0 %1721
      %1723 = vadd.xlane.f32.xlu0 %v1692
      %v1724 = vpop.xlane.xlu0 %1723
      %1725 = vadd.xlane.f32.xlu0 %v1694
      %v1726 = vpop.xlane.xlu0 %1725
      %1727 = vadd.xlane.f32.xlu0 %v1696
      %v1728 = vpop.xlane.xlu0 %1727
      %1729 = vadd.xlane.f32.xlu0 %v1698
      %v1730 = vpop.xlane.xlu0 %1729
      %1731 = vadd.xlane.f32.xlu0 %v1700
      %v1732 = vpop.xlane.xlu0 %1731
      %1733 = vadd.xlane.f32.xlu0 %v1702
      %v1734 = vpop.xlane.xlu0 %1733
      %1735 = vadd.xlane.f32.xlu0 %v1704
      %v1736 = vpop.xlane.xlu0 %1735
      %v1737 = vrcp.pop %v1706
      %v1738 = vrcp.pop %v1708
      %v1739 = vrcp.pop %v1710
      %v1740 = vrcp.pop %v1712
      %v1741 = vrcp.pop %v1714
      %v1742 = vrcp.pop %v1716
      %v1743 = vrcp.pop %v1718
      %v1744 = vrcp.pop %v1720
      %v1745 = vrcp.pop %v1722
      %v1746 = vrcp.pop %v1724
      %v1747 = vrcp.pop %v1726
      %v1748 = vrcp.pop %v1728
      %v1749 = vrcp.pop %v1730
      %v1750 = vrcp.pop %v1732
      %v1751 = vrcp.pop %v1734
      %v1752 = vrcp.pop %v1736
      %v1753 = vmul.f32 %v1674, %v1737
      %v1754 = vmul.f32 %v1676, %v1738
      %v1755 = vmul.f32 %v1678, %v1739
      %v1756 = vmul.f32 %v1680, %v1740
      %v1757 = vmul.f32 %v1682, %v1741
      %v1758 = vmul.f32 %v1684, %v1742
      %v1759 = vmul.f32 %v1686, %v1743
      %v1760 = vmul.f32 %v1688, %v1744
      %v1761 = vmul.f32 %v1690, %v1745
      %v1762 = vmul.f32 %v1692, %v1746
      %v1763 = vmul.f32 %v1694, %v1747
      %v1764 = vmul.f32 %v1696, %v1748
      %v1765 = vmul.f32 %v1698, %v1749
      %v1766 = vmul.f32 %v1700, %v1750
      %v1767 = vmul.f32 %v1702, %v1751
      %v1768 = vmul.f32 %v1704, %v1752
      %v1769 = vpack.c.bf16 %v1754, %v1753
      %v1770 = vpack.c.bf16 %v1756, %v1755
      %v1771 = vpack.c.bf16 %v1758, %v1757
      %v1772 = vpack.c.bf16 %v1760, %v1759
      %v1773 = vpack.c.bf16 %v1762, %v1761
      %v1774 = vpack.c.bf16 %v1764, %v1763
      %v1775 = vpack.c.bf16 %v1766, %v1765
      %v1776 = vpack.c.bf16 %v1768, %v1767
      %1777 = vmatprep.subr.bf16.mxu0 0
      %1778 = vmatpush1.bf16.msra.mxu0 %v1467
      %1779 = vmatprep.subr.bf16.mxu0 0
      %1780 = vmatpush1.bf16.msra.mxu0 %v1470
      %1781 = vmatprep.subr.bf16.mxu0 0
      %1782 = vmatpush1.bf16.msra.mxu0 %v1473
      %1783 = vmatprep.subr.bf16.mxu0 0
      %1784 = vmatpush1.bf16.msra.mxu0 %v1476
      %1785 = vmatprep.subr.bf16.mxu0 0
      %1786 = vmatpush1.bf16.msra.mxu0 %v1479
      %1787 = vmatprep.subr.bf16.mxu0 0
      %1788 = vmatpush1.bf16.msra.mxu0 %v1482
      %1789 = vmatprep.subr.bf16.mxu0 0
      %1790 = vmatpush1.bf16.msra.mxu0 %v1485
      %1791 = vmatprep.subr.bf16.mxu0 0
      %1792 = vmatpush1.bf16.msra.mxu0 %v1488
      %1793 = vmatprep.subr.bf16.mxu0 0
      %1794 = vmatpush1.bf16.msra.mxu0 0
      %1795 = vmatprep.subr.bf16.mxu0 0
      %1796 = vmatpush1.bf16.msra.mxu0 0
      %1797 = vmatprep.subr.bf16.mxu0 0
      %1798 = vmatpush1.bf16.msra.mxu0 0
      %1799 = vmatprep.subr.bf16.mxu0 0
      %1800 = vmatpush1.bf16.msra.mxu0 0
      %1801 = vmatprep.subr.bf16.mxu0 0
      %1802 = vmatpush1.bf16.msra.mxu0 0
      %1803 = vmatprep.subr.bf16.mxu0 0
      %1804 = vmatpush1.bf16.msra.mxu0 0
      %1805 = vmatprep.subr.bf16.mxu0 0
      %1806 = vmatpush1.bf16.msra.mxu0 0
      %1807 = vmatprep.subr.bf16.mxu0 0
      %1808 = vmatpush1.bf16.msra.mxu0 0
      %1809 = vmatprep.mubr.bf16.mxu0 0
      %1810 = vmatmul.mubr.bf16.gmra.mrb[0].mxu0 %v1769
      %v1811 = vpop.f32.mrb[0].mxu0
      %v1812 = vadd.f32 0.0, %v1811
      %v1813 = vpop.f32.mrb[0].mxu0
      %v1814 = vpop.f32.mrb[0].mxu0
      %v1815 = vadd.f32 0.0, %v1814
      %v1816 = vpop.f32.mrb[0].mxu0
      %1817 = vmatprep.mubr.bf16.mxu0 0
      %1818 = vmatmul.mubr.bf16.gmra.mrb[0].mxu0 %v1770
      %v1819 = vpop.f32.mrb[0].mxu0
      %v1820 = vadd.f32 0.0, %v1819
      %v1821 = vpop.f32.mrb[0].mxu0
      %v1822 = vpop.f32.mrb[0].mxu0
      %v1823 = vadd.f32 0.0, %v1822
      %v1824 = vpop.f32.mrb[0].mxu0
      %1825 = vmatprep.mubr.bf16.mxu0 0
      %1826 = vmatmul.mubr.bf16.gmra.mrb[0].mxu0 %v1771
      %v1827 = vpop.f32.mrb[0].mxu0
      %v1828 = vadd.f32 0.0, %v1827
      %v1829 = vpop.f32.mrb[0].mxu0
      %v1830 = vpop.f32.mrb[0].mxu0
      %v1831 = vadd.f32 0.0, %v1830
      %v1832 = vpop.f32.mrb[0].mxu0
      %1833 = vmatprep.mubr.bf16.mxu0 0
      %1834 = vmatmul.mubr.bf16.gmra.mrb[0].mxu0 %v1772
      %v1835 = vpop.f32.mrb[0].mxu0
      %v1836 = vadd.f32 0.0, %v1835
      %v1837 = vpop.f32.mrb[0].mxu0
      %v1838 = vpop.f32.mrb[0].mxu0
      %v1839 = vadd.f32 0.0, %v1838
      %v1840 = vpop.f32.mrb[0].mxu0
      %1841 = vmatprep.mubr.bf16.mxu0 0
      %1842 = vmatmul.mubr.bf16.gmra.mrb[0].mxu0 %v1773
      %v1843 = vpop.f32.mrb[0].mxu0
      %v1844 = vadd.f32 0.0, %v1843
      %v1845 = vpop.f32.mrb[0].mxu0
      %v1846 = vpop.f32.mrb[0].mxu0
      %v1847 = vadd.f32 0.0, %v1846
      %v1848 = vpop.f32.mrb[0].mxu0
      %1849 = vmatprep.mubr.bf16.mxu0 0
      %1850 = vmatmul.mubr.bf16.gmra.mrb[0].mxu0 %v1774
      %v1851 = vpop.f32.mrb[0].mxu0
      %v1852 = vadd.f32 0.0, %v1851
      %v1853 = vpop.f32.mrb[0].mxu0
      %v1854 = vpop.f32.mrb[0].mxu0
      %v1855 = vadd.f32 0.0, %v1854
      %v1856 = vpop.f32.mrb[0].mxu0
      %1857 = vmatprep.mubr.bf16.mxu0 0
      %1858 = vmatmul.mubr.bf16.gmra.mrb[0].mxu0 %v1775
      %v1859 = vpop.f32.mrb[0].mxu0
      %v1860 = vadd.f32 0.0, %v1859
      %v1861 = vpop.f32.mrb[0].mxu0
      %v1862 = vpop.f32.mrb[0].mxu0
      %v1863 = vadd.f32 0.0, %v1862
      %v1864 = vpop.f32.mrb[0].mxu0
      %1865 = vmatprep.mubr.bf16.mxu0 0
      %1866 = vmatmul.mubr.bf16.gmra.mrb[0].mxu0 %v1776
      %v1867 = vpop.f32.mrb[0].mxu0
      %v1868 = vadd.f32 0.0, %v1867
      %v1869 = vpop.f32.mrb[0].mxu0
      %v1870 = vpop.f32.mrb[0].mxu0
      %v1871 = vadd.f32 0.0, %v1870
      %v1872 = vpop.f32.mrb[0].mxu0
      %1873 = vdwg.mxu0
      %v1874 = vpack.c.bf16 %v1815, %v1812
      %v1875 = vpack.c.bf16 %v1823, %v1820
      %v1876 = vpack.c.bf16 %v1831, %v1828
      %v1877 = vpack.c.bf16 %v1839, %v1836
      %v1878 = vpack.c.bf16 %v1847, %v1844
      %v1879 = vpack.c.bf16 %v1855, %v1852
      %v1880 = vpack.c.bf16 %v1863, %v1860
      %v1881 = vpack.c.bf16 %v1871, %v1868
      %v1882 = vld [vmem:[%s7] sm:$0xf]
      %v1883 = vld [vmem:[%s7 + $0x4] sm:$0xf]
      %v1884 = vld [vmem:[%s7 + $0x8] sm:$0xf]
      %v1885 = vld [vmem:[%s7 + $0xc] sm:$0xf]
      %v1886 = vld [vmem:[%s7 + $0x10] sm:$0xf]
      %v1887 = vld [vmem:[%s7 + $0x14] sm:$0xf]
      %v1888 = vld [vmem:[%s7 + $0x18] sm:$0xf]
      %v1889 = vld [vmem:[%s7 + $0x1c] sm:$0xf]
      %v1890 = vld [vmem:[%s7 + $0x20] sm:$0xf]
      %v1891 = vld [vmem:[%s7 + $0x24] sm:$0xf]
      %v1892 = vld [vmem:[%s7 + $0x28] sm:$0xf]
      %v1893 = vld [vmem:[%s7 + $0x2c] sm:$0xf]
      %v1894 = vld [vmem:[%s7 + $0x30] sm:$0xf]
      %v1895 = vld [vmem:[%s7 + $0x34] sm:$0xf]
      %v1896 = vld [vmem:[%s7 + $0x38] sm:$0xf]
      %v1897 = vld [vmem:[%s7 + $0x3c] sm:$0xf]
      %v1898 = vld [vmem:[%s8] sm:$0x1]
      %v1900 = vlaneseq
      %v1901 = vshrl.u32 %v1900, 7
      %v1902 = vsub.s32 0, %v1901
      %v1903 = vrot.slane %v1898, %v1902
      %v1921 = vunpack.c.l.b16 %v1882
      %v1922 = vunpack.c.l.b16 %v1883
      %v1923 = vunpack.c.l.b16 %v1884
      %v1924 = vunpack.c.l.b16 %v1885
      %v1925 = vunpack.c.l.b16 %v1886
      %v1926 = vunpack.c.l.b16 %v1887
      %v1927 = vunpack.c.l.b16 %v1888
      %v1928 = vunpack.c.l.b16 %v1889
      %v1929 = vunpack.c.l.b16 %v1890
      %v1930 = vunpack.c.l.b16 %v1891
      %v1931 = vunpack.c.l.b16 %v1892
      %v1932 = vunpack.c.l.b16 %v1893
      %v1933 = vunpack.c.l.b16 %v1894
      %v1934 = vunpack.c.l.b16 %v1895
      %v1935 = vunpack.c.l.b16 %v1896
      %v1936 = vunpack.c.l.b16 %v1897
      %v1937 = vpack.c.b16 %v1922, %v1921
      %v1938 = vpack.c.b16 %v1924, %v1923
      %v1939 = vpack.c.b16 %v1926, %v1925
      %v1940 = vpack.c.b16 %v1928, %v1927
      %v1941 = vpack.c.b16 %v1930, %v1929
      %v1942 = vpack.c.b16 %v1932, %v1931
      %v1943 = vpack.c.b16 %v1934, %v1933
      %v1944 = vpack.c.b16 %v1936, %v1935
      %1953 = vmatprep.subr.bf16.mxu0 0
      %1954 = vmatpush1.bf16.msra.mxu0 %v1937
      %1955 = vmatprep.subr.bf16.mxu0 0
      %1956 = vmatpush1.bf16.msra.mxu0 %v1938
      %1957 = vmatprep.subr.bf16.mxu0 0
      %1958 = vmatpush1.bf16.msra.mxu0 %v1939
      %1959 = vmatprep.subr.bf16.mxu0 0
      %1960 = vmatpush1.bf16.msra.mxu0 %v1940
      %1961 = vmatprep.subr.bf16.mxu0 0
      %1962 = vmatpush1.bf16.msra.mxu0 %v1941
      %1963 = vmatprep.subr.bf16.mxu0 0
      %1964 = vmatpush1.bf16.msra.mxu0 %v1942
      %1965 = vmatprep.subr.bf16.mxu0 0
      %1966 = vmatpush1.bf16.msra.mxu0 %v1943
      %1967 = vmatprep.subr.bf16.mxu0 0
      %1968 = vmatpush1.bf16.msra.mxu0 %v1944
      %1969 = vmatprep.subr.bf16.mxu0 0
      %1970 = vmatpush1.bf16.msra.mxu0 0
      %1971 = vmatprep.subr.bf16.mxu0 0
      %1972 = vmatpush1.bf16.msra.mxu0 0
      %1973 = vmatprep.subr.bf16.mxu0 0
      %1974 = vmatpush1.bf16.msra.mxu0 0
      %1975 = vmatprep.subr.bf16.mxu0 0
      %1976 = vmatpush1.bf16.msra.mxu0 0
      %1977 = vmatprep.subr.bf16.mxu0 0
      %1978 = vmatpush1.bf16.msra.mxu0 0
      %1979 = vmatprep.subr.bf16.mxu0 0
      %1980 = vmatpush1.bf16.msra.mxu0 0
      %1981 = vmatprep.subr.bf16.mxu0 0
      %1982 = vmatpush1.bf16.msra.mxu0 0
      %1983 = vmatprep.subr.bf16.mxu0 0
      %1984 = vmatpush1.bf16.msra.mxu0 0
      %1985 = vmatprep.mubr.bf16.mxu0 0
      %1986 = vmatmul.mubr.bf16.gmra.mrb[0].mxu0 %v1874
      %v1987 = vpop.f32.mrb[0].mxu0
      %v1988 = vadd.f32 %v1903, %v1987
      %v1989 = vpop.f32.mrb[0].mxu0
      %v1990 = vpop.f32.mrb[0].mxu0
      %v1991 = vadd.f32 %v1903, %v1990
      %v1992 = vpop.f32.mrb[0].mxu0
      %1993 = vmatprep.mubr.bf16.mxu0 0
      %1994 = vmatmul.mubr.bf16.gmra.mrb[0].mxu0 %v1875
      %v1995 = vpop.f32.mrb[0].mxu0
      %v1996 = vadd.f32 %v1903, %v1995
      %v1997 = vpop.f32.mrb[0].mxu0
      %v1998 = vpop.f32.mrb[0].mxu0
      %v1999 = vadd.f32 %v1903, %v1998
      %v2000 = vpop.f32.mrb[0].mxu0
      %2001 = vmatprep.mubr.bf16.mxu0 0
      %2002 = vmatmul.mubr.bf16.gmra.mrb[0].mxu0 %v1876
      %v2003 = vpop.f32.mrb[0].mxu0
      %v2004 = vadd.f32 %v1903, %v2003
      %v2005 = vpop.f32.mrb[0].mxu0
      %v2006 = vpop.f32.mrb[0].mxu0
      %v2007 = vadd.f32 %v1903, %v2006
      %v2008 = vpop.f32.mrb[0].mxu0
      %2009 = vmatprep.mubr.bf16.mxu0 0
      %2010 = vmatmul.mubr.bf16.gmra.mrb[0].mxu0 %v1877
      %v2011 = vpop.f32.mrb[0].mxu0
      %v2012 = vadd.f32 %v1903, %v2011
      %v2013 = vpop.f32.mrb[0].mxu0
      %v2014 = vpop.f32.mrb[0].mxu0
      %v2015 = vadd.f32 %v1903, %v2014
      %v2016 = vpop.f32.mrb[0].mxu0
      %2017 = vmatprep.mubr.bf16.mxu0 0
      %2018 = vmatmul.mubr.bf16.gmra.mrb[0].mxu0 %v1878
      %v2019 = vpop.f32.mrb[0].mxu0
      %v2020 = vadd.f32 %v1903, %v2019
      %v2021 = vpop.f32.mrb[0].mxu0
      %v2022 = vpop.f32.mrb[0].mxu0
      %v2023 = vadd.f32 %v1903, %v2022
      %v2024 = vpop.f32.mrb[0].mxu0
      %2025 = vmatprep.mubr.bf16.mxu0 0
      %2026 = vmatmul.mubr.bf16.gmra.mrb[0].mxu0 %v1879
      %v2027 = vpop.f32.mrb[0].mxu0
      %v2028 = vadd.f32 %v1903, %v2027
      %v2029 = vpop.f32.mrb[0].mxu0
      %v2030 = vpop.f32.mrb[0].mxu0
      %v2031 = vadd.f32 %v1903, %v2030
      %v2032 = vpop.f32.mrb[0].mxu0
      %2033 = vmatprep.mubr.bf16.mxu0 0
      %2034 = vmatmul.mubr.bf16.gmra.mrb[0].mxu0 %v1880
      %v2035 = vpop.f32.mrb[0].mxu0
      %v2036 = vadd.f32 %v1903, %v2035
      %v2037 = vpop.f32.mrb[0].mxu0
      %v2038 = vpop.f32.mrb[0].mxu0
      %v2039 = vadd.f32 %v1903, %v2038
      %v2040 = vpop.f32.mrb[0].mxu0
      %2041 = vmatprep.mubr.bf16.mxu0 0
      %2042 = vmatmul.mubr.bf16.gmra.mrb[0].mxu0 %v1881
      %v2043 = vpop.f32.mrb[0].mxu0
      %v2044 = vadd.f32 %v1903, %v2043
      %v2045 = vpop.f32.mrb[0].mxu0
      %v2046 = vpop.f32.mrb[0].mxu0
      %v2047 = vadd.f32 %v1903, %v2046
      %v2048 = vpop.f32.mrb[0].mxu0
      %2049 = vdwg.mxu0
      %v2050 = vadd.f32 %v1054, %v1988
      %v2051 = vadd.f32 %v1055, %v1991
      %v2052 = vadd.f32 %v1056, %v1996
      %v2053 = vadd.f32 %v1057, %v1999
      %v2054 = vadd.f32 %v1058, %v2004
      %v2055 = vadd.f32 %v1059, %v2007
      %v2056 = vadd.f32 %v1060, %v2012
      %v2057 = vadd.f32 %v1061, %v2015
      %v2058 = vadd.f32 %v1062, %v2020
      %v2059 = vadd.f32 %v1063, %v2023
      %v2060 = vadd.f32 %v1064, %v2028
      %v2061 = vadd.f32 %v1065, %v2031
      %v2062 = vadd.f32 %v1066, %v2036
      %v2063 = vadd.f32 %v1067, %v2039
      %v2064 = vadd.f32 %v1068, %v2044
      %v2065 = vadd.f32 %v1069, %v2047
      %2066 = vadd.xlane.f32.xlu0 %v2050
      %v2067 = vpop.xlane.xlu0 %2066
      %2068 = vadd.xlane.f32.xlu0 %v2051
      %v2069 = vpop.xlane.xlu0 %2068
      %2070 = vadd.xlane.f32.xlu0 %v2052
      %v2071 = vpop.xlane.xlu0 %2070
      %2072 = vadd.xlane.f32.xlu0 %v2053
      %v2073 = vpop.xlane.xlu0 %2072
      %2074 = vadd.xlane.f32.xlu0 %v2054
      %v2075 = vpop.xlane.xlu0 %2074
      %2076 = vadd.xlane.f32.xlu0 %v2055
      %v2077 = vpop.xlane.xlu0 %2076
      %2078 = vadd.xlane.f32.xlu0 %v2056
      %v2079 = vpop.xlane.xlu0 %2078
      %2080 = vadd.xlane.f32.xlu0 %v2057
      %v2081 = vpop.xlane.xlu0 %2080
      %2082 = vadd.xlane.f32.xlu0 %v2058
      %v2083 = vpop.xlane.xlu0 %2082
      %2084 = vadd.xlane.f32.xlu0 %v2059
      %v2085 = vpop.xlane.xlu0 %2084
      %2086 = vadd.xlane.f32.xlu0 %v2060
      %v2087 = vpop.xlane.xlu0 %2086
      %2088 = vadd.xlane.f32.xlu0 %v2061
      %v2089 = vpop.xlane.xlu0 %2088
      %2090 = vadd.xlane.f32.xlu0 %v2062
      %v2091 = vpop.xlane.xlu0 %2090
      %2092 = vadd.xlane.f32.xlu0 %v2063
      %v2093 = vpop.xlane.xlu0 %2092
      %2094 = vadd.xlane.f32.xlu0 %v2064
      %v2095 = vpop.xlane.xlu0 %2094
      %2096 = vadd.xlane.f32.xlu0 %v2065
      %v2097 = vpop.xlane.xlu0 %2096
      %v2098 = vmul.f32 %v2067, %v837
      %v2099 = vmul.f32 %v2069, %v837
      %v2100 = vmul.f32 %v2071, %v837
      %v2101 = vmul.f32 %v2073, %v837
      %v2102 = vmul.f32 %v2075, %v837
      %v2103 = vmul.f32 %v2077, %v837
      %v2104 = vmul.f32 %v2079, %v837
      %v2105 = vmul.f32 %v2081, %v837
      %v2106 = vmul.f32 %v2083, %v837
      %v2107 = vmul.f32 %v2085, %v837
      %v2108 = vmul.f32 %v2087, %v837
      %v2109 = vmul.f32 %v2089, %v837
      %v2110 = vmul.f32 %v2091, %v837
      %v2111 = vmul.f32 %v2093, %v837
      %v2112 = vmul.f32 %v2095, %v837
      %v2113 = vmul.f32 %v2097, %v837
      %v2114 = vmul.f32 %v2050, %v2050
      %v2115 = vmul.f32 %v2051, %v2051
      %v2116 = vmul.f32 %v2052, %v2052
      %v2117 = vmul.f32 %v2053, %v2053
      %v2118 = vmul.f32 %v2054, %v2054
      %v2119 = vmul.f32 %v2055, %v2055
      %v2120 = vmul.f32 %v2056, %v2056
      %v2121 = vmul.f32 %v2057, %v2057
      %v2122 = vmul.f32 %v2058, %v2058
      %v2123 = vmul.f32 %v2059, %v2059
      %v2124 = vmul.f32 %v2060, %v2060
      %v2125 = vmul.f32 %v2061, %v2061
      %v2126 = vmul.f32 %v2062, %v2062
      %v2127 = vmul.f32 %v2063, %v2063
      %v2128 = vmul.f32 %v2064, %v2064
      %v2129 = vmul.f32 %v2065, %v2065
      %2130 = vadd.xlane.f32.xlu0 %v2114
      %v2131 = vpop.xlane.xlu0 %2130
      %2132 = vadd.xlane.f32.xlu0 %v2115
      %v2133 = vpop.xlane.xlu0 %2132
      %2134 = vadd.xlane.f32.xlu0 %v2116
      %v2135 = vpop.xlane.xlu0 %2134
      %2136 = vadd.xlane.f32.xlu0 %v2117
      %v2137 = vpop.xlane.xlu0 %2136
      %2138 = vadd.xlane.f32.xlu0 %v2118
      %v2139 = vpop.xlane.xlu0 %2138
      %2140 = vadd.xlane.f32.xlu0 %v2119
      %v2141 = vpop.xlane.xlu0 %2140
      %2142 = vadd.xlane.f32.xlu0 %v2120
      %v2143 = vpop.xlane.xlu0 %2142
      %2144 = vadd.xlane.f32.xlu0 %v2121
      %v2145 = vpop.xlane.xlu0 %2144
      %2146 = vadd.xlane.f32.xlu0 %v2122
      %v2147 = vpop.xlane.xlu0 %2146
      %2148 = vadd.xlane.f32.xlu0 %v2123
      %v2149 = vpop.xlane.xlu0 %2148
      %2150 = vadd.xlane.f32.xlu0 %v2124
      %v2151 = vpop.xlane.xlu0 %2150
      %2152 = vadd.xlane.f32.xlu0 %v2125
      %v2153 = vpop.xlane.xlu0 %2152
      %2154 = vadd.xlane.f32.xlu0 %v2126
      %v2155 = vpop.xlane.xlu0 %2154
      %2156 = vadd.xlane.f32.xlu0 %v2127
      %v2157 = vpop.xlane.xlu0 %2156
      %2158 = vadd.xlane.f32.xlu0 %v2128
      %v2159 = vpop.xlane.xlu0 %2158
      %2160 = vadd.xlane.f32.xlu0 %v2129
      %v2161 = vpop.xlane.xlu0 %2160
      %v2162 = vmul.f32 %v2131, %v837
      %v2163 = vmul.f32 %v2133, %v837
      %v2164 = vmul.f32 %v2135, %v837
      %v2165 = vmul.f32 %v2137, %v837
      %v2166 = vmul.f32 %v2139, %v837
      %v2167 = vmul.f32 %v2141, %v837
      %v2168 = vmul.f32 %v2143, %v837
      %v2169 = vmul.f32 %v2145, %v837
      %v2170 = vmul.f32 %v2147, %v837
      %v2171 = vmul.f32 %v2149, %v837
      %v2172 = vmul.f32 %v2151, %v837
      %v2173 = vmul.f32 %v2153, %v837
      %v2174 = vmul.f32 %v2155, %v837
      %v2175 = vmul.f32 %v2157, %v837
      %v2176 = vmul.f32 %v2159, %v837
      %v2177 = vmul.f32 %v2161, %v837
      %v2178 = vmul.f32 %v2098, %v2098
      %v2179 = vmul.f32 %v2099, %v2099
      %v2180 = vmul.f32 %v2100, %v2100
      %v2181 = vmul.f32 %v2101, %v2101
      %v2182 = vmul.f32 %v2102, %v2102
      %v2183 = vmul.f32 %v2103, %v2103
      %v2184 = vmul.f32 %v2104, %v2104
      %v2185 = vmul.f32 %v2105, %v2105
      %v2186 = vmul.f32 %v2106, %v2106
      %v2187 = vmul.f32 %v2107, %v2107
      %v2188 = vmul.f32 %v2108, %v2108
      %v2189 = vmul.f32 %v2109, %v2109
      %v2190 = vmul.f32 %v2110, %v2110
      %v2191 = vmul.f32 %v2111, %v2111
      %v2192 = vmul.f32 %v2112, %v2112
      %v2193 = vmul.f32 %v2113, %v2113
      %v2194 = vsub.f32 %v2162, %v2178
      %v2195 = vsub.f32 %v2163, %v2179
      %v2196 = vsub.f32 %v2164, %v2180
      %v2197 = vsub.f32 %v2165, %v2181
      %v2198 = vsub.f32 %v2166, %v2182
      %v2199 = vsub.f32 %v2167, %v2183
      %v2200 = vsub.f32 %v2168, %v2184
      %v2201 = vsub.f32 %v2169, %v2185
      %v2202 = vsub.f32 %v2170, %v2186
      %v2203 = vsub.f32 %v2171, %v2187
      %v2204 = vsub.f32 %v2172, %v2188
      %v2205 = vsub.f32 %v2173, %v2189
      %v2206 = vsub.f32 %v2174, %v2190
      %v2207 = vsub.f32 %v2175, %v2191
      %v2208 = vsub.f32 %v2176, %v2192
      %v2209 = vsub.f32 %v2177, %v2193
      %v2210 = vmax.f32 %v2194, 0.0
      %v2211 = vmax.f32 %v2195, 0.0
      %v2212 = vmax.f32 %v2196, 0.0
      %v2213 = vmax.f32 %v2197, 0.0
      %v2214 = vmax.f32 %v2198, 0.0
      %v2215 = vmax.f32 %v2199, 0.0
      %v2216 = vmax.f32 %v2200, 0.0
      %v2217 = vmax.f32 %v2201, 0.0
      %v2218 = vmax.f32 %v2202, 0.0
      %v2219 = vmax.f32 %v2203, 0.0
      %v2220 = vmax.f32 %v2204, 0.0
      %v2221 = vmax.f32 %v2205, 0.0
      %v2222 = vmax.f32 %v2206, 0.0
      %v2223 = vmax.f32 %v2207, 0.0
      %v2224 = vmax.f32 %v2208, 0.0
      %v2225 = vmax.f32 %v2209, 0.0
      %v2226 = vsub.f32 %v2050, %v2098
      %v2227 = vsub.f32 %v2051, %v2099
      %v2228 = vsub.f32 %v2052, %v2100
      %v2229 = vsub.f32 %v2053, %v2101
      %v2230 = vsub.f32 %v2054, %v2102
      %v2231 = vsub.f32 %v2055, %v2103
      %v2232 = vsub.f32 %v2056, %v2104
      %v2233 = vsub.f32 %v2057, %v2105
      %v2234 = vsub.f32 %v2058, %v2106
      %v2235 = vsub.f32 %v2059, %v2107
      %v2236 = vsub.f32 %v2060, %v2108
      %v2237 = vsub.f32 %v2061, %v2109
      %v2238 = vsub.f32 %v2062, %v2110
      %v2239 = vsub.f32 %v2063, %v2111
      %v2240 = vsub.f32 %v2064, %v2112
      %v2241 = vsub.f32 %v2065, %v2113
      %v2242 = vadd.f32 %v2210, 1e-12
      %v2243 = vadd.f32 %v2211, 1e-12
      %v2244 = vadd.f32 %v2212, 1e-12
      %v2245 = vadd.f32 %v2213, 1e-12
      %v2246 = vadd.f32 %v2214, 1e-12
      %v2247 = vadd.f32 %v2215, 1e-12
      %v2248 = vadd.f32 %v2216, 1e-12
      %v2249 = vadd.f32 %v2217, 1e-12
      %v2250 = vadd.f32 %v2218, 1e-12
      %v2251 = vadd.f32 %v2219, 1e-12
      %v2252 = vadd.f32 %v2220, 1e-12
      %v2253 = vadd.f32 %v2221, 1e-12
      %v2254 = vadd.f32 %v2222, 1e-12
      %v2255 = vadd.f32 %v2223, 1e-12
      %v2256 = vadd.f32 %v2224, 1e-12
      %v2257 = vadd.f32 %v2225, 1e-12
      %v2258 = vrsqrt.pop %v2242
      %v2259 = vrsqrt.pop %v2243
      %v2260 = vrsqrt.pop %v2244
      %v2261 = vrsqrt.pop %v2245
      %v2262 = vrsqrt.pop %v2246
      %v2263 = vrsqrt.pop %v2247
      %v2264 = vrsqrt.pop %v2248
      %v2265 = vrsqrt.pop %v2249
      %v2266 = vrsqrt.pop %v2250
      %v2267 = vrsqrt.pop %v2251
      %v2268 = vrsqrt.pop %v2252
      %v2269 = vrsqrt.pop %v2253
      %v2270 = vrsqrt.pop %v2254
      %v2271 = vrsqrt.pop %v2255
      %v2272 = vrsqrt.pop %v2256
      %v2273 = vrsqrt.pop %v2257
      %v2274 = vmul.f32 %v2226, %v2258
      %v2275 = vmul.f32 %v2227, %v2259
      %v2276 = vmul.f32 %v2228, %v2260
      %v2277 = vmul.f32 %v2229, %v2261
      %v2278 = vmul.f32 %v2230, %v2262
      %v2279 = vmul.f32 %v2231, %v2263
      %v2280 = vmul.f32 %v2232, %v2264
      %v2281 = vmul.f32 %v2233, %v2265
      %v2282 = vmul.f32 %v2234, %v2266
      %v2283 = vmul.f32 %v2235, %v2267
      %v2284 = vmul.f32 %v2236, %v2268
      %v2285 = vmul.f32 %v2237, %v2269
      %v2286 = vmul.f32 %v2238, %v2270
      %v2287 = vmul.f32 %v2239, %v2271
      %v2288 = vmul.f32 %v2240, %v2272
      %v2289 = vmul.f32 %v2241, %v2273
      %v2290 = vlaneseq
      %v2291 = vshrl.u32 %v2290, 7
      %v2292 = vsub.s32 2, %v2291
      %v2293 = vrot.slane %v528, %v2292
      %v2294 = vmul.f32 %v2274, %v2293
      %v2295 = vmul.f32 %v2275, %v2293
      %v2296 = vmul.f32 %v2276, %v2293
      %v2297 = vmul.f32 %v2277, %v2293
      %v2298 = vmul.f32 %v2278, %v2293
      %v2299 = vmul.f32 %v2279, %v2293
      %v2300 = vmul.f32 %v2280, %v2293
      %v2301 = vmul.f32 %v2281, %v2293
      %v2302 = vmul.f32 %v2282, %v2293
      %v2303 = vmul.f32 %v2283, %v2293
      %v2304 = vmul.f32 %v2284, %v2293
      %v2305 = vmul.f32 %v2285, %v2293
      %v2306 = vmul.f32 %v2286, %v2293
      %v2307 = vmul.f32 %v2287, %v2293
      %v2308 = vmul.f32 %v2288, %v2293
      %v2309 = vmul.f32 %v2289, %v2293
      %v2310 = vlaneseq
      %v2311 = vshrl.u32 %v2310, 7
      %v2312 = vsub.s32 3, %v2311
      %v2313 = vrot.slane %v528, %v2312
      %v2314 = vadd.f32 %v2294, %v2313
      %v2315 = vadd.f32 %v2295, %v2313
      %v2316 = vadd.f32 %v2296, %v2313
      %v2317 = vadd.f32 %v2297, %v2313
      %v2318 = vadd.f32 %v2298, %v2313
      %v2319 = vadd.f32 %v2299, %v2313
      %v2320 = vadd.f32 %v2300, %v2313
      %v2321 = vadd.f32 %v2301, %v2313
      %v2322 = vadd.f32 %v2302, %v2313
      %v2323 = vadd.f32 %v2303, %v2313
      %v2324 = vadd.f32 %v2304, %v2313
      %v2325 = vadd.f32 %v2305, %v2313
      %v2326 = vadd.f32 %v2306, %v2313
      %v2327 = vadd.f32 %v2307, %v2313
      %v2328 = vadd.f32 %v2308, %v2313
      %v2329 = vadd.f32 %v2309, %v2313
      %v2330 = vpack.c.bf16 %v2315, %v2314
      %v2331 = vpack.c.bf16 %v2317, %v2316
      %v2332 = vpack.c.bf16 %v2319, %v2318
      %v2333 = vpack.c.bf16 %v2321, %v2320
      %v2334 = vpack.c.bf16 %v2323, %v2322
      %v2335 = vpack.c.bf16 %v2325, %v2324
      %v2336 = vpack.c.bf16 %v2327, %v2326
      %v2337 = vpack.c.bf16 %v2329, %v2328
      %v2338 = vld [vmem:[%s9] sm:$0xff]
      %v2339 = vld [vmem:[%s9 + $0x8] sm:$0xff]
      %v2340 = vld [vmem:[%s9 + $0x10] sm:$0xff]
      %v2341 = vld [vmem:[%s9 + $0x18] sm:$0xff]
      %v2342 = vld [vmem:[%s9 + $0x20] sm:$0xff]
      %v2343 = vld [vmem:[%s9 + $0x28] sm:$0xff]
      %v2344 = vld [vmem:[%s9 + $0x30] sm:$0xff]
      %v2345 = vld [vmem:[%s9 + $0x38] sm:$0xff]
      %v2346 = vld [vmem:[%s9 + $0x40] sm:$0xff]
      %v2347 = vld [vmem:[%s9 + $0x48] sm:$0xff]
      %v2348 = vld [vmem:[%s9 + $0x50] sm:$0xff]
      %v2349 = vld [vmem:[%s9 + $0x58] sm:$0xff]
      %v2350 = vld [vmem:[%s9 + $0x60] sm:$0xff]
      %v2351 = vld [vmem:[%s9 + $0x68] sm:$0xff]
      %v2352 = vld [vmem:[%s9 + $0x70] sm:$0xff]
      %v2353 = vld [vmem:[%s9 + $0x78] sm:$0xff]
      %v2354 = vld [vmem:[%s9 + $0x80] sm:$0xff]
      %v2355 = vld [vmem:[%s9 + $0x88] sm:$0xff]
      %v2356 = vld [vmem:[%s9 + $0x90] sm:$0xff]
      %v2357 = vld [vmem:[%s9 + $0x98] sm:$0xff]
      %v2358 = vld [vmem:[%s9 + $0xa0] sm:$0xff]
      %v2359 = vld [vmem:[%s9 + $0xa8] sm:$0xff]
      %v2360 = vld [vmem:[%s9 + $0xb0] sm:$0xff]
      %v2361 = vld [vmem:[%s9 + $0xb8] sm:$0xff]
      %v2362 = vld [vmem:[%s9 + $0xc0] sm:$0xff]
      %v2363 = vld [vmem:[%s9 + $0xc8] sm:$0xff]
      %v2364 = vld [vmem:[%s9 + $0xd0] sm:$0xff]
      %v2365 = vld [vmem:[%s9 + $0xd8] sm:$0xff]
      %v2366 = vld [vmem:[%s9 + $0xe0] sm:$0xff]
      %v2367 = vld [vmem:[%s9 + $0xe8] sm:$0xff]
      %v2368 = vld [vmem:[%s9 + $0xf0] sm:$0xff]
      %v2369 = vld [vmem:[%s9 + $0xf8] sm:$0xff]
      %v2370 = vld [vmem:[%s10] sm:$0xf]
      %v2372 = vlaneseq
      %v2373 = vshrl.u32 %v2372, 7
      %v2374 = vsub.s32 0, %v2373
      %v2375 = vrot.slane %v2370, %v2374
      %v2376 = vlaneseq
      %v2377 = vshrl.u32 %v2376, 7
      %v2378 = vsub.s32 1, %v2377
      %v2379 = vrot.slane %v2370, %v2378
      %v2380 = vlaneseq
      %v2381 = vshrl.u32 %v2380, 7
      %v2382 = vsub.s32 2, %v2381
      %v2383 = vrot.slane %v2370, %v2382
      %v2384 = vlaneseq
      %v2385 = vshrl.u32 %v2384, 7
      %v2386 = vsub.s32 3, %v2385
      %v2387 = vrot.slane %v2370, %v2386
      %v2424 = vunpack.c.l.b16 %v2338
      %v2425 = vunpack.c.h.b16 %v2338
      %v2426 = vunpack.c.l.b16 %v2339
      %v2427 = vunpack.c.h.b16 %v2339
      %v2428 = vunpack.c.l.b16 %v2340
      %v2429 = vunpack.c.h.b16 %v2340
      %v2430 = vunpack.c.l.b16 %v2341
      %v2431 = vunpack.c.h.b16 %v2341
      %v2432 = vunpack.c.l.b16 %v2342
      %v2433 = vunpack.c.h.b16 %v2342
      %v2434 = vunpack.c.l.b16 %v2343
      %v2435 = vunpack.c.h.b16 %v2343
      %v2436 = vunpack.c.l.b16 %v2344
      %v2437 = vunpack.c.h.b16 %v2344
      %v2438 = vunpack.c.l.b16 %v2345
      %v2439 = vunpack.c.h.b16 %v2345
      %v2440 = vunpack.c.l.b16 %v2346
      %v2441 = vunpack.c.h.b16 %v2346
      %v2442 = vunpack.c.l.b16 %v2347
      %v2443 = vunpack.c.h.b16 %v2347
      %v2444 = vunpack.c.l.b16 %v2348
      %v2445 = vunpack.c.h.b16 %v2348
      %v2446 = vunpack.c.l.b16 %v2349
      %v2447 = vunpack.c.h.b16 %v2349
      %v2448 = vunpack.c.l.b16 %v2350
      %v2449 = vunpack.c.h.b16 %v2350
      %v2450 = vunpack.c.l.b16 %v2351
      %v2451 = vunpack.c.h.b16 %v2351
      %v2452 = vunpack.c.l.b16 %v2352
      %v2453 = vunpack.c.h.b16 %v2352
      %v2454 = vunpack.c.l.b16 %v2353
      %v2455 = vunpack.c.h.b16 %v2353
      %v2456 = vunpack.c.l.b16 %v2354
      %v2457 = vunpack.c.h.b16 %v2354
      %v2458 = vunpack.c.l.b16 %v2355
      %v2459 = vunpack.c.h.b16 %v2355
      %v2460 = vunpack.c.l.b16 %v2356
      %v2461 = vunpack.c.h.b16 %v2356
      %v2462 = vunpack.c.l.b16 %v2357
      %v2463 = vunpack.c.h.b16 %v2357
      %v2464 = vunpack.c.l.b16 %v2358
      %v2465 = vunpack.c.h.b16 %v2358
      %v2466 = vunpack.c.l.b16 %v2359
      %v2467 = vunpack.c.h.b16 %v2359
      %v2468 = vunpack.c.l.b16 %v2360
      %v2469 = vunpack.c.h.b16 %v2360
      %v2470 = vunpack.c.l.b16 %v2361
      %v2471 = vunpack.c.h.b16 %v2361
      %v2472 = vunpack.c.l.b16 %v2362
      %v2473 = vunpack.c.h.b16 %v2362
      %v2474 = vunpack.c.l.b16 %v2363
      %v2475 = vunpack.c.h.b16 %v2363
      %v2476 = vunpack.c.l.b16 %v2364
      %v2477 = vunpack.c.h.b16 %v2364
      %v2478 = vunpack.c.l.b16 %v2365
      %v2479 = vunpack.c.h.b16 %v2365
      %v2480 = vunpack.c.l.b16 %v2366
      %v2481 = vunpack.c.h.b16 %v2366
      %v2482 = vunpack.c.l.b16 %v2367
      %v2483 = vunpack.c.h.b16 %v2367
      %v2484 = vunpack.c.l.b16 %v2368
      %v2485 = vunpack.c.h.b16 %v2368
      %v2486 = vunpack.c.l.b16 %v2369
      %v2487 = vunpack.c.h.b16 %v2369
      %v2488 = vpack.c.b16 %v2428, %v2424
      %v2489 = vpack.c.b16 %v2429, %v2425
      %v2490 = vpack.c.b16 %v2430, %v2426
      %v2491 = vpack.c.b16 %v2431, %v2427
      %v2492 = vpack.c.b16 %v2436, %v2432
      %v2493 = vpack.c.b16 %v2437, %v2433
      %v2494 = vpack.c.b16 %v2438, %v2434
      %v2495 = vpack.c.b16 %v2439, %v2435
      %v2496 = vpack.c.b16 %v2444, %v2440
      %v2497 = vpack.c.b16 %v2445, %v2441
      %v2498 = vpack.c.b16 %v2446, %v2442
      %v2499 = vpack.c.b16 %v2447, %v2443
      %v2500 = vpack.c.b16 %v2452, %v2448
      %v2501 = vpack.c.b16 %v2453, %v2449
      %v2502 = vpack.c.b16 %v2454, %v2450
      %v2503 = vpack.c.b16 %v2455, %v2451
      %v2504 = vpack.c.b16 %v2460, %v2456
      %v2505 = vpack.c.b16 %v2461, %v2457
      %v2506 = vpack.c.b16 %v2462, %v2458
      %v2507 = vpack.c.b16 %v2463, %v2459
      %v2508 = vpack.c.b16 %v2468, %v2464
      %v2509 = vpack.c.b16 %v2469, %v2465
      %v2510 = vpack.c.b16 %v2470, %v2466
      %v2511 = vpack.c.b16 %v2471, %v2467
      %v2512 = vpack.c.b16 %v2476, %v2472
      %v2513 = vpack.c.b16 %v2477, %v2473
      %v2514 = vpack.c.b16 %v2478, %v2474
      %v2515 = vpack.c.b16 %v2479, %v2475
      %v2516 = vpack.c.b16 %v2484, %v2480
      %v2517 = vpack.c.b16 %v2485, %v2481
      %v2518 = vpack.c.b16 %v2486, %v2482
      %v2519 = vpack.c.b16 %v2487, %v2483
      %2552 = vmatprep.subr.bf16.mxu0 %v2489
      %2553 = vmatpush1.bf16.msra.mxu0 %v2488
      %2554 = vmatprep.subr.bf16.mxu0 %v2493
      %2555 = vmatpush1.bf16.msra.mxu0 %v2492
      %2556 = vmatprep.subr.bf16.mxu0 %v2497
      %2557 = vmatpush1.bf16.msra.mxu0 %v2496
      %2558 = vmatprep.subr.bf16.mxu0 %v2501
      %2559 = vmatpush1.bf16.msra.mxu0 %v2500
      %2560 = vmatprep.subr.bf16.mxu0 %v2505
      %2561 = vmatpush1.bf16.msra.mxu0 %v2504
      %2562 = vmatprep.subr.bf16.mxu0 %v2509
      %2563 = vmatpush1.bf16.msra.mxu0 %v2508
      %2564 = vmatprep.subr.bf16.mxu0 %v2513
      %2565 = vmatpush1.bf16.msra.mxu0 %v2512
      %2566 = vmatprep.subr.bf16.mxu0 %v2517
      %2567 = vmatpush1.bf16.msra.mxu0 %v2516
      %2568 = vmatprep.subr.bf16.mxu0 0
      %2569 = vmatpush1.bf16.msra.mxu0 0
      %2570 = vmatprep.subr.bf16.mxu0 0
      %2571 = vmatpush1.bf16.msra.mxu0 0
      %2572 = vmatprep.subr.bf16.mxu0 0
      %2573 = vmatpush1.bf16.msra.mxu0 0
      %2574 = vmatprep.subr.bf16.mxu0 0
      %2575 = vmatpush1.bf16.msra.mxu0 0
      %2576 = vmatprep.subr.bf16.mxu0 0
      %2577 = vmatpush1.bf16.msra.mxu0 0
      %2578 = vmatprep.subr.bf16.mxu0 0
      %2579 = vmatpush1.bf16.msra.mxu0 0
      %2580 = vmatprep.subr.bf16.mxu0 0
      %2581 = vmatpush1.bf16.msra.mxu0 0
      %2582 = vmatprep.subr.bf16.mxu0 0
      %2583 = vmatpush1.bf16.msra.mxu0 0
      %2584 = vmatprep.mubr.bf16.mxu0 0
      %2585 = vmatmul.mubr.bf16.gmra.mrb[0].mxu0 %v2330
      %v2586 = vpop.f32.mrb[0].mxu0
      %v2587 = vadd.f32 %v2375, %v2586
      %v2588 = vpop.f32.mrb[0].mxu0
      %v2589 = vadd.f32 %v2379, %v2588
      %v2590 = vpop.f32.mrb[0].mxu0
      %v2591 = vadd.f32 %v2375, %v2590
      %v2592 = vpop.f32.mrb[0].mxu0
      %v2593 = vadd.f32 %v2379, %v2592
      %2594 = vmatprep.mubr.bf16.mxu0 0
      %2595 = vmatmul.mubr.bf16.gmra.mrb[0].mxu0 %v2331
      %v2596 = vpop.f32.mrb[0].mxu0
      %v2597 = vadd.f32 %v2375, %v2596
      %v2598 = vpop.f32.mrb[0].mxu0
      %v2599 = vadd.f32 %v2379, %v2598
      %v2600 = vpop.f32.mrb[0].mxu0
      %v2601 = vadd.f32 %v2375, %v2600
      %v2602 = vpop.f32.mrb[0].mxu0
      %v2603 = vadd.f32 %v2379, %v2602
      %2604 = vmatprep.mubr.bf16.mxu0 0
      %2605 = vmatmul.mubr.bf16.gmra.mrb[0].mxu0 %v2332
      %v2606 = vpop.f32.mrb[0].mxu0
      %v2607 = vadd.f32 %v2375, %v2606
      %v2608 = vpop.f32.mrb[0].mxu0
      %v2609 = vadd.f32 %v2379, %v2608
      %v2610 = vpop.f32.mrb[0].mxu0
      %v2611 = vadd.f32 %v2375, %v2610
      %v2612 = vpop.f32.mrb[0].mxu0
      %v2613 = vadd.f32 %v2379, %v2612
      %2614 = vmatprep.mubr.bf16.mxu0 0
      %2615 = vmatmul.mubr.bf16.gmra.mrb[0].mxu0 %v2333
      %v2616 = vpop.f32.mrb[0].mxu0
      %v2617 = vadd.f32 %v2375, %v2616
      %v2618 = vpop.f32.mrb[0].mxu0
      %v2619 = vadd.f32 %v2379, %v2618
      %v2620 = vpop.f32.mrb[0].mxu0
      %v2621 = vadd.f32 %v2375, %v2620
      %v2622 = vpop.f32.mrb[0].mxu0
      %v2623 = vadd.f32 %v2379, %v2622
      %2624 = vmatprep.mubr.bf16.mxu0 0
      %2625 = vmatmul.mubr.bf16.gmra.mrb[0].mxu0 %v2334
      %v2626 = vpop.f32.mrb[0].mxu0
      %v2627 = vadd.f32 %v2375, %v2626
      %v2628 = vpop.f32.mrb[0].mxu0
      %v2629 = vadd.f32 %v2379, %v2628
      %v2630 = vpop.f32.mrb[0].mxu0
      %v2631 = vadd.f32 %v2375, %v2630
      %v2632 = vpop.f32.mrb[0].mxu0
      %v2633 = vadd.f32 %v2379, %v2632
      %2634 = vmatprep.mubr.bf16.mxu0 0
      %2635 = vmatmul.mubr.bf16.gmra.mrb[0].mxu0 %v2335
      %v2636 = vpop.f32.mrb[0].mxu0
      %v2637 = vadd.f32 %v2375, %v2636
      %v2638 = vpop.f32.mrb[0].mxu0
      %v2639 = vadd.f32 %v2379, %v2638
      %v2640 = vpop.f32.mrb[0].mxu0
      %v2641 = vadd.f32 %v2375, %v2640
      %v2642 = vpop.f32.mrb[0].mxu0
      %v2643 = vadd.f32 %v2379, %v2642
      %2644 = vmatprep.mubr.bf16.mxu0 0
      %2645 = vmatmul.mubr.bf16.gmra.mrb[0].mxu0 %v2336
      %v2646 = vpop.f32.mrb[0].mxu0
      %v2647 = vadd.f32 %v2375, %v2646
      %v2648 = vpop.f32.mrb[0].mxu0
      %v2649 = vadd.f32 %v2379, %v2648
      %v2650 = vpop.f32.mrb[0].mxu0
      %v2651 = vadd.f32 %v2375, %v2650
      %v2652 = vpop.f32.mrb[0].mxu0
      %v2653 = vadd.f32 %v2379, %v2652
      %2654 = vmatprep.mubr.bf16.mxu0 0
      %2655 = vmatmul.mubr.bf16.gmra.mrb[0].mxu0 %v2337
      %v2656 = vpop.f32.mrb[0].mxu0
      %v2657 = vadd.f32 %v2375, %v2656
      %v2658 = vpop.f32.mrb[0].mxu0
      %v2659 = vadd.f32 %v2379, %v2658
      %v2660 = vpop.f32.mrb[0].mxu0
      %v2661 = vadd.f32 %v2375, %v2660
      %v2662 = vpop.f32.mrb[0].mxu0
      %v2663 = vadd.f32 %v2379, %v2662
      %2664 = vdwg.mxu0
      %2665 = vmatprep.subr.bf16.mxu0 %v2491
      %2666 = vmatpush1.bf16.msra.mxu0 %v2490
      %2667 = vmatprep.subr.bf16.mxu0 %v2495
      %2668 = vmatpush1.bf16.msra.mxu0 %v2494
      %2669 = vmatprep.subr.bf16.mxu0 %v2499
      %2670 = vmatpush1.bf16.msra.mxu0 %v2498
      %2671 = vmatprep.subr.bf16.mxu0 %v2503
      %2672 = vmatpush1.bf16.msra.mxu0 %v2502
      %2673 = vmatprep.subr.bf16.mxu0 %v2507
      %2674 = vmatpush1.bf16.msra.mxu0 %v2506
      %2675 = vmatprep.subr.bf16.mxu0 %v2511
      %2676 = vmatpush1.bf16.msra.mxu0 %v2510
      %2677 = vmatprep.subr.bf16.mxu0 %v2515
      %2678 = vmatpush1.bf16.msra.mxu0 %v2514
      %2679 = vmatprep.subr.bf16.mxu0 %v2519
      %2680 = vmatpush1.bf16.msra.mxu0 %v2518
      %2681 = vmatprep.subr.bf16.mxu0 0
      %2682 = vmatpush1.bf16.msra.mxu0 0
      %2683 = vmatprep.subr.bf16.mxu0 0
      %2684 = vmatpush1.bf16.msra.mxu0 0
      %2685 = vmatprep.subr.bf16.mxu0 0
      %2686 = vmatpush1.bf16.msra.mxu0 0
      %2687 = vmatprep.subr.bf16.mxu0 0
      %2688 = vmatpush1.bf16.msra.mxu0 0
      %2689 = vmatprep.subr.bf16.mxu0 0
      %2690 = vmatpush1.bf16.msra.mxu0 0
      %2691 = vmatprep.subr.bf16.mxu0 0
      %2692 = vmatpush1.bf16.msra.mxu0 0
      %2693 = vmatprep.subr.bf16.mxu0 0
      %2694 = vmatpush1.bf16.msra.mxu0 0
      %2695 = vmatprep.subr.bf16.mxu0 0
      %2696 = vmatpush1.bf16.msra.mxu0 0
      %2697 = vmatprep.mubr.bf16.mxu0 0
      %2698 = vmatmul.mubr.bf16.gmra.mrb[0].mxu0 %v2330
      %v2699 = vpop.f32.mrb[0].mxu0
      %v2700 = vadd.f32 %v2383, %v2699
      %v2701 = vpop.f32.mrb[0].mxu0
      %v2702 = vadd.f32 %v2387, %v2701
      %v2703 = vpop.f32.mrb[0].mxu0
      %v2704 = vadd.f32 %v2383, %v2703
      %v2705 = vpop.f32.mrb[0].mxu0
      %v2706 = vadd.f32 %v2387, %v2705
      %2707 = vmatprep.mubr.bf16.mxu0 0
      %2708 = vmatmul.mubr.bf16.gmra.mrb[0].mxu0 %v2331
      %v2709 = vpop.f32.mrb[0].mxu0
      %v2710 = vadd.f32 %v2383, %v2709
      %v2711 = vpop.f32.mrb[0].mxu0
      %v2712 = vadd.f32 %v2387, %v2711
      %v2713 = vpop.f32.mrb[0].mxu0
      %v2714 = vadd.f32 %v2383, %v2713
      %v2715 = vpop.f32.mrb[0].mxu0
      %v2716 = vadd.f32 %v2387, %v2715
      %2717 = vmatprep.mubr.bf16.mxu0 0
      %2718 = vmatmul.mubr.bf16.gmra.mrb[0].mxu0 %v2332
      %v2719 = vpop.f32.mrb[0].mxu0
      %v2720 = vadd.f32 %v2383, %v2719
      %v2721 = vpop.f32.mrb[0].mxu0
      %v2722 = vadd.f32 %v2387, %v2721
      %v2723 = vpop.f32.mrb[0].mxu0
      %v2724 = vadd.f32 %v2383, %v2723
      %v2725 = vpop.f32.mrb[0].mxu0
      %v2726 = vadd.f32 %v2387, %v2725
      %2727 = vmatprep.mubr.bf16.mxu0 0
      %2728 = vmatmul.mubr.bf16.gmra.mrb[0].mxu0 %v2333
      %v2729 = vpop.f32.mrb[0].mxu0
      %v2730 = vadd.f32 %v2383, %v2729
      %v2731 = vpop.f32.mrb[0].mxu0
      %v2732 = vadd.f32 %v2387, %v2731
      %v2733 = vpop.f32.mrb[0].mxu0
      %v2734 = vadd.f32 %v2383, %v2733
      %v2735 = vpop.f32.mrb[0].mxu0
      %v2736 = vadd.f32 %v2387, %v2735
      %2737 = vmatprep.mubr.bf16.mxu0 0
      %2738 = vmatmul.mubr.bf16.gmra.mrb[0].mxu0 %v2334
      %v2739 = vpop.f32.mrb[0].mxu0
      %v2740 = vadd.f32 %v2383, %v2739
      %v2741 = vpop.f32.mrb[0].mxu0
      %v2742 = vadd.f32 %v2387, %v2741
      %v2743 = vpop.f32.mrb[0].mxu0
      %v2744 = vadd.f32 %v2383, %v2743
      %v2745 = vpop.f32.mrb[0].mxu0
      %v2746 = vadd.f32 %v2387, %v2745
      %2747 = vmatprep.mubr.bf16.mxu0 0
      %2748 = vmatmul.mubr.bf16.gmra.mrb[0].mxu0 %v2335
      %v2749 = vpop.f32.mrb[0].mxu0
      %v2750 = vadd.f32 %v2383, %v2749
      %v2751 = vpop.f32.mrb[0].mxu0
      %v2752 = vadd.f32 %v2387, %v2751
      %v2753 = vpop.f32.mrb[0].mxu0
      %v2754 = vadd.f32 %v2383, %v2753
      %v2755 = vpop.f32.mrb[0].mxu0
      %v2756 = vadd.f32 %v2387, %v2755
      %2757 = vmatprep.mubr.bf16.mxu0 0
      %2758 = vmatmul.mubr.bf16.gmra.mrb[0].mxu0 %v2336
      %v2759 = vpop.f32.mrb[0].mxu0
      %v2760 = vadd.f32 %v2383, %v2759
      %v2761 = vpop.f32.mrb[0].mxu0
      %v2762 = vadd.f32 %v2387, %v2761
      %v2763 = vpop.f32.mrb[0].mxu0
      %v2764 = vadd.f32 %v2383, %v2763
      %v2765 = vpop.f32.mrb[0].mxu0
      %v2766 = vadd.f32 %v2387, %v2765
      %2767 = vmatprep.mubr.bf16.mxu0 0
      %2768 = vmatmul.mubr.bf16.gmra.mrb[0].mxu0 %v2337
      %v2769 = vpop.f32.mrb[0].mxu0
      %v2770 = vadd.f32 %v2383, %v2769
      %v2771 = vpop.f32.mrb[0].mxu0
      %v2772 = vadd.f32 %v2387, %v2771
      %v2773 = vpop.f32.mrb[0].mxu0
      %v2774 = vadd.f32 %v2383, %v2773
      %v2775 = vpop.f32.mrb[0].mxu0
      %v2776 = vadd.f32 %v2387, %v2775
      %2777 = vdwg.mxu0
      %v2778 = vmul.f32 %v2587, %v2587
      %v2779 = vmul.f32 %v2589, %v2589
      %v2780 = vmul.f32 %v2700, %v2700
      %v2781 = vmul.f32 %v2702, %v2702
      %v2782 = vmul.f32 %v2591, %v2591
      %v2783 = vmul.f32 %v2593, %v2593
      %v2784 = vmul.f32 %v2704, %v2704
      %v2785 = vmul.f32 %v2706, %v2706
      %v2786 = vmul.f32 %v2597, %v2597
      %v2787 = vmul.f32 %v2599, %v2599
      %v2788 = vmul.f32 %v2710, %v2710
      %v2789 = vmul.f32 %v2712, %v2712
      %v2790 = vmul.f32 %v2601, %v2601
      %v2791 = vmul.f32 %v2603, %v2603
      %v2792 = vmul.f32 %v2714, %v2714
      %v2793 = vmul.f32 %v2716, %v2716
      %v2794 = vmul.f32 %v2607, %v2607
      %v2795 = vmul.f32 %v2609, %v2609
      %v2796 = vmul.f32 %v2720, %v2720
      %v2797 = vmul.f32 %v2722, %v2722
      %v2798 = vmul.f32 %v2611, %v2611
      %v2799 = vmul.f32 %v2613, %v2613
      %v2800 = vmul.f32 %v2724, %v2724
      %v2801 = vmul.f32 %v2726, %v2726
      %v2802 = vmul.f32 %v2617, %v2617
      %v2803 = vmul.f32 %v2619, %v2619
      %v2804 = vmul.f32 %v2730, %v2730
      %v2805 = vmul.f32 %v2732, %v2732
      %v2806 = vmul.f32 %v2621, %v2621
      %v2807 = vmul.f32 %v2623, %v2623
      %v2808 = vmul.f32 %v2734, %v2734
      %v2809 = vmul.f32 %v2736, %v2736
      %v2810 = vmul.f32 %v2627, %v2627
      %v2811 = vmul.f32 %v2629, %v2629
      %v2812 = vmul.f32 %v2740, %v2740
      %v2813 = vmul.f32 %v2742, %v2742
      %v2814 = vmul.f32 %v2631, %v2631
      %v2815 = vmul.f32 %v2633, %v2633
      %v2816 = vmul.f32 %v2744, %v2744
      %v2817 = vmul.f32 %v2746, %v2746
      %v2818 = vmul.f32 %v2637, %v2637
      %v2819 = vmul.f32 %v2639, %v2639
      %v2820 = vmul.f32 %v2750, %v2750
      %v2821 = vmul.f32 %v2752, %v2752
      %v2822 = vmul.f32 %v2641, %v2641
      %v2823 = vmul.f32 %v2643, %v2643
      %v2824 = vmul.f32 %v2754, %v2754
      %v2825 = vmul.f32 %v2756, %v2756
      %v2826 = vmul.f32 %v2647, %v2647
      %v2827 = vmul.f32 %v2649, %v2649
      %v2828 = vmul.f32 %v2760, %v2760
      %v2829 = vmul.f32 %v2762, %v2762
      %v2830 = vmul.f32 %v2651, %v2651
      %v2831 = vmul.f32 %v2653, %v2653
      %v2832 = vmul.f32 %v2764, %v2764
      %v2833 = vmul.f32 %v2766, %v2766
      %v2834 = vmul.f32 %v2657, %v2657
      %v2835 = vmul.f32 %v2659, %v2659
      %v2836 = vmul.f32 %v2770, %v2770
      %v2837 = vmul.f32 %v2772, %v2772
      %v2838 = vmul.f32 %v2661, %v2661
      %v2839 = vmul.f32 %v2663, %v2663
      %v2840 = vmul.f32 %v2774, %v2774
      %v2841 = vmul.f32 %v2776, %v2776
      %v2842 = vmul.f32 %v2587, %v2778
      %v2843 = vmul.f32 %v2589, %v2779
      %v2844 = vmul.f32 %v2700, %v2780
      %v2845 = vmul.f32 %v2702, %v2781
      %v2846 = vmul.f32 %v2591, %v2782
      %v2847 = vmul.f32 %v2593, %v2783
      %v2848 = vmul.f32 %v2704, %v2784
      %v2849 = vmul.f32 %v2706, %v2785
      %v2850 = vmul.f32 %v2597, %v2786
      %v2851 = vmul.f32 %v2599, %v2787
      %v2852 = vmul.f32 %v2710, %v2788
      %v2853 = vmul.f32 %v2712, %v2789
      %v2854 = vmul.f32 %v2601, %v2790
      %v2855 = vmul.f32 %v2603, %v2791
      %v2856 = vmul.f32 %v2714, %v2792
      %v2857 = vmul.f32 %v2716, %v2793
      %v2858 = vmul.f32 %v2607, %v2794
      %v2859 = vmul.f32 %v2609, %v2795
      %v2860 = vmul.f32 %v2720, %v2796
      %v2861 = vmul.f32 %v2722, %v2797
      %v2862 = vmul.f32 %v2611, %v2798
      %v2863 = vmul.f32 %v2613, %v2799
      %v2864 = vmul.f32 %v2724, %v2800
      %v2865 = vmul.f32 %v2726, %v2801
      %v2866 = vmul.f32 %v2617, %v2802
      %v2867 = vmul.f32 %v2619, %v2803
      %v2868 = vmul.f32 %v2730, %v2804
      %v2869 = vmul.f32 %v2732, %v2805
      %v2870 = vmul.f32 %v2621, %v2806
      %v2871 = vmul.f32 %v2623, %v2807
      %v2872 = vmul.f32 %v2734, %v2808
      %v2873 = vmul.f32 %v2736, %v2809
      %v2874 = vmul.f32 %v2627, %v2810
      %v2875 = vmul.f32 %v2629, %v2811
      %v2876 = vmul.f32 %v2740, %v2812
      %v2877 = vmul.f32 %v2742, %v2813
      %v2878 = vmul.f32 %v2631, %v2814
      %v2879 = vmul.f32 %v2633, %v2815
      %v2880 = vmul.f32 %v2744, %v2816
      %v2881 = vmul.f32 %v2746, %v2817
      %v2882 = vmul.f32 %v2637, %v2818
      %v2883 = vmul.f32 %v2639, %v2819
      %v2884 = vmul.f32 %v2750, %v2820
      %v2885 = vmul.f32 %v2752, %v2821
      %v2886 = vmul.f32 %v2641, %v2822
      %v2887 = vmul.f32 %v2643, %v2823
      %v2888 = vmul.f32 %v2754, %v2824
      %v2889 = vmul.f32 %v2756, %v2825
      %v2890 = vmul.f32 %v2647, %v2826
      %v2891 = vmul.f32 %v2649, %v2827
      %v2892 = vmul.f32 %v2760, %v2828
      %v2893 = vmul.f32 %v2762, %v2829
      %v2894 = vmul.f32 %v2651, %v2830
      %v2895 = vmul.f32 %v2653, %v2831
      %v2896 = vmul.f32 %v2764, %v2832
      %v2897 = vmul.f32 %v2766, %v2833
      %v2898 = vmul.f32 %v2657, %v2834
      %v2899 = vmul.f32 %v2659, %v2835
      %v2900 = vmul.f32 %v2770, %v2836
      %v2901 = vmul.f32 %v2772, %v2837
      %v2902 = vmul.f32 %v2661, %v2838
      %v2903 = vmul.f32 %v2663, %v2839
      %v2904 = vmul.f32 %v2774, %v2840
      %v2905 = vmul.f32 %v2776, %v2841
      %v2906 = vmul.f32 %v2842, 0.044715
      %v2907 = vmul.f32 %v2843, 0.044715
      %v2908 = vmul.f32 %v2844, 0.044715
      %v2909 = vmul.f32 %v2845, 0.044715
      %v2910 = vmul.f32 %v2846, 0.044715
      %v2911 = vmul.f32 %v2847, 0.044715
      %v2912 = vmul.f32 %v2848, 0.044715
      %v2913 = vmul.f32 %v2849, 0.044715
      %v2914 = vmul.f32 %v2850, 0.044715
      %v2915 = vmul.f32 %v2851, 0.044715
      %v2916 = vmul.f32 %v2852, 0.044715
      %v2917 = vmul.f32 %v2853, 0.044715
      %v2918 = vmul.f32 %v2854, 0.044715
      %v2919 = vmul.f32 %v2855, 0.044715
      %v2920 = vmul.f32 %v2856, 0.044715
      %v2921 = vmul.f32 %v2857, 0.044715
      %v2922 = vmul.f32 %v2858, 0.044715
      %v2923 = vmul.f32 %v2859, 0.044715
      %v2924 = vmul.f32 %v2860, 0.044715
      %v2925 = vmul.f32 %v2861, 0.044715
      %v2926 = vmul.f32 %v2862, 0.044715
      %v2927 = vmul.f32 %v2863, 0.044715
      %v2928 = vmul.f32 %v2864, 0.044715
      %v2929 = vmul.f32 %v2865, 0.044715
      %v2930 = vmul.f32 %v2866, 0.044715
      %v2931 = vmul.f32 %v2867, 0.044715
      %v2932 = vmul.f32 %v2868, 0.044715
      %v2933 = vmul.f32 %v2869, 0.044715
      %v2934 = vmul.f32 %v2870, 0.044715
      %v2935 = vmul.f32 %v2871, 0.044715
      %v2936 = vmul.f32 %v2872, 0.044715
      %v2937 = vmul.f32 %v2873, 0.044715
      %v2938 = vmul.f32 %v2874, 0.044715
      %v2939 = vmul.f32 %v2875, 0.044715
      %v2940 = vmul.f32 %v2876, 0.044715
      %v2941 = vmul.f32 %v2877, 0.044715
      %v2942 = vmul.f32 %v2878, 0.044715
      %v2943 = vmul.f32 %v2879, 0.044715
      %v2944 = vmul.f32 %v2880, 0.044715
      %v2945 = vmul.f32 %v2881, 0.044715
      %v2946 = vmul.f32 %v2882, 0.044715
      %v2947 = vmul.f32 %v2883, 0.044715
      %v2948 = vmul.f32 %v2884, 0.044715
      %v2949 = vmul.f32 %v2885, 0.044715
      %v2950 = vmul.f32 %v2886, 0.044715
      %v2951 = vmul.f32 %v2887, 0.044715
      %v2952 = vmul.f32 %v2888, 0.044715
      %v2953 = vmul.f32 %v2889, 0.044715
      %v2954 = vmul.f32 %v2890, 0.044715
      %v2955 = vmul.f32 %v2891, 0.044715
      %v2956 = vmul.f32 %v2892, 0.044715
      %v2957 = vmul.f32 %v2893, 0.044715
      %v2958 = vmul.f32 %v2894, 0.044715
      %v2959 = vmul.f32 %v2895, 0.044715
      %v2960 = vmul.f32 %v2896, 0.044715
      %v2961 = vmul.f32 %v2897, 0.044715
      %v2962 = vmul.f32 %v2898, 0.044715
      %v2963 = vmul.f32 %v2899, 0.044715
      %v2964 = vmul.f32 %v2900, 0.044715
      %v2965 = vmul.f32 %v2901, 0.044715
      %v2966 = vmul.f32 %v2902, 0.044715
      %v2967 = vmul.f32 %v2903, 0.044715
      %v2968 = vmul.f32 %v2904, 0.044715
      %v2969 = vmul.f32 %v2905, 0.044715
      %v2970 = vadd.f32 %v2587, %v2906
      %v2971 = vadd.f32 %v2589, %v2907
      %v2972 = vadd.f32 %v2700, %v2908
      %v2973 = vadd.f32 %v2702, %v2909
      %v2974 = vadd.f32 %v2591, %v2910
      %v2975 = vadd.f32 %v2593, %v2911
      %v2976 = vadd.f32 %v2704, %v2912
      %v2977 = vadd.f32 %v2706, %v2913
      %v2978 = vadd.f32 %v2597, %v2914
      %v2979 = vadd.f32 %v2599, %v2915
      %v2980 = vadd.f32 %v2710, %v2916
      %v2981 = vadd.f32 %v2712, %v2917
      %v2982 = vadd.f32 %v2601, %v2918
      %v2983 = vadd.f32 %v2603, %v2919
      %v2984 = vadd.f32 %v2714, %v2920
      %v2985 = vadd.f32 %v2716, %v2921
      %v2986 = vadd.f32 %v2607, %v2922
      %v2987 = vadd.f32 %v2609, %v2923
      %v2988 = vadd.f32 %v2720, %v2924
      %v2989 = vadd.f32 %v2722, %v2925
      %v2990 = vadd.f32 %v2611, %v2926
      %v2991 = vadd.f32 %v2613, %v2927
      %v2992 = vadd.f32 %v2724, %v2928
      %v2993 = vadd.f32 %v2726, %v2929
      %v2994 = vadd.f32 %v2617, %v2930
      %v2995 = vadd.f32 %v2619, %v2931
      %v2996 = vadd.f32 %v2730, %v2932
      %v2997 = vadd.f32 %v2732, %v2933
      %v2998 = vadd.f32 %v2621, %v2934
      %v2999 = vadd.f32 %v2623, %v2935
      %v3000 = vadd.f32 %v2734, %v2936
      %v3001 = vadd.f32 %v2736, %v2937
      %v3002 = vadd.f32 %v2627, %v2938
      %v3003 = vadd.f32 %v2629, %v2939
      %v3004 = vadd.f32 %v2740, %v2940
      %v3005 = vadd.f32 %v2742, %v2941
      %v3006 = vadd.f32 %v2631, %v2942
      %v3007 = vadd.f32 %v2633, %v2943
      %v3008 = vadd.f32 %v2744, %v2944
      %v3009 = vadd.f32 %v2746, %v2945
      %v3010 = vadd.f32 %v2637, %v2946
      %v3011 = vadd.f32 %v2639, %v2947
      %v3012 = vadd.f32 %v2750, %v2948
      %v3013 = vadd.f32 %v2752, %v2949
      %v3014 = vadd.f32 %v2641, %v2950
      %v3015 = vadd.f32 %v2643, %v2951
      %v3016 = vadd.f32 %v2754, %v2952
      %v3017 = vadd.f32 %v2756, %v2953
      %v3018 = vadd.f32 %v2647, %v2954
      %v3019 = vadd.f32 %v2649, %v2955
      %v3020 = vadd.f32 %v2760, %v2956
      %v3021 = vadd.f32 %v2762, %v2957
      %v3022 = vadd.f32 %v2651, %v2958
      %v3023 = vadd.f32 %v2653, %v2959
      %v3024 = vadd.f32 %v2764, %v2960
      %v3025 = vadd.f32 %v2766, %v2961
      %v3026 = vadd.f32 %v2657, %v2962
      %v3027 = vadd.f32 %v2659, %v2963
      %v3028 = vadd.f32 %v2770, %v2964
      %v3029 = vadd.f32 %v2772, %v2965
      %v3030 = vadd.f32 %v2661, %v2966
      %v3031 = vadd.f32 %v2663, %v2967
      %v3032 = vadd.f32 %v2774, %v2968
      %v3033 = vadd.f32 %v2776, %v2969
      %v3034 = vmul.f32 %v2970, 0.7978846
      %v3035 = vmul.f32 %v2971, 0.7978846
      %v3036 = vmul.f32 %v2972, 0.7978846
      %v3037 = vmul.f32 %v2973, 0.7978846
      %v3038 = vmul.f32 %v2974, 0.7978846
      %v3039 = vmul.f32 %v2975, 0.7978846
      %v3040 = vmul.f32 %v2976, 0.7978846
      %v3041 = vmul.f32 %v2977, 0.7978846
      %v3042 = vmul.f32 %v2978, 0.7978846
      %v3043 = vmul.f32 %v2979, 0.7978846
      %v3044 = vmul.f32 %v2980, 0.7978846
      %v3045 = vmul.f32 %v2981, 0.7978846
      %v3046 = vmul.f32 %v2982, 0.7978846
      %v3047 = vmul.f32 %v2983, 0.7978846
      %v3048 = vmul.f32 %v2984, 0.7978846
      %v3049 = vmul.f32 %v2985, 0.7978846
      %v3050 = vmul.f32 %v2986, 0.7978846
      %v3051 = vmul.f32 %v2987, 0.7978846
      %v3052 = vmul.f32 %v2988, 0.7978846
      %v3053 = vmul.f32 %v2989, 0.7978846
      %v3054 = vmul.f32 %v2990, 0.7978846
      %v3055 = vmul.f32 %v2991, 0.7978846
      %v3056 = vmul.f32 %v2992, 0.7978846
      %v3057 = vmul.f32 %v2993, 0.7978846
      %v3058 = vmul.f32 %v2994, 0.7978846
      %v3059 = vmul.f32 %v2995, 0.7978846
      %v3060 = vmul.f32 %v2996, 0.7978846
      %v3061 = vmul.f32 %v2997, 0.7978846
      %v3062 = vmul.f32 %v2998, 0.7978846
      %v3063 = vmul.f32 %v2999, 0.7978846
      %v3064 = vmul.f32 %v3000, 0.7978846
      %v3065 = vmul.f32 %v3001, 0.7978846
      %v3066 = vmul.f32 %v3002, 0.7978846
      %v3067 = vmul.f32 %v3003, 0.7978846
      %v3068 = vmul.f32 %v3004, 0.7978846
      %v3069 = vmul.f32 %v3005, 0.7978846
      %v3070 = vmul.f32 %v3006, 0.7978846
      %v3071 = vmul.f32 %v3007, 0.7978846
      %v3072 = vmul.f32 %v3008, 0.7978846
      %v3073 = vmul.f32 %v3009, 0.7978846
      %v3074 = vmul.f32 %v3010, 0.7978846
      %v3075 = vmul.f32 %v3011, 0.7978846
      %v3076 = vmul.f32 %v3012, 0.7978846
      %v3077 = vmul.f32 %v3013, 0.7978846
      %v3078 = vmul.f32 %v3014, 0.7978846
      %v3079 = vmul.f32 %v3015, 0.7978846
      %v3080 = vmul.f32 %v3016, 0.7978846
      %v3081 = vmul.f32 %v3017, 0.7978846
      %v3082 = vmul.f32 %v3018, 0.7978846
      %v3083 = vmul.f32 %v3019, 0.7978846
      %v3084 = vmul.f32 %v3020, 0.7978846
      %v3085 = vmul.f32 %v3021, 0.7978846
      %v3086 = vmul.f32 %v3022, 0.7978846
      %v3087 = vmul.f32 %v3023, 0.7978846
      %v3088 = vmul.f32 %v3024, 0.7978846
      %v3089 = vmul.f32 %v3025, 0.7978846
      %v3090 = vmul.f32 %v3026, 0.7978846
      %v3091 = vmul.f32 %v3027, 0.7978846
      %v3092 = vmul.f32 %v3028, 0.7978846
      %v3093 = vmul.f32 %v3029, 0.7978846
      %v3094 = vmul.f32 %v3030, 0.7978846
      %v3095 = vmul.f32 %v3031, 0.7978846
      %v3096 = vmul.f32 %v3032, 0.7978846
      %v3097 = vmul.f32 %v3033, 0.7978846
      %v3098 = vtanh.pop %v3034
      %v3099 = vtanh.pop %v3035
      %v3100 = vtanh.pop %v3036
      %v3101 = vtanh.pop %v3037
      %v3102 = vtanh.pop %v3038
      %v3103 = vtanh.pop %v3039
      %v3104 = vtanh.pop %v3040
      %v3105 = vtanh.pop %v3041
      %v3106 = vtanh.pop %v3042
      %v3107 = vtanh.pop %v3043
      %v3108 = vtanh.pop %v3044
      %v3109 = vtanh.pop %v3045
      %v3110 = vtanh.pop %v3046
      %v3111 = vtanh.pop %v3047
      %v3112 = vtanh.pop %v3048
      %v3113 = vtanh.pop %v3049
      %v3114 = vtanh.pop %v3050
      %v3115 = vtanh.pop %v3051
      %v3116 = vtanh.pop %v3052
      %v3117 = vtanh.pop %v3053
      %v3118 = vtanh.pop %v3054
      %v3119 = vtanh.pop %v3055
      %v3120 = vtanh.pop %v3056
      %v3121 = vtanh.pop %v3057
      %v3122 = vtanh.pop %v3058
      %v3123 = vtanh.pop %v3059
      %v3124 = vtanh.pop %v3060
      %v3125 = vtanh.pop %v3061
      %v3126 = vtanh.pop %v3062
      %v3127 = vtanh.pop %v3063
      %v3128 = vtanh.pop %v3064
      %v3129 = vtanh.pop %v3065
      %v3130 = vtanh.pop %v3066
      %v3131 = vtanh.pop %v3067
      %v3132 = vtanh.pop %v3068
      %v3133 = vtanh.pop %v3069
      %v3134 = vtanh.pop %v3070
      %v3135 = vtanh.pop %v3071
      %v3136 = vtanh.pop %v3072
      %v3137 = vtanh.pop %v3073
      %v3138 = vtanh.pop %v3074
      %v3139 = vtanh.pop %v3075
      %v3140 = vtanh.pop %v3076
      %v3141 = vtanh.pop %v3077
      %v3142 = vtanh.pop %v3078
      %v3143 = vtanh.pop %v3079
      %v3144 = vtanh.pop %v3080
      %v3145 = vtanh.pop %v3081
      %v3146 = vtanh.pop %v3082
      %v3147 = vtanh.pop %v3083
      %v3148 = vtanh.pop %v3084
      %v3149 = vtanh.pop %v3085
      %v3150 = vtanh.pop %v3086
      %v3151 = vtanh.pop %v3087
      %v3152 = vtanh.pop %v3088
      %v3153 = vtanh.pop %v3089
      %v3154 = vtanh.pop %v3090
      %v3155 = vtanh.pop %v3091
      %v3156 = vtanh.pop %v3092
      %v3157 = vtanh.pop %v3093
      %v3158 = vtanh.pop %v3094
      %v3159 = vtanh.pop %v3095
      %v3160 = vtanh.pop %v3096
      %v3161 = vtanh.pop %v3097
      %v3162 = vadd.f32 %v3098, 1.0
      %v3163 = vadd.f32 %v3099, 1.0
      %v3164 = vadd.f32 %v3100, 1.0
      %v3165 = vadd.f32 %v3101, 1.0
      %v3166 = vadd.f32 %v3102, 1.0
      %v3167 = vadd.f32 %v3103, 1.0
      %v3168 = vadd.f32 %v3104, 1.0
      %v3169 = vadd.f32 %v3105, 1.0
      %v3170 = vadd.f32 %v3106, 1.0
      %v3171 = vadd.f32 %v3107, 1.0
      %v3172 = vadd.f32 %v3108, 1.0
      %v3173 = vadd.f32 %v3109, 1.0
      %v3174 = vadd.f32 %v3110, 1.0
      %v3175 = vadd.f32 %v3111, 1.0
      %v3176 = vadd.f32 %v3112, 1.0
      %v3177 = vadd.f32 %v3113, 1.0
      %v3178 = vadd.f32 %v3114, 1.0
      %v3179 = vadd.f32 %v3115, 1.0
      %v3180 = vadd.f32 %v3116, 1.0
      %v3181 = vadd.f32 %v3117, 1.0
      %v3182 = vadd.f32 %v3118, 1.0
      %v3183 = vadd.f32 %v3119, 1.0
      %v3184 = vadd.f32 %v3120, 1.0
      %v3185 = vadd.f32 %v3121, 1.0
      %v3186 = vadd.f32 %v3122, 1.0
      %v3187 = vadd.f32 %v3123, 1.0
      %v3188 = vadd.f32 %v3124, 1.0
      %v3189 = vadd.f32 %v3125, 1.0
      %v3190 = vadd.f32 %v3126, 1.0
      %v3191 = vadd.f32 %v3127, 1.0
      %v3192 = vadd.f32 %v3128, 1.0
      %v3193 = vadd.f32 %v3129, 1.0
      %v3194 = vadd.f32 %v3130, 1.0
      %v3195 = vadd.f32 %v3131, 1.0
      %v3196 = vadd.f32 %v3132, 1.0
      %v3197 = vadd.f32 %v3133, 1.0
      %v3198 = vadd.f32 %v3134, 1.0
      %v3199 = vadd.f32 %v3135, 1.0
      %v3200 = vadd.f32 %v3136, 1.0
      %v3201 = vadd.f32 %v3137, 1.0
      %v3202 = vadd.f32 %v3138, 1.0
      %v3203 = vadd.f32 %v3139, 1.0
      %v3204 = vadd.f32 %v3140, 1.0
      %v3205 = vadd.f32 %v3141, 1.0
      %v3206 = vadd.f32 %v3142, 1.0
      %v3207 = vadd.f32 %v3143, 1.0
      %v3208 = vadd.f32 %v3144, 1.0
      %v3209 = vadd.f32 %v3145, 1.0
      %v3210 = vadd.f32 %v3146, 1.0
      %v3211 = vadd.f32 %v3147, 1.0
      %v3212 = vadd.f32 %v3148, 1.0
      %v3213 = vadd.f32 %v3149, 1.0
      %v3214 = vadd.f32 %v3150, 1.0
      %v3215 = vadd.f32 %v3151, 1.0
      %v3216 = vadd.f32 %v3152, 1.0
      %v3217 = vadd.f32 %v3153, 1.0
      %v3218 = vadd.f32 %v3154, 1.0
      %v3219 = vadd.f32 %v3155, 1.0
      %v3220 = vadd.f32 %v3156, 1.0
      %v3221 = vadd.f32 %v3157, 1.0
      %v3222 = vadd.f32 %v3158, 1.0
      %v3223 = vadd.f32 %v3159, 1.0
      %v3224 = vadd.f32 %v3160, 1.0
      %v3225 = vadd.f32 %v3161, 1.0
      %v3226 = vmul.f32 %v3162, 0.5
      %v3227 = vmul.f32 %v3163, 0.5
      %v3228 = vmul.f32 %v3164, 0.5
      %v3229 = vmul.f32 %v3165, 0.5
      %v3230 = vmul.f32 %v3166, 0.5
      %v3231 = vmul.f32 %v3167, 0.5
      %v3232 = vmul.f32 %v3168, 0.5
      %v3233 = vmul.f32 %v3169, 0.5
      %v3234 = vmul.f32 %v3170, 0.5
      %v3235 = vmul.f32 %v3171, 0.5
      %v3236 = vmul.f32 %v3172, 0.5
      %v3237 = vmul.f32 %v3173, 0.5
      %v3238 = vmul.f32 %v3174, 0.5
      %v3239 = vmul.f32 %v3175, 0.5
      %v3240 = vmul.f32 %v3176, 0.5
      %v3241 = vmul.f32 %v3177, 0.5
      %v3242 = vmul.f32 %v3178, 0.5
      %v3243 = vmul.f32 %v3179, 0.5
      %v3244 = vmul.f32 %v3180, 0.5
      %v3245 = vmul.f32 %v3181, 0.5
      %v3246 = vmul.f32 %v3182, 0.5
      %v3247 = vmul.f32 %v3183, 0.5
      %v3248 = vmul.f32 %v3184, 0.5
      %v3249 = vmul.f32 %v3185, 0.5
      %v3250 = vmul.f32 %v3186, 0.5
      %v3251 = vmul.f32 %v3187, 0.5
      %v3252 = vmul.f32 %v3188, 0.5
      %v3253 = vmul.f32 %v3189, 0.5
      %v3254 = vmul.f32 %v3190, 0.5
      %v3255 = vmul.f32 %v3191, 0.5
      %v3256 = vmul.f32 %v3192, 0.5
      %v3257 = vmul.f32 %v3193, 0.5
      %v3258 = vmul.f32 %v3194, 0.5
      %v3259 = vmul.f32 %v3195, 0.5
      %v3260 = vmul.f32 %v3196, 0.5
      %v3261 = vmul.f32 %v3197, 0.5
      %v3262 = vmul.f32 %v3198, 0.5
      %v3263 = vmul.f32 %v3199, 0.5
      %v3264 = vmul.f32 %v3200, 0.5
      %v3265 = vmul.f32 %v3201, 0.5
      %v3266 = vmul.f32 %v3202, 0.5
      %v3267 = vmul.f32 %v3203, 0.5
      %v3268 = vmul.f32 %v3204, 0.5
      %v3269 = vmul.f32 %v3205, 0.5
      %v3270 = vmul.f32 %v3206, 0.5
      %v3271 = vmul.f32 %v3207, 0.5
      %v3272 = vmul.f32 %v3208, 0.5
      %v3273 = vmul.f32 %v3209, 0.5
      %v3274 = vmul.f32 %v3210, 0.5
      %v3275 = vmul.f32 %v3211, 0.5
      %v3276 = vmul.f32 %v3212, 0.5
      %v3277 = vmul.f32 %v3213, 0.5
      %v3278 = vmul.f32 %v3214, 0.5
      %v3279 = vmul.f32 %v3215, 0.5
      %v3280 = vmul.f32 %v3216, 0.5
      %v3281 = vmul.f32 %v3217, 0.5
      %v3282 = vmul.f32 %v3218, 0.5
      %v3283 = vmul.f32 %v3219, 0.5
      %v3284 = vmul.f32 %v3220, 0.5
      %v3285 = vmul.f32 %v3221, 0.5
      %v3286 = vmul.f32 %v3222, 0.5
      %v3287 = vmul.f32 %v3223, 0.5
      %v3288 = vmul.f32 %v3224, 0.5
      %v3289 = vmul.f32 %v3225, 0.5
      %v3290 = vmul.f32 %v2587, %v3226
      %v3291 = vmul.f32 %v2589, %v3227
      %v3292 = vmul.f32 %v2700, %v3228
      %v3293 = vmul.f32 %v2702, %v3229
      %v3294 = vmul.f32 %v2591, %v3230
      %v3295 = vmul.f32 %v2593, %v3231
      %v3296 = vmul.f32 %v2704, %v3232
      %v3297 = vmul.f32 %v2706, %v3233
      %v3298 = vmul.f32 %v2597, %v3234
      %v3299 = vmul.f32 %v2599, %v3235
      %v3300 = vmul.f32 %v2710, %v3236
      %v3301 = vmul.f32 %v2712, %v3237
      %v3302 = vmul.f32 %v2601, %v3238
      %v3303 = vmul.f32 %v2603, %v3239
      %v3304 = vmul.f32 %v2714, %v3240
      %v3305 = vmul.f32 %v2716, %v3241
      %v3306 = vmul.f32 %v2607, %v3242
      %v3307 = vmul.f32 %v2609, %v3243
      %v3308 = vmul.f32 %v2720, %v3244
      %v3309 = vmul.f32 %v2722, %v3245
      %v3310 = vmul.f32 %v2611, %v3246
      %v3311 = vmul.f32 %v2613, %v3247
      %v3312 = vmul.f32 %v2724, %v3248
      %v3313 = vmul.f32 %v2726, %v3249
      %v3314 = vmul.f32 %v2617, %v3250
      %v3315 = vmul.f32 %v2619, %v3251
      %v3316 = vmul.f32 %v2730, %v3252
      %v3317 = vmul.f32 %v2732, %v3253
      %v3318 = vmul.f32 %v2621, %v3254
      %v3319 = vmul.f32 %v2623, %v3255
      %v3320 = vmul.f32 %v2734, %v3256
      %v3321 = vmul.f32 %v2736, %v3257
      %v3322 = vmul.f32 %v2627, %v3258
      %v3323 = vmul.f32 %v2629, %v3259
      %v3324 = vmul.f32 %v2740, %v3260
      %v3325 = vmul.f32 %v2742, %v3261
      %v3326 = vmul.f32 %v2631, %v3262
      %v3327 = vmul.f32 %v2633, %v3263
      %v3328 = vmul.f32 %v2744, %v3264
      %v3329 = vmul.f32 %v2746, %v3265
      %v3330 = vmul.f32 %v2637, %v3266
      %v3331 = vmul.f32 %v2639, %v3267
      %v3332 = vmul.f32 %v2750, %v3268
      %v3333 = vmul.f32 %v2752, %v3269
      %v3334 = vmul.f32 %v2641, %v3270
      %v3335 = vmul.f32 %v2643, %v3271
      %v3336 = vmul.f32 %v2754, %v3272
      %v3337 = vmul.f32 %v2756, %v3273
      %v3338 = vmul.f32 %v2647, %v3274
      %v3339 = vmul.f32 %v2649, %v3275
      %v3340 = vmul.f32 %v2760, %v3276
      %v3341 = vmul.f32 %v2762, %v3277
      %v3342 = vmul.f32 %v2651, %v3278
      %v3343 = vmul.f32 %v2653, %v3279
      %v3344 = vmul.f32 %v2764, %v3280
      %v3345 = vmul.f32 %v2766, %v3281
      %v3346 = vmul.f32 %v2657, %v3282
      %v3347 = vmul.f32 %v2659, %v3283
      %v3348 = vmul.f32 %v2770, %v3284
      %v3349 = vmul.f32 %v2772, %v3285
      %v3350 = vmul.f32 %v2661, %v3286
      %v3351 = vmul.f32 %v2663, %v3287
      %v3352 = vmul.f32 %v2774, %v3288
      %v3353 = vmul.f32 %v2776, %v3289
      %v3354 = vpack.c.bf16 %v3294, %v3290
      %v3355 = vpack.c.bf16 %v3295, %v3291
      %v3356 = vpack.c.bf16 %v3296, %v3292
      %v3357 = vpack.c.bf16 %v3297, %v3293
      %v3358 = vpack.c.bf16 %v3302, %v3298
      %v3359 = vpack.c.bf16 %v3303, %v3299
      %v3360 = vpack.c.bf16 %v3304, %v3300
      %v3361 = vpack.c.bf16 %v3305, %v3301
      %v3362 = vpack.c.bf16 %v3310, %v3306
      %v3363 = vpack.c.bf16 %v3311, %v3307
      %v3364 = vpack.c.bf16 %v3312, %v3308
      %v3365 = vpack.c.bf16 %v3313, %v3309
      %v3366 = vpack.c.bf16 %v3318, %v3314
      %v3367 = vpack.c.bf16 %v3319, %v3315
      %v3368 = vpack.c.bf16 %v3320, %v3316
      %v3369 = vpack.c.bf16 %v3321, %v3317
      %v3370 = vpack.c.bf16 %v3326, %v3322
      %v3371 = vpack.c.bf16 %v3327, %v3323
      %v3372 = vpack.c.bf16 %v3328, %v3324
      %v3373 = vpack.c.bf16 %v3329, %v3325
      %v3374 = vpack.c.bf16 %v3334, %v3330
      %v3375 = vpack.c.bf16 %v3335, %v3331
      %v3376 = vpack.c.bf16 %v3336, %v3332
      %v3377 = vpack.c.bf16 %v3337, %v3333
      %v3378 = vpack.c.bf16 %v3342, %v3338
      %v3379 = vpack.c.bf16 %v3343, %v3339
      %v3380 = vpack.c.bf16 %v3344, %v3340
      %v3381 = vpack.c.bf16 %v3345, %v3341
      %v3382 = vpack.c.bf16 %v3350, %v3346
      %v3383 = vpack.c.bf16 %v3351, %v3347
      %v3384 = vpack.c.bf16 %v3352, %v3348
      %v3385 = vpack.c.bf16 %v3353, %v3349
      %v3386 = vld [vmem:[%s11] sm:$0xf]
      %v3387 = vld [vmem:[%s11 + $0x4] sm:$0xf]
      %v3388 = vld [vmem:[%s11 + $0x8] sm:$0xf]
      %v3389 = vld [vmem:[%s11 + $0xc] sm:$0xf]
      %v3390 = vld [vmem:[%s11 + $0x10] sm:$0xf]
      %v3391 = vld [vmem:[%s11 + $0x14] sm:$0xf]
      %v3392 = vld [vmem:[%s11 + $0x18] sm:$0xf]
      %v3393 = vld [vmem:[%s11 + $0x1c] sm:$0xf]
      %v3394 = vld [vmem:[%s11 + $0x20] sm:$0xf]
      %v3395 = vld [vmem:[%s11 + $0x24] sm:$0xf]
      %v3396 = vld [vmem:[%s11 + $0x28] sm:$0xf]
      %v3397 = vld [vmem:[%s11 + $0x2c] sm:$0xf]
      %v3398 = vld [vmem:[%s11 + $0x30] sm:$0xf]
      %v3399 = vld [vmem:[%s11 + $0x34] sm:$0xf]
      %v3400 = vld [vmem:[%s11 + $0x38] sm:$0xf]
      %v3401 = vld [vmem:[%s11 + $0x3c] sm:$0xf]
      %v3402 = vld [vmem:[%s11 + $0x40] sm:$0xf]
      %v3403 = vld [vmem:[%s11 + $0x44] sm:$0xf]
      %v3404 = vld [vmem:[%s11 + $0x48] sm:$0xf]
      %v3405 = vld [vmem:[%s11 + $0x4c] sm:$0xf]
      %v3406 = vld [vmem:[%s11 + $0x50] sm:$0xf]
      %v3407 = vld [vmem:[%s11 + $0x54] sm:$0xf]
      %v3408 = vld [vmem:[%s11 + $0x58] sm:$0xf]
      %v3409 = vld [vmem:[%s11 + $0x5c] sm:$0xf]
      %v3410 = vld [vmem:[%s11 + $0x60] sm:$0xf]
      %v3411 = vld [vmem:[%s11 + $0x64] sm:$0xf]
      %v3412 = vld [vmem:[%s11 + $0x68] sm:$0xf]
      %v3413 = vld [vmem:[%s11 + $0x6c] sm:$0xf]
      %v3414 = vld [vmem:[%s11 + $0x70] sm:$0xf]
      %v3415 = vld [vmem:[%s11 + $0x74] sm:$0xf]
      %v3416 = vld [vmem:[%s11 + $0x78] sm:$0xf]
      %v3417 = vld [vmem:[%s11 + $0x7c] sm:$0xf]
      %v3418 = vld [vmem:[%s11 + $0x80] sm:$0xf]
      %v3419 = vld [vmem:[%s11 + $0x84] sm:$0xf]
      %v3420 = vld [vmem:[%s11 + $0x88] sm:$0xf]
      %v3421 = vld [vmem:[%s11 + $0x8c] sm:$0xf]
      %v3422 = vld [vmem:[%s11 + $0x90] sm:$0xf]
      %v3423 = vld [vmem:[%s11 + $0x94] sm:$0xf]
      %v3424 = vld [vmem:[%s11 + $0x98] sm:$0xf]
      %v3425 = vld [vmem:[%s11 + $0x9c] sm:$0xf]
      %v3426 = vld [vmem:[%s11 + $0xa0] sm:$0xf]
      %v3427 = vld [vmem:[%s11 + $0xa4] sm:$0xf]
      %v3428 = vld [vmem:[%s11 + $0xa8] sm:$0xf]
      %v3429 = vld [vmem:[%s11 + $0xac] sm:$0xf]
      %v3430 = vld [vmem:[%s11 + $0xb0] sm:$0xf]
      %v3431 = vld [vmem:[%s11 + $0xb4] sm:$0xf]
      %v3432 = vld [vmem:[%s11 + $0xb8] sm:$0xf]
      %v3433 = vld [vmem:[%s11 + $0xbc] sm:$0xf]
      %v3434 = vld [vmem:[%s11 + $0xc0] sm:$0xf]
      %v3435 = vld [vmem:[%s11 + $0xc4] sm:$0xf]
      %v3436 = vld [vmem:[%s11 + $0xc8] sm:$0xf]
      %v3437 = vld [vmem:[%s11 + $0xcc] sm:$0xf]
      %v3438 = vld [vmem:[%s11 + $0xd0] sm:$0xf]
      %v3439 = vld [vmem:[%s11 + $0xd4] sm:$0xf]
      %v3440 = vld [vmem:[%s11 + $0xd8] sm:$0xf]
      %v3441 = vld [vmem:[%s11 + $0xdc] sm:$0xf]
      %v3442 = vld [vmem:[%s11 + $0xe0] sm:$0xf]
      %v3443 = vld [vmem:[%s11 + $0xe4] sm:$0xf]
      %v3444 = vld [vmem:[%s11 + $0xe8] sm:$0xf]
      %v3445 = vld [vmem:[%s11 + $0xec] sm:$0xf]
      %v3446 = vld [vmem:[%s11 + $0xf0] sm:$0xf]
      %v3447 = vld [vmem:[%s11 + $0xf4] sm:$0xf]
      %v3448 = vld [vmem:[%s11 + $0xf8] sm:$0xf]
      %v3449 = vld [vmem:[%s11 + $0xfc] sm:$0xf]
      %v3450 = vld [vmem:[%s12] sm:$0x1]
      %v3452 = vlaneseq
      %v3453 = vshrl.u32 %v3452, 7
      %v3454 = vsub.s32 0, %v3453
      %v3455 = vrot.slane %v3450, %v3454
      %v3521 = vunpack.c.l.b16 %v3386
      %v3522 = vunpack.c.l.b16 %v3387
      %v3523 = vunpack.c.l.b16 %v3388
      %v3524 = vunpack.c.l.b16 %v3389
      %v3525 = vunpack.c.l.b16 %v3390
      %v3526 = vunpack.c.l.b16 %v3391
      %v3527 = vunpack.c.l.b16 %v3392
      %v3528 = vunpack.c.l.b16 %v3393
      %v3529 = vunpack.c.l.b16 %v3394
      %v3530 = vunpack.c.l.b16 %v3395
      %v3531 = vunpack.c.l.b16 %v3396
      %v3532 = vunpack.c.l.b16 %v3397
      %v3533 = vunpack.c.l.b16 %v3398
      %v3534 = vunpack.c.l.b16 %v3399
      %v3535 = vunpack.c.l.b16 %v3400
      %v3536 = vunpack.c.l.b16 %v3401
      %v3537 = vunpack.c.l.b16 %v3402
      %v3538 = vunpack.c.l.b16 %v3403
      %v3539 = vunpack.c.l.b16 %v3404
      %v3540 = vunpack.c.l.b16 %v3405
      %v3541 = vunpack.c.l.b16 %v3406
      %v3542 = vunpack.c.l.b16 %v3407
      %v3543 = vunpack.c.l.b16 %v3408
      %v3544 = vunpack.c.l.b16 %v3409
      %v3545 = vunpack.c.l.b16 %v3410
      %v3546 = vunpack.c.l.b16 %v3411
      %v3547 = vunpack.c.l.b16 %v3412
      %v3548 = vunpack.c.l.b16 %v3413
      %v3549 = vunpack.c.l.b16 %v3414
      %v3550 = vunpack.c.l.b16 %v3415
      %v3551 = vunpack.c.l.b16 %v3416
      %v3552 = vunpack.c.l.b16 %v3417
      %v3553 = vunpack.c.l.b16 %v3418
      %v3554 = vunpack.c.l.b16 %v3419
      %v3555 = vunpack.c.l.b16 %v3420
      %v3556 = vunpack.c.l.b16 %v3421
      %v3557 = vunpack.c.l.b16 %v3422
      %v3558 = vunpack.c.l.b16 %v3423
      %v3559 = vunpack.c.l.b16 %v3424
      %v3560 = vunpack.c.l.b16 %v3425
      %v3561 = vunpack.c.l.b16 %v3426
      %v3562 = vunpack.c.l.b16 %v3427
      %v3563 = vunpack.c.l.b16 %v3428
      %v3564 = vunpack.c.l.b16 %v3429
      %v3565 = vunpack.c.l.b16 %v3430
      %v3566 = vunpack.c.l.b16 %v3431
      %v3567 = vunpack.c.l.b16 %v3432
      %v3568 = vunpack.c.l.b16 %v3433
      %v3569 = vunpack.c.l.b16 %v3434
      %v3570 = vunpack.c.l.b16 %v3435
      %v3571 = vunpack.c.l.b16 %v3436
      %v3572 = vunpack.c.l.b16 %v3437
      %v3573 = vunpack.c.l.b16 %v3438
      %v3574 = vunpack.c.l.b16 %v3439
      %v3575 = vunpack.c.l.b16 %v3440
      %v3576 = vunpack.c.l.b16 %v3441
      %v3577 = vunpack.c.l.b16 %v3442
      %v3578 = vunpack.c.l.b16 %v3443
      %v3579 = vunpack.c.l.b16 %v3444
      %v3580 = vunpack.c.l.b16 %v3445
      %v3581 = vunpack.c.l.b16 %v3446
      %v3582 = vunpack.c.l.b16 %v3447
      %v3583 = vunpack.c.l.b16 %v3448
      %v3584 = vunpack.c.l.b16 %v3449
      %v3585 = vpack.c.b16 %v3522, %v3521
      %v3586 = vpack.c.b16 %v3524, %v3523
      %v3587 = vpack.c.b16 %v3526, %v3525
      %v3588 = vpack.c.b16 %v3528, %v3527
      %v3589 = vpack.c.b16 %v3530, %v3529
      %v3590 = vpack.c.b16 %v3532, %v3531
      %v3591 = vpack.c.b16 %v3534, %v3533
      %v3592 = vpack.c.b16 %v3536, %v3535
      %v3593 = vpack.c.b16 %v3538, %v3537
      %v3594 = vpack.c.b16 %v3540, %v3539
      %v3595 = vpack.c.b16 %v3542, %v3541
      %v3596 = vpack.c.b16 %v3544, %v3543
      %v3597 = vpack.c.b16 %v3546, %v3545
      %v3598 = vpack.c.b16 %v3548, %v3547
      %v3599 = vpack.c.b16 %v3550, %v3549
      %v3600 = vpack.c.b16 %v3552, %v3551
      %v3601 = vpack.c.b16 %v3554, %v3553
      %v3602 = vpack.c.b16 %v3556, %v3555
      %v3603 = vpack.c.b16 %v3558, %v3557
      %v3604 = vpack.c.b16 %v3560, %v3559
      %v3605 = vpack.c.b16 %v3562, %v3561
      %v3606 = vpack.c.b16 %v3564, %v3563
      %v3607 = vpack.c.b16 %v3566, %v3565
      %v3608 = vpack.c.b16 %v3568, %v3567
      %v3609 = vpack.c.b16 %v3570, %v3569
      %v3610 = vpack.c.b16 %v3572, %v3571
      %v3611 = vpack.c.b16 %v3574, %v3573
      %v3612 = vpack.c.b16 %v3576, %v3575
      %v3613 = vpack.c.b16 %v3578, %v3577
      %v3614 = vpack.c.b16 %v3580, %v3579
      %v3615 = vpack.c.b16 %v3582, %v3581
      %v3616 = vpack.c.b16 %v3584, %v3583
      %3649 = vmatprep.subr.bf16.mxu0 0
      %3650 = vmatpush1.bf16.msra.mxu0 %v3585
      %3651 = vmatprep.subr.bf16.mxu0 0
      %3652 = vmatpush1.bf16.msra.mxu0 %v3586
      %3653 = vmatprep.subr.bf16.mxu0 0
      %3654 = vmatpush1.bf16.msra.mxu0 %v3587
      %3655 = vmatprep.subr.bf16.mxu0 0
      %3656 = vmatpush1.bf16.msra.mxu0 %v3588
      %3657 = vmatprep.subr.bf16.mxu0 0
      %3658 = vmatpush1.bf16.msra.mxu0 %v3589
      %3659 = vmatprep.subr.bf16.mxu0 0
      %3660 = vmatpush1.bf16.msra.mxu0 %v3590
      %3661 = vmatprep.subr.bf16.mxu0 0
      %3662 = vmatpush1.bf16.msra.mxu0 %v3591
      %3663 = vmatprep.subr.bf16.mxu0 0
      %3664 = vmatpush1.bf16.msra.mxu0 %v3592
      %3665 = vmatprep.subr.bf16.mxu0 0
      %3666 = vmatpush1.bf16.msra.mxu0 %v3593
      %3667 = vmatprep.subr.bf16.mxu0 0
      %3668 = vmatpush1.bf16.msra.mxu0 %v3594
      %3669 = vmatprep.subr.bf16.mxu0 0
      %3670 = vmatpush1.bf16.msra.mxu0 %v3595
      %3671 = vmatprep.subr.bf16.mxu0 0
      %3672 = vmatpush1.bf16.msra.mxu0 %v3596
      %3673 = vmatprep.subr.bf16.mxu0 0
      %3674 = vmatpush1.bf16.msra.mxu0 %v3597
      %3675 = vmatprep.subr.bf16.mxu0 0
      %3676 = vmatpush1.bf16.msra.mxu0 %v3598
      %3677 = vmatprep.subr.bf16.mxu0 0
      %3678 = vmatpush1.bf16.msra.mxu0 %v3599
      %3679 = vmatprep.subr.bf16.mxu0 0
      %3680 = vmatpush1.bf16.msra.mxu0 %v3600
      %3681 = vmatprep.mubr.bf16.mxu0 %v3355
      %3682 = vmatmul.mubr.bf16.gmra.mrb[0].mxu0 %v3354
      %v3683 = vpop.f32.mrb[0].mxu0
      %v3684 = vadd.f32 %v3455, %v3683
      %v3685 = vpop.f32.mrb[0].mxu0
      %v3686 = vpop.f32.mrb[0].mxu0
      %v3687 = vadd.f32 %v3455, %v3686
      %v3688 = vpop.f32.mrb[0].mxu0
      %3689 = vmatprep.mubr.bf16.mxu0 %v3359
      %3690 = vmatmul.mubr.bf16.gmra.mrb[0].mxu0 %v3358
      %v3691 = vpop.f32.mrb[0].mxu0
      %v3692 = vadd.f32 %v3455, %v3691
      %v3693 = vpop.f32.mrb[0].mxu0
      %v3694 = vpop.f32.mrb[0].mxu0
      %v3695 = vadd.f32 %v3455, %v3694
      %v3696 = vpop.f32.mrb[0].mxu0
      %3697 = vmatprep.mubr.bf16.mxu0 %v3363
      %3698 = vmatmul.mubr.bf16.gmra.mrb[0].mxu0 %v3362
      %v3699 = vpop.f32.mrb[0].mxu0
      %v3700 = vadd.f32 %v3455, %v3699
      %v3701 = vpop.f32.mrb[0].mxu0
      %v3702 = vpop.f32.mrb[0].mxu0
      %v3703 = vadd.f32 %v3455, %v3702
      %v3704 = vpop.f32.mrb[0].mxu0
      %3705 = vmatprep.mubr.bf16.mxu0 %v3367
      %3706 = vmatmul.mubr.bf16.gmra.mrb[0].mxu0 %v3366
      %v3707 = vpop.f32.mrb[0].mxu0
      %v3708 = vadd.f32 %v3455, %v3707
      %v3709 = vpop.f32.mrb[0].mxu0
      %v3710 = vpop.f32.mrb[0].mxu0
      %v3711 = vadd.f32 %v3455, %v3710
      %v3712 = vpop.f32.mrb[0].mxu0
      %3713 = vmatprep.mubr.bf16.mxu0 %v3371
      %3714 = vmatmul.mubr.bf16.gmra.mrb[0].mxu0 %v3370
      %v3715 = vpop.f32.mrb[0].mxu0
      %v3716 = vadd.f32 %v3455, %v3715
      %v3717 = vpop.f32.mrb[0].mxu0
      %v3718 = vpop.f32.mrb[0].mxu0
      %v3719 = vadd.f32 %v3455, %v3718
      %v3720 = vpop.f32.mrb[0].mxu0
      %3721 = vmatprep.mubr.bf16.mxu0 %v3375
      %3722 = vmatmul.mubr.bf16.gmra.mrb[0].mxu0 %v3374
      %v3723 = vpop.f32.mrb[0].mxu0
      %v3724 = vadd.f32 %v3455, %v3723
      %v3725 = vpop.f32.mrb[0].mxu0
      %v3726 = vpop.f32.mrb[0].mxu0
      %v3727 = vadd.f32 %v3455, %v3726
      %v3728 = vpop.f32.mrb[0].mxu0
      %3729 = vmatprep.mubr.bf16.mxu0 %v3379
      %3730 = vmatmul.mubr.bf16.gmra.mrb[0].mxu0 %v3378
      %v3731 = vpop.f32.mrb[0].mxu0
      %v3732 = vadd.f32 %v3455, %v3731
      %v3733 = vpop.f32.mrb[0].mxu0
      %v3734 = vpop.f32.mrb[0].mxu0
      %v3735 = vadd.f32 %v3455, %v3734
      %v3736 = vpop.f32.mrb[0].mxu0
      %3737 = vmatprep.mubr.bf16.mxu0 %v3383
      %3738 = vmatmul.mubr.bf16.gmra.mrb[0].mxu0 %v3382
      %v3739 = vpop.f32.mrb[0].mxu0
      %v3740 = vadd.f32 %v3455, %v3739
      %v3741 = vpop.f32.mrb[0].mxu0
      %v3742 = vpop.f32.mrb[0].mxu0
      %v3743 = vadd.f32 %v3455, %v3742
      %v3744 = vpop.f32.mrb[0].mxu0
      %3745 = vdwg.mxu0
      %3746 = vmatprep.subr.bf16.mxu0 0
      %3747 = vmatpush1.bf16.msra.mxu0 %v3601
      %3748 = vmatprep.subr.bf16.mxu0 0
      %3749 = vmatpush1.bf16.msra.mxu0 %v3602
      %3750 = vmatprep.subr.bf16.mxu0 0
      %3751 = vmatpush1.bf16.msra.mxu0 %v3603
      %3752 = vmatprep.subr.bf16.mxu0 0
      %3753 = vmatpush1.bf16.msra.mxu0 %v3604
      %3754 = vmatprep.subr.bf16.mxu0 0
      %3755 = vmatpush1.bf16.msra.mxu0 %v3605
      %3756 = vmatprep.subr.bf16.mxu0 0
      %3757 = vmatpush1.bf16.msra.mxu0 %v3606
      %3758 = vmatprep.subr.bf16.mxu0 0
      %3759 = vmatpush1.bf16.msra.mxu0 %v3607
      %3760 = vmatprep.subr.bf16.mxu0 0
      %3761 = vmatpush1.bf16.msra.mxu0 %v3608
      %3762 = vmatprep.subr.bf16.mxu0 0
      %3763 = vmatpush1.bf16.msra.mxu0 %v3609
      %3764 = vmatprep.subr.bf16.mxu0 0
      %3765 = vmatpush1.bf16.msra.mxu0 %v3610
      %3766 = vmatprep.subr.bf16.mxu0 0
      %3767 = vmatpush1.bf16.msra.mxu0 %v3611
      %3768 = vmatprep.subr.bf16.mxu0 0
      %3769 = vmatpush1.bf16.msra.mxu0 %v3612
      %3770 = vmatprep.subr.bf16.mxu0 0
      %3771 = vmatpush1.bf16.msra.mxu0 %v3613
      %3772 = vmatprep.subr.bf16.mxu0 0
      %3773 = vmatpush1.bf16.msra.mxu0 %v3614
      %3774 = vmatprep.subr.bf16.mxu0 0
      %3775 = vmatpush1.bf16.msra.mxu0 %v3615
      %3776 = vmatprep.subr.bf16.mxu0 0
      %3777 = vmatpush1.bf16.msra.mxu0 %v3616
      %3778 = vmatprep.mubr.bf16.mxu0 %v3357
      %3779 = vmatmul.mubr.bf16.gmra.mrb[0].mxu0 %v3356
      %v3780 = vpop.f32.mrb[0].mxu0
      %v3781 = vadd.f32 %v3684, %v3780
      %v3782 = vpop.f32.mrb[0].mxu0
      %v3783 = vpop.f32.mrb[0].mxu0
      %v3784 = vadd.f32 %v3687, %v3783
      %v3785 = vpop.f32.mrb[0].mxu0
      %3786 = vmatprep.mubr.bf16.mxu0 %v3361
      %3787 = vmatmul.mubr.bf16.gmra.mrb[0].mxu0 %v3360
      %v3788 = vpop.f32.mrb[0].mxu0
      %v3789 = vadd.f32 %v3692, %v3788
      %v3790 = vpop.f32.mrb[0].mxu0
      %v3791 = vpop.f32.mrb[0].mxu0
      %v3792 = vadd.f32 %v3695, %v3791
      %v3793 = vpop.f32.mrb[0].mxu0
      %3794 = vmatprep.mubr.bf16.mxu0 %v3365
      %3795 = vmatmul.mubr.bf16.gmra.mrb[0].mxu0 %v3364
      %v3796 = vpop.f32.mrb[0].mxu0
      %v3797 = vadd.f32 %v3700, %v3796
      %v3798 = vpop.f32.mrb[0].mxu0
      %v3799 = vpop.f32.mrb[0].mxu0
      %v3800 = vadd.f32 %v3703, %v3799
      %v3801 = vpop.f32.mrb[0].mxu0
      %3802 = vmatprep.mubr.bf16.mxu0 %v3369
      %3803 = vmatmul.mubr.bf16.gmra.mrb[0].mxu0 %v3368
      %v3804 = vpop.f32.mrb[0].mxu0
      %v3805 = vadd.f32 %v3708, %v3804
      %v3806 = vpop.f32.mrb[0].mxu0
      %v3807 = vpop.f32.mrb[0].mxu0
      %v3808 = vadd.f32 %v3711, %v3807
      %v3809 = vpop.f32.mrb[0].mxu0
      %3810 = vmatprep.mubr.bf16.mxu0 %v3373
      %3811 = vmatmul.mubr.bf16.gmra.mrb[0].mxu0 %v3372
      %v3812 = vpop.f32.mrb[0].mxu0
      %v3813 = vadd.f32 %v3716, %v3812
      %v3814 = vpop.f32.mrb[0].mxu0
      %v3815 = vpop.f32.mrb[0].mxu0
      %v3816 = vadd.f32 %v3719, %v3815
      %v3817 = vpop.f32.mrb[0].mxu0
      %3818 = vmatprep.mubr.bf16.mxu0 %v3377
      %3819 = vmatmul.mubr.bf16.gmra.mrb[0].mxu0 %v3376
      %v3820 = vpop.f32.mrb[0].mxu0
      %v3821 = vadd.f32 %v3724, %v3820
      %v3822 = vpop.f32.mrb[0].mxu0
      %v3823 = vpop.f32.mrb[0].mxu0
      %v3824 = vadd.f32 %v3727, %v3823
      %v3825 = vpop.f32.mrb[0].mxu0
      %3826 = vmatprep.mubr.bf16.mxu0 %v3381
      %3827 = vmatmul.mubr.bf16.gmra.mrb[0].mxu0 %v3380
      %v3828 = vpop.f32.mrb[0].mxu0
      %v3829 = vadd.f32 %v3732, %v3828
      %v3830 = vpop.f32.mrb[0].mxu0
      %v3831 = vpop.f32.mrb[0].mxu0
      %v3832 = vadd.f32 %v3735, %v3831
      %v3833 = vpop.f32.mrb[0].mxu0
      %3834 = vmatprep.mubr.bf16.mxu0 %v3385
      %3835 = vmatmul.mubr.bf16.gmra.mrb[0].mxu0 %v3384
      %v3836 = vpop.f32.mrb[0].mxu0
      %v3837 = vadd.f32 %v3740, %v3836
      %v3838 = vpop.f32.mrb[0].mxu0
      %v3839 = vpop.f32.mrb[0].mxu0
      %v3840 = vadd.f32 %v3743, %v3839
      %v3841 = vpop.f32.mrb[0].mxu0
      %3842 = vdwg.mxu0
      %v3843 = vadd.f32 %v2314, %v3781
      %v3844 = vadd.f32 %v2315, %v3784
      %v3845 = vadd.f32 %v2316, %v3789
      %v3846 = vadd.f32 %v2317, %v3792
      %v3847 = vadd.f32 %v2318, %v3797
      %v3848 = vadd.f32 %v2319, %v3800
      %v3849 = vadd.f32 %v2320, %v3805
      %v3850 = vadd.f32 %v2321, %v3808
      %v3851 = vadd.f32 %v2322, %v3813
      %v3852 = vadd.f32 %v2323, %v3816
      %v3853 = vadd.f32 %v2324, %v3821
      %v3854 = vadd.f32 %v2325, %v3824
      %v3855 = vadd.f32 %v2326, %v3829
      %v3856 = vadd.f32 %v2327, %v3832
      %v3857 = vadd.f32 %v2328, %v3837
      %v3858 = vadd.f32 %v2329, %v3840
      %3859 = vadd.xlane.f32.xlu0 %v3843
      %v3860 = vpop.xlane.xlu0 %3859
      %3861 = vadd.xlane.f32.xlu0 %v3844
      %v3862 = vpop.xlane.xlu0 %3861
      %3863 = vadd.xlane.f32.xlu0 %v3845
      %v3864 = vpop.xlane.xlu0 %3863
      %3865 = vadd.xlane.f32.xlu0 %v3846
      %v3866 = vpop.xlane.xlu0 %3865
      %3867 = vadd.xlane.f32.xlu0 %v3847
      %v3868 = vpop.xlane.xlu0 %3867
      %3869 = vadd.xlane.f32.xlu0 %v3848
      %v3870 = vpop.xlane.xlu0 %3869
      %3871 = vadd.xlane.f32.xlu0 %v3849
      %v3872 = vpop.xlane.xlu0 %3871
      %3873 = vadd.xlane.f32.xlu0 %v3850
      %v3874 = vpop.xlane.xlu0 %3873
      %3875 = vadd.xlane.f32.xlu0 %v3851
      %v3876 = vpop.xlane.xlu0 %3875
      %3877 = vadd.xlane.f32.xlu0 %v3852
      %v3878 = vpop.xlane.xlu0 %3877
      %3879 = vadd.xlane.f32.xlu0 %v3853
      %v3880 = vpop.xlane.xlu0 %3879
      %3881 = vadd.xlane.f32.xlu0 %v3854
      %v3882 = vpop.xlane.xlu0 %3881
      %3883 = vadd.xlane.f32.xlu0 %v3855
      %v3884 = vpop.xlane.xlu0 %3883
      %3885 = vadd.xlane.f32.xlu0 %v3856
      %v3886 = vpop.xlane.xlu0 %3885
      %3887 = vadd.xlane.f32.xlu0 %v3857
      %v3888 = vpop.xlane.xlu0 %3887
      %3889 = vadd.xlane.f32.xlu0 %v3858
      %v3890 = vpop.xlane.xlu0 %3889
      %v3891 = vmul.f32 %v3860, %v837
      %v3892 = vmul.f32 %v3862, %v837
      %v3893 = vmul.f32 %v3864, %v837
      %v3894 = vmul.f32 %v3866, %v837
      %v3895 = vmul.f32 %v3868, %v837
      %v3896 = vmul.f32 %v3870, %v837
      %v3897 = vmul.f32 %v3872, %v837
      %v3898 = vmul.f32 %v3874, %v837
      %v3899 = vmul.f32 %v3876, %v837
      %v3900 = vmul.f32 %v3878, %v837
      %v3901 = vmul.f32 %v3880, %v837
      %v3902 = vmul.f32 %v3882, %v837
      %v3903 = vmul.f32 %v3884, %v837
      %v3904 = vmul.f32 %v3886, %v837
      %v3905 = vmul.f32 %v3888, %v837
      %v3906 = vmul.f32 %v3890, %v837
      %v3907 = vmul.f32 %v3843, %v3843
      %v3908 = vmul.f32 %v3844, %v3844
      %v3909 = vmul.f32 %v3845, %v3845
      %v3910 = vmul.f32 %v3846, %v3846
      %v3911 = vmul.f32 %v3847, %v3847
      %v3912 = vmul.f32 %v3848, %v3848
      %v3913 = vmul.f32 %v3849, %v3849
      %v3914 = vmul.f32 %v3850, %v3850
      %v3915 = vmul.f32 %v3851, %v3851
      %v3916 = vmul.f32 %v3852, %v3852
      %v3917 = vmul.f32 %v3853, %v3853
      %v3918 = vmul.f32 %v3854, %v3854
      %v3919 = vmul.f32 %v3855, %v3855
      %v3920 = vmul.f32 %v3856, %v3856
      %v3921 = vmul.f32 %v3857, %v3857
      %v3922 = vmul.f32 %v3858, %v3858
      %3923 = vadd.xlane.f32.xlu0 %v3907
      %v3924 = vpop.xlane.xlu0 %3923
      %3925 = vadd.xlane.f32.xlu0 %v3908
      %v3926 = vpop.xlane.xlu0 %3925
      %3927 = vadd.xlane.f32.xlu0 %v3909
      %v3928 = vpop.xlane.xlu0 %3927
      %3929 = vadd.xlane.f32.xlu0 %v3910
      %v3930 = vpop.xlane.xlu0 %3929
      %3931 = vadd.xlane.f32.xlu0 %v3911
      %v3932 = vpop.xlane.xlu0 %3931
      %3933 = vadd.xlane.f32.xlu0 %v3912
      %v3934 = vpop.xlane.xlu0 %3933
      %3935 = vadd.xlane.f32.xlu0 %v3913
      %v3936 = vpop.xlane.xlu0 %3935
      %3937 = vadd.xlane.f32.xlu0 %v3914
      %v3938 = vpop.xlane.xlu0 %3937
      %3939 = vadd.xlane.f32.xlu0 %v3915
      %v3940 = vpop.xlane.xlu0 %3939
      %3941 = vadd.xlane.f32.xlu0 %v3916
      %v3942 = vpop.xlane.xlu0 %3941
      %3943 = vadd.xlane.f32.xlu0 %v3917
      %v3944 = vpop.xlane.xlu0 %3943
      %3945 = vadd.xlane.f32.xlu0 %v3918
      %v3946 = vpop.xlane.xlu0 %3945
      %3947 = vadd.xlane.f32.xlu0 %v3919
      %v3948 = vpop.xlane.xlu0 %3947
      %3949 = vadd.xlane.f32.xlu0 %v3920
      %v3950 = vpop.xlane.xlu0 %3949
      %3951 = vadd.xlane.f32.xlu0 %v3921
      %v3952 = vpop.xlane.xlu0 %3951
      %3953 = vadd.xlane.f32.xlu0 %v3922
      %v3954 = vpop.xlane.xlu0 %3953
      %v3955 = vmul.f32 %v3924, %v837
      %v3956 = vmul.f32 %v3926, %v837
      %v3957 = vmul.f32 %v3928, %v837
      %v3958 = vmul.f32 %v3930, %v837
      %v3959 = vmul.f32 %v3932, %v837
      %v3960 = vmul.f32 %v3934, %v837
      %v3961 = vmul.f32 %v3936, %v837
      %v3962 = vmul.f32 %v3938, %v837
      %v3963 = vmul.f32 %v3940, %v837
      %v3964 = vmul.f32 %v3942, %v837
      %v3965 = vmul.f32 %v3944, %v837
      %v3966 = vmul.f32 %v3946, %v837
      %v3967 = vmul.f32 %v3948, %v837
      %v3968 = vmul.f32 %v3950, %v837
      %v3969 = vmul.f32 %v3952, %v837
      %v3970 = vmul.f32 %v3954, %v837
      %v3971 = vmul.f32 %v3891, %v3891
      %v3972 = vmul.f32 %v3892, %v3892
      %v3973 = vmul.f32 %v3893, %v3893
      %v3974 = vmul.f32 %v3894, %v3894
      %v3975 = vmul.f32 %v3895, %v3895
      %v3976 = vmul.f32 %v3896, %v3896
      %v3977 = vmul.f32 %v3897, %v3897
      %v3978 = vmul.f32 %v3898, %v3898
      %v3979 = vmul.f32 %v3899, %v3899
      %v3980 = vmul.f32 %v3900, %v3900
      %v3981 = vmul.f32 %v3901, %v3901
      %v3982 = vmul.f32 %v3902, %v3902
      %v3983 = vmul.f32 %v3903, %v3903
      %v3984 = vmul.f32 %v3904, %v3904
      %v3985 = vmul.f32 %v3905, %v3905
      %v3986 = vmul.f32 %v3906, %v3906
      %v3987 = vsub.f32 %v3955, %v3971
      %v3988 = vsub.f32 %v3956, %v3972
      %v3989 = vsub.f32 %v3957, %v3973
      %v3990 = vsub.f32 %v3958, %v3974
      %v3991 = vsub.f32 %v3959, %v3975
      %v3992 = vsub.f32 %v3960, %v3976
      %v3993 = vsub.f32 %v3961, %v3977
      %v3994 = vsub.f32 %v3962, %v3978
      %v3995 = vsub.f32 %v3963, %v3979
      %v3996 = vsub.f32 %v3964, %v3980
      %v3997 = vsub.f32 %v3965, %v3981
      %v3998 = vsub.f32 %v3966, %v3982
      %v3999 = vsub.f32 %v3967, %v3983
      %v4000 = vsub.f32 %v3968, %v3984
      %v4001 = vsub.f32 %v3969, %v3985
      %v4002 = vsub.f32 %v3970, %v3986
      %v4003 = vmax.f32 %v3987, 0.0
      %v4004 = vmax.f32 %v3988, 0.0
      %v4005 = vmax.f32 %v3989, 0.0
      %v4006 = vmax.f32 %v3990, 0.0
      %v4007 = vmax.f32 %v3991, 0.0
      %v4008 = vmax.f32 %v3992, 0.0
      %v4009 = vmax.f32 %v3993, 0.0
      %v4010 = vmax.f32 %v3994, 0.0
      %v4011 = vmax.f32 %v3995, 0.0
      %v4012 = vmax.f32 %v3996, 0.0
      %v4013 = vmax.f32 %v3997, 0.0
      %v4014 = vmax.f32 %v3998, 0.0
      %v4015 = vmax.f32 %v3999, 0.0
      %v4016 = vmax.f32 %v4000, 0.0
      %v4017 = vmax.f32 %v4001, 0.0
      %v4018 = vmax.f32 %v4002, 0.0
      %v4019 = vsub.f32 %v3843, %v3891
      %v4020 = vsub.f32 %v3844, %v3892
      %v4021 = vsub.f32 %v3845, %v3893
      %v4022 = vsub.f32 %v3846, %v3894
      %v4023 = vsub.f32 %v3847, %v3895
      %v4024 = vsub.f32 %v3848, %v3896
      %v4025 = vsub.f32 %v3849, %v3897
      %v4026 = vsub.f32 %v3850, %v3898
      %v4027 = vsub.f32 %v3851, %v3899
      %v4028 = vsub.f32 %v3852, %v3900
      %v4029 = vsub.f32 %v3853, %v3901
      %v4030 = vsub.f32 %v3854, %v3902
      %v4031 = vsub.f32 %v3855, %v3903
      %v4032 = vsub.f32 %v3856, %v3904
      %v4033 = vsub.f32 %v3857, %v3905
      %v4034 = vsub.f32 %v3858, %v3906
      %v4035 = vadd.f32 %v4003, 1e-12
      %v4036 = vadd.f32 %v4004, 1e-12
      %v4037 = vadd.f32 %v4005, 1e-12
      %v4038 = vadd.f32 %v4006, 1e-12
      %v4039 = vadd.f32 %v4007, 1e-12
      %v4040 = vadd.f32 %v4008, 1e-12
      %v4041 = vadd.f32 %v4009, 1e-12
      %v4042 = vadd.f32 %v4010, 1e-12
      %v4043 = vadd.f32 %v4011, 1e-12
      %v4044 = vadd.f32 %v4012, 1e-12
      %v4045 = vadd.f32 %v4013, 1e-12
      %v4046 = vadd.f32 %v4014, 1e-12
      %v4047 = vadd.f32 %v4015, 1e-12
      %v4048 = vadd.f32 %v4016, 1e-12
      %v4049 = vadd.f32 %v4017, 1e-12
      %v4050 = vadd.f32 %v4018, 1e-12
      %v4051 = vrsqrt.pop %v4035
      %v4052 = vrsqrt.pop %v4036
      %v4053 = vrsqrt.pop %v4037
      %v4054 = vrsqrt.pop %v4038
      %v4055 = vrsqrt.pop %v4039
      %v4056 = vrsqrt.pop %v4040
      %v4057 = vrsqrt.pop %v4041
      %v4058 = vrsqrt.pop %v4042
      %v4059 = vrsqrt.pop %v4043
      %v4060 = vrsqrt.pop %v4044
      %v4061 = vrsqrt.pop %v4045
      %v4062 = vrsqrt.pop %v4046
      %v4063 = vrsqrt.pop %v4047
      %v4064 = vrsqrt.pop %v4048
      %v4065 = vrsqrt.pop %v4049
      %v4066 = vrsqrt.pop %v4050
      %v4067 = vmul.f32 %v4019, %v4051
      %v4068 = vmul.f32 %v4020, %v4052
      %v4069 = vmul.f32 %v4021, %v4053
      %v4070 = vmul.f32 %v4022, %v4054
      %v4071 = vmul.f32 %v4023, %v4055
      %v4072 = vmul.f32 %v4024, %v4056
      %v4073 = vmul.f32 %v4025, %v4057
      %v4074 = vmul.f32 %v4026, %v4058
      %v4075 = vmul.f32 %v4027, %v4059
      %v4076 = vmul.f32 %v4028, %v4060
      %v4077 = vmul.f32 %v4029, %v4061
      %v4078 = vmul.f32 %v4030, %v4062
      %v4079 = vmul.f32 %v4031, %v4063
      %v4080 = vmul.f32 %v4032, %v4064
      %v4081 = vmul.f32 %v4033, %v4065
      %v4082 = vmul.f32 %v4034, %v4066
      %v4083 = vlaneseq
      %v4084 = vshrl.u32 %v4083, 7
      %v4085 = vsub.s32 4, %v4084
      %v4086 = vrot.slane %v528, %v4085
      %v4087 = vmul.f32 %v4067, %v4086
      %v4088 = vmul.f32 %v4068, %v4086
      %v4089 = vmul.f32 %v4069, %v4086
      %v4090 = vmul.f32 %v4070, %v4086
      %v4091 = vmul.f32 %v4071, %v4086
      %v4092 = vmul.f32 %v4072, %v4086
      %v4093 = vmul.f32 %v4073, %v4086
      %v4094 = vmul.f32 %v4074, %v4086
      %v4095 = vmul.f32 %v4075, %v4086
      %v4096 = vmul.f32 %v4076, %v4086
      %v4097 = vmul.f32 %v4077, %v4086
      %v4098 = vmul.f32 %v4078, %v4086
      %v4099 = vmul.f32 %v4079, %v4086
      %v4100 = vmul.f32 %v4080, %v4086
      %v4101 = vmul.f32 %v4081, %v4086
      %v4102 = vmul.f32 %v4082, %v4086
      %v4103 = vlaneseq
      %v4104 = vshrl.u32 %v4103, 7
      %v4105 = vsub.s32 5, %v4104
      %v4106 = vrot.slane %v528, %v4105
      %v4107 = vadd.f32 %v4087, %v4106
      %v4108 = vadd.f32 %v4088, %v4106
      %v4109 = vadd.f32 %v4089, %v4106
      %v4110 = vadd.f32 %v4090, %v4106
      %v4111 = vadd.f32 %v4091, %v4106
      %v4112 = vadd.f32 %v4092, %v4106
      %v4113 = vadd.f32 %v4093, %v4106
      %v4114 = vadd.f32 %v4094, %v4106
      %v4115 = vadd.f32 %v4095, %v4106
      %v4116 = vadd.f32 %v4096, %v4106
      %v4117 = vadd.f32 %v4097, %v4106
      %v4118 = vadd.f32 %v4098, %v4106
      %v4119 = vadd.f32 %v4099, %v4106
      %v4120 = vadd.f32 %v4100, %v4106
      %v4121 = vadd.f32 %v4101, %v4106
      %v4122 = vadd.f32 %v4102, %v4106
      %v4123 = vld [vmem:[%s14] sm:$0xf]
      %v4124 = vld [vmem:[%s14 + $0x4] sm:$0xf]
      %v4125 = vpack.c.bf16 %v4108, %v4107
      %v4126 = vpack.c.bf16 %v4110, %v4109
      %v4127 = vpack.c.bf16 %v4112, %v4111
      %v4128 = vpack.c.bf16 %v4114, %v4113
      %v4129 = vpack.c.bf16 %v4116, %v4115
      %v4130 = vpack.c.bf16 %v4118, %v4117
      %v4131 = vpack.c.bf16 %v4120, %v4119
      %v4132 = vpack.c.bf16 %v4122, %v4121
      %v4135 = vunpack.c.l.b16 %v4123
      %v4136 = vunpack.c.l.b16 %v4124
      %v4137 = vpack.c.b16 %v4136, %v4135
      %4139 = vmatprep.subr.bf16.mxu0 0
      %4140 = vmatpush1.bf16.msra.mxu0 %v4125
      %4141 = vmatprep.subr.bf16.mxu0 0
      %4142 = vmatpush1.bf16.msra.mxu0 %v4126
      %4143 = vmatprep.subr.bf16.mxu0 0
      %4144 = vmatpush1.bf16.msra.mxu0 %v4127
      %4145 = vmatprep.subr.bf16.mxu0 0
      %4146 = vmatpush1.bf16.msra.mxu0 %v4128
      %4147 = vmatprep.subr.bf16.mxu0 0
      %4148 = vmatpush1.bf16.msra.mxu0 %v4129
      %4149 = vmatprep.subr.bf16.mxu0 0
      %4150 = vmatpush1.bf16.msra.mxu0 %v4130
      %4151 = vmatprep.subr.bf16.mxu0 0
      %4152 = vmatpush1.bf16.msra.mxu0 %v4131
      %4153 = vmatprep.subr.bf16.mxu0 0
      %4154 = vmatpush1.bf16.msra.mxu0 %v4132
      %4155 = vmatprep.subr.bf16.mxu0 0
      %4156 = vmatpush1.bf16.msra.mxu0 0
      %4157 = vmatprep.subr.bf16.mxu0 0
      %4158 = vmatpush1.bf16.msra.mxu0 0
      %4159 = vmatprep.subr.bf16.mxu0 0
      %4160 = vmatpush1.bf16.msra.mxu0 0
      %4161 = vmatprep.subr.bf16.mxu0 0
      %4162 = vmatpush1.bf16.msra.mxu0 0
      %4163 = vmatprep.subr.bf16.mxu0 0
      %4164 = vmatpush1.bf16.msra.mxu0 0
      %4165 = vmatprep.subr.bf16.mxu0 0
      %4166 = vmatpush1.bf16.msra.mxu0 0
      %4167 = vmatprep.subr.bf16.mxu0 0
      %4168 = vmatpush1.bf16.msra.mxu0 0
      %4169 = vmatprep.subr.bf16.mxu0 0
      %4170 = vmatpush1.bf16.msra.mxu0 0
      %4171 = vmatprep.mubr.bf16.mxu0 0
      %4172 = vmatmul.mubr.bf16.gmra.mrb[0].mxu0 %v4137
      %v4173 = vpop.f32.mrb[0].mxu0
      %v4174 = vadd.f32 0.0, %v4173
      %v4175 = vpop.f32.mrb[0].mxu0
      %v4176 = vpop.f32.mrb[0].mxu0
      %v4177 = vadd.f32 0.0, %v4176
      %v4178 = vpop.f32.mrb[0].mxu0
      %4179 = vdwg.mxu0
      %4180 = vst [vmem:[%s508] sm:$0xff] %v4174
      %4181 = vst [vmem:[%s508 + $0x8] sm:$0xff] %v4177
      %s4182 = smul.u32 2, %s26
      %p4183 = scmp.lt.s32.totalorder %s4182, 3
      %s4184 = scalar_select %p4183, %s4182, 3
      %s4185 = smul.addr %s4184, 8
      %s4186 = scalar_lea.vmem %s15, %s4185
      // Predicated region
      $region81: #{srl_embeddings_forward.1} parent=79 // pred_check
        %p4187 = pneg %p369
      $region82: #{srl_embeddings_forward.1} parent=79 // pred_check_branch
        %4189 = sbr.rel (%p4187) target = $region84
      $region83: #{srl_embeddings_forward.1} parent=79 // pred_region
        %s4190 = smul.u32 2, %s26
      $region84: #{srl_embeddings_forward.1} parent=79 // pred_fallthru
        _
    $region80: #{srl_embeddings_forward.1} parent=5 // pred_fallthru
      _
    %p4191 = scmp.le.s32.totalorder 2, %s21
    // Predicated region
    $region85: #{srl_embeddings_forward.1} parent=5 // pred_check
      %p4192 = pneg %p4191
    $region86: #{srl_embeddings_forward.1} parent=5 // pred_check_branch
      %4194 = sbr.rel (%p4192) target = $region88
    $region87: #{srl_embeddings_forward.1} parent=5 // pred_region
      %s4195 = ssub.s32 %s21, 2
      // Predicated region
      $region89: #{srl_embeddings_forward.1} parent=87 // pred_check
        %p4196 = pneg %p375
      $region90: #{srl_embeddings_forward.1} parent=87 // pred_check_branch
        %4198 = sbr.rel (%p4196) target = $region92
      $region91: #{srl_embeddings_forward.1} parent=87 // pred_region
        %s4199 = smul.u32 2, %s27
        %p4200 = scmp.lt.s32.totalorder %s4199, 3
        %s4201 = scalar_select %p4200, %s4199, 3
        %s4202 = smul.addr %s4201, 8
        %s4203 = scalar_lea.vmem %s15, %s4202
      $region92: #{srl_embeddings_forward.1} parent=87 // pred_fallthru
        _
    $region88: #{srl_embeddings_forward.1} parent=5 // pred_fallthru
      _
  $region6: #{srl_embeddings_forward.1} parent=0 // loop_footer
    %s25 = sadd.s32 1, %s21
  $region7: #{srl_embeddings_forward.1} parent=0 // loop_footer_branch
    %20 = sbr.rel target = $region3
  $region8: #{srl_embeddings_forward.1} parent=0 // loop_exit
    _

</llo_original>
